<compile_context>
chip_gen: v7x
topology: tpu7x:2x2x1
jax: 0.10.0
libtpu: 0.0.40
codegen_flags: <defaults>
</compile_context>

<pallas_src>
import math
import functools

import jax
import jax.numpy as jnp
from jax.experimental import pallas as pl
from jax.experimental.pallas import tpu as pltpu


def _cross_attention_kernel(x_ref, y_ref, wq_ref, wk_ref, wv_ref, wo_ref,
                            bo_ref, o_ref, k_scr, v_scr, ctx_scr,
                            *, n_heads, head_dim, b_blk, block_q, lk):
    E = n_heads * head_dim
    cdt = k_scr.dtype                      # compute dtype for MXU operands
    scale = 1.0 / math.sqrt(head_dim)

    # ---- K/V projections: once per batch-block, cached across q tiles. ----
    @pl.when(pl.program_id(1) == 0)
    def _project_kv():
        ym = y_ref[...].reshape(b_blk * lk, E)                    # (b_blk*Lk, E)
        k = jnp.dot(ym, wk_ref[...], preferred_element_type=jnp.float32)
        v = jnp.dot(ym, wv_ref[...], preferred_element_type=jnp.float32)
        k_scr[...] = k.reshape(b_blk, lk, E).astype(cdt)
        v_scr[...] = v.reshape(b_blk, lk, E).astype(cdt)

    # ---- Q projection for the whole packed (b_blk*block_q, E) tile. ----
    xm = x_ref[...].reshape(b_blk * block_q, E)
    q = jnp.dot(xm, wq_ref[...], preferred_element_type=jnp.float32)
    q = (q * scale).astype(cdt)            # fold 1/sqrt(hd) once; cdt MXU operands

    # ---- Per-batch, per-head attention (static loops, compile-time shapes). ----
    for b in range(b_blk):
        qb = q[b * block_q:(b + 1) * block_q, :]
        for h in range(n_heads):
            lo = h * head_dim
            hi = lo + head_dim
            # TODO(synk): head_dim < 128 makes these lane-unaligned slices; a
            # single head-major relayout of q/k/v would remove 3*H narrow extracts.
            qh = qb[:, lo:hi]                                   # (TQ, hd) cdt
            kh = k_scr[b, :, lo:hi]                             # (Lk, hd) cdt
            vh = v_scr[b, :, lo:hi]                             # (Lk, hd) cdt
            s = jax.lax.dot_general(qh, kh, (((1,), (1,)), ((), ())),
                                    preferred_element_type=jnp.float32)  # (TQ, Lk)
            s = s - jnp.max(s, axis=-1, keepdims=True)
            p = jnp.exp(s)
            p = p * pl.reciprocal(jnp.sum(p, axis=-1, keepdims=True), approx=True)
            # TODO(synk): attention dropout is identity (eval mode / p = 0.0).
            pv = jnp.dot(p.astype(cdt), vh, preferred_element_type=jnp.float32)
            ctx_scr[b * block_q:(b + 1) * block_q, lo:hi] = pv.astype(cdt)

    # ---- Single output projection over the packed context + bias. ----
    out = jnp.dot(ctx_scr[...].astype(wo_ref.dtype), wo_ref[...],
                  preferred_element_type=jnp.float32)
    out = out + bo_ref[...].astype(jnp.float32)
    o_ref[...] = out.reshape(b_blk, block_q, E).astype(o_ref.dtype)


def _pick_tiling(B, Lq):
    """Choose (batch-pack, query-tile) sizes."""
    if Lq <= 512:
        block_q = Lq
    else:
        block_q = next((c for c in (512, 256, 128, 64) if Lq % c == 0), Lq)
    n_q_tiles = Lq // block_q
    b_blk = 1
    if n_q_tiles == 1 and Lq < 256 and B > 1:
        # Pack batches so the projection matmuls fill ~256 MXU rows.
        max_pack = max(1, 256 // max(Lq, 1))
        for cand in range(min(B, max_pack), 0, -1):
            if B % cand == 0:
                b_blk = cand
                break
    return b_blk, block_q, n_q_tiles


def _vmem_limit_bytes(b_blk, block_q, Lk, E, in_isz, w_isz, cdt_isz):
    est = 0
    est += 2 * 2 * b_blk * block_q * E * in_isz      # x + out blocks, double-buffered
    est += 2 * b_blk * Lk * E * in_isz               # y block, double-buffered
    est += 4 * E * E * w_isz + 2 * E * w_isz         # weights (single-buffered) + bias
    est += 2 * b_blk * Lk * E * cdt_isz              # cached K/V scratch
    est += b_blk * block_q * E * cdt_isz             # ctx scratch
    est += 2 * b_blk * block_q * E * 4               # f32 q / projection temporaries
    est += 2 * b_blk * Lk * E * 4                    # f32 k/v projection temporaries
    est += 4 * block_q * Lk * 4                      # live score / prob tiles
    try:
        phys = int(pltpu.get_tpu_info().vmem_capacity_bytes)
    except Exception:
        phys = 64 * 1024 * 1024                      # conservative (v7x per-core)
    cap = phys - 8 * 1024 * 1024                     # Mosaic internal-scratch headroom
    return int(min(max(int(1.5 * est), 32 * 1024 * 1024), cap))


def cross_attention(x, y, wq, wk, wv, wo, bo, *, n_heads, compute_dtype=None):
    """x: (B, Lq, E), y: (B, Lk, E); weights (E, E) in (in, out) layout, bo (E,)."""
    B, Lq, E = x.shape
    _, Lk, _ = y.shape
    assert E % n_heads == 0
    head_dim = E // n_heads
    cdt = jnp.dtype(compute_dtype) if compute_dtype is not None else jnp.dtype(x.dtype)
    bo2 = bo.reshape(1, E)

    b_blk, block_q, n_q_tiles = _pick_tiling(B, Lq)
    assert B % b_blk == 0 and Lq % block_q == 0
    grid = (B // b_blk, n_q_tiles)

    vmem_limit = _vmem_limit_bytes(b_blk, block_q, Lk, E,
                                   jnp.dtype(x.dtype).itemsize,
                                   jnp.dtype(wq.dtype).itemsize,
                                   cdt.itemsize)

    kernel = functools.partial(_cross_attention_kernel, n_heads=n_heads,
                               head_dim=head_dim, b_blk=b_blk,
                               block_q=block_q, lk=Lk)

    def run(single_buffer_const):
        pipe = dict(pipeline_mode=pl.Buffered(1)) if single_buffer_const else {}

        def w_spec():
            return pl.BlockSpec((E, E), lambda bb, qi: (0, 0), **pipe)

        grid_spec = pltpu.PrefetchScalarGridSpec(
            num_scalar_prefetch=0,
            grid=grid,
            in_specs=[
                pl.BlockSpec((b_blk, block_q, E), lambda bb, qi: (bb, qi, 0)),  # x
                pl.BlockSpec((b_blk, Lk, E), lambda bb, qi: (bb, 0, 0)),        # y
                w_spec(), w_spec(), w_spec(), w_spec(),                          # Wq..Wo
                pl.BlockSpec((1, E), lambda bb, qi: (0, 0), **pipe),             # bias
            ],
            out_specs=pl.BlockSpec((b_blk, block_q, E), lambda bb, qi: (bb, qi, 0)),
            scratch_shapes=[
                pltpu.VMEM((b_blk, Lk, E), cdt),           # cached K projection
                pltpu.VMEM((b_blk, Lk, E), cdt),           # cached V projection
                pltpu.VMEM((b_blk * block_q, E), cdt),     # per-tile context
            ],
        )
        out = pl.pallas_call(
            kernel,
            out_shape=jax.ShapeDtypeStruct((B, Lq, E), x.dtype),
            grid_spec=grid_spec,
            compiler_params=pltpu.CompilerParams(
                dimension_semantics=("parallel", "arbitrary"),
                vmem_limit_bytes=vmem_limit),
        )(x, y, wq, wk, wv, wo, bo2)
        return jax.block_until_ready(out)

    try:
        return run(True)
    except Exception:
        # Fallback for JAX versions without pl.Buffered(1) single-buffering.
        return run(False)


def cross_attention_reference(x, y, wq, wk, wv, wo, bo, *, n_heads):
    """Plain-JAX reference mirroring the PyTorch forward exactly."""
    B, Lq, E = x.shape
    Lk = y.shape[1]
    hd = E // n_heads
    q = x @ wq
    k = y @ wk
    v = y @ wv
    q = q.reshape(B, Lq, n_heads, hd).transpose(0, 2, 1, 3)
    k = k.reshape(B, Lk, n_heads, hd).transpose(0, 2, 1, 3)
    v = v.reshape(B, Lk, n_heads, hd).transpose(0, 2, 1, 3)
    s = jnp.einsum("bhqd,bhkd->bhqk", q, k) / math.sqrt(hd)
    p = jax.nn.softmax(s, axis=-1)
    o = jnp.einsum("bhqk,bhkd->bhqd", p, v)
    o = o.transpose(0, 2, 1, 3).reshape(B, Lq, E)
    return o @ wo + bo


if __name__ == "__main__":
    # Small but lane-aligned shapes: E multiple of 128, seq lens multiples of 8.
    B, Lq, Lk = 2, 16, 8
    E, H = 128, 4              # embed_dim=128, n_heads=4, head_dim=32, dropout=0.0

    key = jax.random.PRNGKey(0)
    kx, ky, k1, k2, k3, k4, k5 = jax.random.split(key, 7)

    x = jax.random.normal(kx, (B, Lq, E), dtype=jnp.float32)
    y = jax.random.normal(ky, (B, Lk, E), dtype=jnp.float32)

    # Deterministic parameter init (weights in (in, out) layout).
    bound = 1.0 / math.sqrt(E)
    wq = jax.random.uniform(k1, (E, E), jnp.float32, -bound, bound)
    wk = jax.random.uniform(k2, (E, E), jnp.float32, -bound, bound)
    wv = jax.random.uniform(k3, (E, E), jnp.float32, -bound, bound)
    wo = jax.random.uniform(k4, (E, E), jnp.float32, -bound, bound)
    bo = jax.random.uniform(k5, (E,), jnp.float32, -bound, bound)

    out = cross_attention(x, y, wq, wk, wv, wo, bo, n_heads=H)
    out = jax.block_until_ready(out)

    ref = cross_attention_reference(x, y, wq, wk, wv, wo, bo, n_heads=H)
    assert out.shape == (B, Lq, E)
    # approx reciprocal in the softmax slightly loosens agreement vs the f32 ref.
    assert jnp.allclose(out, ref, atol=2e-3, rtol=2e-3), "mismatch vs reference"

    print("KERNEL_OK")
</pallas_src>

<mosaic_0001>
module attributes {stable_mosaic.version = 11 : i64} {
  func.func @_cross_attention_kernel(%arg0: i32, %arg1: i32, %arg2: memref<2x16x128xf32, #tpu.memory_space<vmem>>, %arg3: memref<2x8x128xf32, #tpu.memory_space<vmem>>, %arg4: memref<128x128xf32, #tpu.memory_space<vmem>>, %arg5: memref<128x128xf32, #tpu.memory_space<vmem>>, %arg6: memref<128x128xf32, #tpu.memory_space<vmem>>, %arg7: memref<128x128xf32, #tpu.memory_space<vmem>>, %arg8: memref<1x128xf32, #tpu.memory_space<vmem>>, %arg9: memref<2x16x128xf32, #tpu.memory_space<vmem>>, %arg10: memref<2x8x128xf32, #tpu.memory_space<vmem>>, %arg11: memref<2x8x128xf32, #tpu.memory_space<vmem>>, %arg12: memref<32x128xf32, #tpu.memory_space<vmem>>) attributes {dimension_semantics = [#tpu.dimension_semantics<parallel>, #tpu.dimension_semantics<arbitrary>], iteration_bounds = array<i64: 1, 1>, scalar_prefetch = 0 : i64, scratch_operands = 3 : i64, tpu.core_type = #tpu.core_type<tc>, window_params = [{transform_indices = @transform_0, window_bounds = array<i64: 2, 16, 128>}, {transform_indices = @transform_1, window_bounds = array<i64: 2, 8, 128>}, {pipeline_mode = #tpu.pipeline_mode<synchronous>, transform_indices = @transform_2, window_bounds = array<i64: 128, 128>}, {pipeline_mode = #tpu.pipeline_mode<synchronous>, transform_indices = @transform_3, window_bounds = array<i64: 128, 128>}, {pipeline_mode = #tpu.pipeline_mode<synchronous>, transform_indices = @transform_4, window_bounds = array<i64: 128, 128>}, {pipeline_mode = #tpu.pipeline_mode<synchronous>, transform_indices = @transform_5, window_bounds = array<i64: 128, 128>}, {pipeline_mode = #tpu.pipeline_mode<synchronous>, transform_indices = @transform_6, window_bounds = array<i64: 1, 128>}, {transform_indices = @transform_7, window_bounds = array<i64: 2, 16, 128>}]} {
    %c0_i32 = arith.constant 0 : i32
    %0 = arith.cmpi eq, %arg1, %c0_i32 : i32
    %1 = arith.extui %0 : i1 to i32
    %c0_i32_0 = arith.constant 0 : i32
    %2 = arith.cmpi ne, %1, %c0_i32_0 : i32
    scf.if %2 {
      %c0_107 = arith.constant 0 : index
      %c0_108 = arith.constant 0 : index
      %c0_109 = arith.constant 0 : index
      %163 = vector.load %arg3[%c0_107, %c0_108, %c0_109] : memref<2x8x128xf32, #tpu.memory_space<vmem>>, vector<2x8x128xf32>
      %164 = vector.shape_cast %163 : vector<2x8x128xf32> to vector<16x128xf32>
      %c0_110 = arith.constant 0 : index
      %c0_111 = arith.constant 0 : index
      %165 = vector.load %arg5[%c0_110, %c0_111] : memref<128x128xf32, #tpu.memory_space<vmem>>, vector<128x128xf32>
      %cst_112 = arith.constant dense<0.000000e+00> : vector<16x128xf32>
      %166 = tpu.matmul %164, %165, %cst_112 {dimension_numbers = #tpu.dot_dimension_numbers<[1], [0], [0], [1], [0, 0, 1, 1], [], []>} : vector<16x128xf32>, vector<128x128xf32>, vector<16x128xf32> -> vector<16x128xf32>
      %c0_113 = arith.constant 0 : index
      %c0_114 = arith.constant 0 : index
      %167 = vector.load %arg6[%c0_113, %c0_114] : memref<128x128xf32, #tpu.memory_space<vmem>>, vector<128x128xf32>
      %cst_115 = arith.constant dense<0.000000e+00> : vector<16x128xf32>
      %168 = tpu.matmul %164, %167, %cst_115 {dimension_numbers = #tpu.dot_dimension_numbers<[1], [0], [0], [1], [0, 0, 1, 1], [], []>} : vector<16x128xf32>, vector<128x128xf32>, vector<16x128xf32> -> vector<16x128xf32>
      %169 = vector.shape_cast %166 : vector<16x128xf32> to vector<2x8x128xf32>
      %c0_116 = arith.constant 0 : index
      %c0_117 = arith.constant 0 : index
      %c0_118 = arith.constant 0 : index
      %170 = vector.load %arg10[%c0_116, %c0_117, %c0_118] : memref<2x8x128xf32, #tpu.memory_space<vmem>>, vector<2x8x128xf32>
      tpu.vector_store %arg10[%c0_116, %c0_117, %c0_118], %169 {strides = array<i32>} : memref<2x8x128xf32, #tpu.memory_space<vmem>>, vector<2x8x128xf32>,
      %171 = vector.shape_cast %168 : vector<16x128xf32> to vector<2x8x128xf32>
      %c0_119 = arith.constant 0 : index
      %c0_120 = arith.constant 0 : index
      %c0_121 = arith.constant 0 : index
      %172 = vector.load %arg11[%c0_119, %c0_120, %c0_121] : memref<2x8x128xf32, #tpu.memory_space<vmem>>, vector<2x8x128xf32>
      tpu.vector_store %arg11[%c0_119, %c0_120, %c0_121], %171 {strides = array<i32>} : memref<2x8x128xf32, #tpu.memory_space<vmem>>, vector<2x8x128xf32>,
    } else {
    }
    %c0 = arith.constant 0 : index
    %c0_1 = arith.constant 0 : index
    %c0_2 = arith.constant 0 : index
    %3 = vector.load %arg2[%c0, %c0_1, %c0_2] : memref<2x16x128xf32, #tpu.memory_space<vmem>>, vector<2x16x128xf32>
    %4 = vector.shape_cast %3 : vector<2x16x128xf32> to vector<32x128xf32>
    %c0_3 = arith.constant 0 : index
    %c0_4 = arith.constant 0 : index
    %5 = vector.load %arg4[%c0_3, %c0_4] : memref<128x128xf32, #tpu.memory_space<vmem>>, vector<128x128xf32>
    %cst = arith.constant dense<0.000000e+00> : vector<32x128xf32>
    %6 = tpu.matmul %4, %5, %cst {dimension_numbers = #tpu.dot_dimension_numbers<[1], [0], [0], [1], [0, 0, 1, 1], [], []>} : vector<32x128xf32>, vector<128x128xf32>, vector<32x128xf32> -> vector<32x128xf32>
    %cst_5 = arith.constant 0.176776692 : f32
    %7 = vector.broadcast %cst_5 : f32 to vector<32x128xf32>
    %8 = arith.mulf %6, %7 : vector<32x128xf32>
    %9 = vector.extract_strided_slice %8 {offsets = [0, 0], sizes = [16, 128], strides = [1, 1]} : vector<32x128xf32> to vector<16x128xf32>
    %10 = vector.extract_strided_slice %9 {offsets = [0, 0], sizes = [16, 32], strides = [1, 1]} : vector<16x128xf32> to vector<16x32xf32>
    %c0_6 = arith.constant 0 : index
    %c0_7 = arith.constant 0 : index
    %c0_8 = arith.constant 0 : index
    %11 = vector.load %arg10[%c0_6, %c0_7, %c0_8] : memref<2x8x128xf32, #tpu.memory_space<vmem>>, vector<1x8x32xf32>
    %12 = vector.shape_cast %11 : vector<1x8x32xf32> to vector<8x32xf32>
    %c0_9 = arith.constant 0 : index
    %c0_10 = arith.constant 0 : index
    %c0_11 = arith.constant 0 : index
    %13 = vector.load %arg11[%c0_9, %c0_10, %c0_11] : memref<2x8x128xf32, #tpu.memory_space<vmem>>, vector<1x8x32xf32>
    %14 = vector.shape_cast %13 : vector<1x8x32xf32> to vector<8x32xf32>
    %cst_12 = arith.constant dense<0.000000e+00> : vector<16x8xf32>
    %15 = tpu.matmul %10, %12, %cst_12 {dimension_numbers = #tpu.dot_dimension_numbers<[1], [1], [0], [0], [0, 0, 1, 0], [], []>} : vector<16x32xf32>, vector<8x32xf32>, vector<16x8xf32> -> vector<16x8xf32>
    %cst_13 = arith.constant dense<0xFF800000> : vector<16xf32>
    %16 = vector.multi_reduction <maximumf>, %15, %cst_13 [1] : vector<16x8xf32> to vector<16xf32>
    %17 = vector.shape_cast %16 : vector<16xf32> to vector<16x1xf32>
    %18 = vector.broadcast %17 : vector<16x1xf32> to vector<16x8xf32>
    %19 = arith.subf %15, %18 : vector<16x8xf32>
    %20 = math.exp %19 : vector<16x8xf32>
    %cst_14 = arith.constant dense<0.000000e+00> : vector<16xf32>
    %21 = vector.multi_reduction <add>, %20, %cst_14 [1] : vector<16x8xf32> to vector<16xf32>
    %22 = vector.shape_cast %21 : vector<16xf32> to vector<16x1xf32>
    %23 = tpu.reciprocal %22 {approx = true} : vector<16x1xf32> -> vector<16x1xf32>
    %24 = vector.broadcast %23 : vector<16x1xf32> to vector<16x8xf32>
    %25 = arith.mulf %20, %24 : vector<16x8xf32>
    %cst_15 = arith.constant dense<0.000000e+00> : vector<16x32xf32>
    %26 = tpu.matmul %25, %14, %cst_15 {dimension_numbers = #tpu.dot_dimension_numbers<[1], [0], [0], [1], [0, 0, 1, 1], [], []>} : vector<16x8xf32>, vector<8x32xf32>, vector<16x32xf32> -> vector<16x32xf32>
    %c0_16 = arith.constant 0 : index
    %c0_17 = arith.constant 0 : index
    %27 = vector.load %arg12[%c0_16, %c0_17] : memref<32x128xf32, #tpu.memory_space<vmem>>, vector<16x32xf32>
    tpu.vector_store %arg12[%c0_16, %c0_17], %26 {strides = array<i32>} : memref<32x128xf32, #tpu.memory_space<vmem>>, vector<16x32xf32>,
    %28 = vector.extract_strided_slice %9 {offsets = [0, 32], sizes = [16, 32], strides = [1, 1]} : vector<16x128xf32> to vector<16x32xf32>
    %c0_18 = arith.constant 0 : index
    %c0_19 = arith.constant 0 : index
    %c32 = arith.constant 32 : index
    %29 = vector.load %arg10[%c0_18, %c0_19, %c32] : memref<2x8x128xf32, #tpu.memory_space<vmem>>, vector<1x8x32xf32>
    %30 = vector.shape_cast %29 : vector<1x8x32xf32> to vector<8x32xf32>
    %c0_20 = arith.constant 0 : index
    %c0_21 = arith.constant 0 : index
    %c32_22 = arith.constant 32 : index
    %31 = vector.load %arg11[%c0_20, %c0_21, %c32_22] : memref<2x8x128xf32, #tpu.memory_space<vmem>>, vector<1x8x32xf32>
    %32 = vector.shape_cast %31 : vector<1x8x32xf32> to vector<8x32xf32>
    %cst_23 = arith.constant dense<0.000000e+00> : vector<16x8xf32>
    %33 = tpu.matmul %28, %30, %cst_23 {dimension_numbers = #tpu.dot_dimension_numbers<[1], [1], [0], [0], [0, 0, 1, 0], [], []>} : vector<16x32xf32>, vector<8x32xf32>, vector<16x8xf32> -> vector<16x8xf32>
    %cst_24 = arith.constant dense<0xFF800000> : vector<16xf32>
    %34 = vector.multi_reduction <maximumf>, %33, %cst_24 [1] : vector<16x8xf32> to vector<16xf32>
    %35 = vector.shape_cast %34 : vector<16xf32> to vector<16x1xf32>
    %36 = vector.broadcast %35 : vector<16x1xf32> to vector<16x8xf32>
    %37 = arith.subf %33, %36 : vector<16x8xf32>
    %38 = math.exp %37 : vector<16x8xf32>
    %cst_25 = arith.constant dense<0.000000e+00> : vector<16xf32>
    %39 = vector.multi_reduction <add>, %38, %cst_25 [1] : vector<16x8xf32> to vector<16xf32>
    %40 = vector.shape_cast %39 : vector<16xf32> to vector<16x1xf32>
    %41 = tpu.reciprocal %40 {approx = true} : vector<16x1xf32> -> vector<16x1xf32>
    %42 = vector.broadcast %41 : vector<16x1xf32> to vector<16x8xf32>
    %43 = arith.mulf %38, %42 : vector<16x8xf32>
    %cst_26 = arith.constant dense<0.000000e+00> : vector<16x32xf32>
    %44 = tpu.matmul %43, %32, %cst_26 {dimension_numbers = #tpu.dot_dimension_numbers<[1], [0], [0], [1], [0, 0, 1, 1], [], []>} : vector<16x8xf32>, vector<8x32xf32>, vector<16x32xf32> -> vector<16x32xf32>
    %c0_27 = arith.constant 0 : index
    %c32_28 = arith.constant 32 : index
    %45 = vector.load %arg12[%c0_27, %c32_28] : memref<32x128xf32, #tpu.memory_space<vmem>>, vector<16x32xf32>
    tpu.vector_store %arg12[%c0_27, %c32_28], %44 {strides = array<i32>} : memref<32x128xf32, #tpu.memory_space<vmem>>, vector<16x32xf32>,
    %46 = vector.extract_strided_slice %9 {offsets = [0, 64], sizes = [16, 32], strides = [1, 1]} : vector<16x128xf32> to vector<16x32xf32>
    %c0_29 = arith.constant 0 : index
    %c0_30 = arith.constant 0 : index
    %c64 = arith.constant 64 : index
    %47 = vector.load %arg10[%c0_29, %c0_30, %c64] : memref<2x8x128xf32, #tpu.memory_space<vmem>>, vector<1x8x32xf32>
    %48 = vector.shape_cast %47 : vector<1x8x32xf32> to vector<8x32xf32>
    %c0_31 = arith.constant 0 : index
    %c0_32 = arith.constant 0 : index
    %c64_33 = arith.constant 64 : index
    %49 = vector.load %arg11[%c0_31, %c0_32, %c64_33] : memref<2x8x128xf32, #tpu.memory_space<vmem>>, vector<1x8x32xf32>
    %50 = vector.shape_cast %49 : vector<1x8x32xf32> to vector<8x32xf32>
    %cst_34 = arith.constant dense<0.000000e+00> : vector<16x8xf32>
    %51 = tpu.matmul %46, %48, %cst_34 {dimension_numbers = #tpu.dot_dimension_numbers<[1], [1], [0], [0], [0, 0, 1, 0], [], []>} : vector<16x32xf32>, vector<8x32xf32>, vector<16x8xf32> -> vector<16x8xf32>
    %cst_35 = arith.constant dense<0xFF800000> : vector<16xf32>
    %52 = vector.multi_reduction <maximumf>, %51, %cst_35 [1] : vector<16x8xf32> to vector<16xf32>
    %53 = vector.shape_cast %52 : vector<16xf32> to vector<16x1xf32>
    %54 = vector.broadcast %53 : vector<16x1xf32> to vector<16x8xf32>
    %55 = arith.subf %51, %54 : vector<16x8xf32>
    %56 = math.exp %55 : vector<16x8xf32>
    %cst_36 = arith.constant dense<0.000000e+00> : vector<16xf32>
    %57 = vector.multi_reduction <add>, %56, %cst_36 [1] : vector<16x8xf32> to vector<16xf32>
    %58 = vector.shape_cast %57 : vector<16xf32> to vector<16x1xf32>
    %59 = tpu.reciprocal %58 {approx = true} : vector<16x1xf32> -> vector<16x1xf32>
    %60 = vector.broadcast %59 : vector<16x1xf32> to vector<16x8xf32>
    %61 = arith.mulf %56, %60 : vector<16x8xf32>
    %cst_37 = arith.constant dense<0.000000e+00> : vector<16x32xf32>
    %62 = tpu.matmul %61, %50, %cst_37 {dimension_numbers = #tpu.dot_dimension_numbers<[1], [0], [0], [1], [0, 0, 1, 1], [], []>} : vector<16x8xf32>, vector<8x32xf32>, vector<16x32xf32> -> vector<16x32xf32>
    %c0_38 = arith.constant 0 : index
    %c64_39 = arith.constant 64 : index
    %63 = vector.load %arg12[%c0_38, %c64_39] : memref<32x128xf32, #tpu.memory_space<vmem>>, vector<16x32xf32>
    tpu.vector_store %arg12[%c0_38, %c64_39], %62 {strides = array<i32>} : memref<32x128xf32, #tpu.memory_space<vmem>>, vector<16x32xf32>,
    %64 = vector.extract_strided_slice %9 {offsets = [0, 96], sizes = [16, 32], strides = [1, 1]} : vector<16x128xf32> to vector<16x32xf32>
    %c0_40 = arith.constant 0 : index
    %c0_41 = arith.constant 0 : index
    %c96 = arith.constant 96 : index
    %65 = vector.load %arg10[%c0_40, %c0_41, %c96] : memref<2x8x128xf32, #tpu.memory_space<vmem>>, vector<1x8x32xf32>
    %66 = vector.shape_cast %65 : vector<1x8x32xf32> to vector<8x32xf32>
    %c0_42 = arith.constant 0 : index
    %c0_43 = arith.constant 0 : index
    %c96_44 = arith.constant 96 : index
    %67 = vector.load %arg11[%c0_42, %c0_43, %c96_44] : memref<2x8x128xf32, #tpu.memory_space<vmem>>, vector<1x8x32xf32>
    %68 = vector.shape_cast %67 : vector<1x8x32xf32> to vector<8x32xf32>
    %cst_45 = arith.constant dense<0.000000e+00> : vector<16x8xf32>
    %69 = tpu.matmul %64, %66, %cst_45 {dimension_numbers = #tpu.dot_dimension_numbers<[1], [1], [0], [0], [0, 0, 1, 0], [], []>} : vector<16x32xf32>, vector<8x32xf32>, vector<16x8xf32> -> vector<16x8xf32>
    %cst_46 = arith.constant dense<0xFF800000> : vector<16xf32>
    %70 = vector.multi_reduction <maximumf>, %69, %cst_46 [1] : vector<16x8xf32> to vector<16xf32>
    %71 = vector.shape_cast %70 : vector<16xf32> to vector<16x1xf32>
    %72 = vector.broadcast %71 : vector<16x1xf32> to vector<16x8xf32>
    %73 = arith.subf %69, %72 : vector<16x8xf32>
    %74 = math.exp %73 : vector<16x8xf32>
    %cst_47 = arith.constant dense<0.000000e+00> : vector<16xf32>
    %75 = vector.multi_reduction <add>, %74, %cst_47 [1] : vector<16x8xf32> to vector<16xf32>
    %76 = vector.shape_cast %75 : vector<16xf32> to vector<16x1xf32>
    %77 = tpu.reciprocal %76 {approx = true} : vector<16x1xf32> -> vector<16x1xf32>
    %78 = vector.broadcast %77 : vector<16x1xf32> to vector<16x8xf32>
    %79 = arith.mulf %74, %78 : vector<16x8xf32>
    %cst_48 = arith.constant dense<0.000000e+00> : vector<16x32xf32>
    %80 = tpu.matmul %79, %68, %cst_48 {dimension_numbers = #tpu.dot_dimension_numbers<[1], [0], [0], [1], [0, 0, 1, 1], [], []>} : vector<16x8xf32>, vector<8x32xf32>, vector<16x32xf32> -> vector<16x32xf32>
    %c0_49 = arith.constant 0 : index
    %c96_50 = arith.constant 96 : index
    %81 = vector.load %arg12[%c0_49, %c96_50] : memref<32x128xf32, #tpu.memory_space<vmem>>, vector<16x32xf32>
    tpu.vector_store %arg12[%c0_49, %c96_50], %80 {strides = array<i32>} : memref<32x128xf32, #tpu.memory_space<vmem>>, vector<16x32xf32>,
    %82 = vector.extract_strided_slice %8 {offsets = [16, 0], sizes = [16, 128], strides = [1, 1]} : vector<32x128xf32> to vector<16x128xf32>
    %83 = vector.extract_strided_slice %82 {offsets = [0, 0], sizes = [16, 32], strides = [1, 1]} : vector<16x128xf32> to vector<16x32xf32>
    %c1 = arith.constant 1 : index
    %c0_51 = arith.constant 0 : index
    %c0_52 = arith.constant 0 : index
    %84 = vector.load %arg10[%c1, %c0_51, %c0_52] : memref<2x8x128xf32, #tpu.memory_space<vmem>>, vector<1x8x32xf32>
    %85 = vector.shape_cast %84 : vector<1x8x32xf32> to vector<8x32xf32>
    %c1_53 = arith.constant 1 : index
    %c0_54 = arith.constant 0 : index
    %c0_55 = arith.constant 0 : index
    %86 = vector.load %arg11[%c1_53, %c0_54, %c0_55] : memref<2x8x128xf32, #tpu.memory_space<vmem>>, vector<1x8x32xf32>
    %87 = vector.shape_cast %86 : vector<1x8x32xf32> to vector<8x32xf32>
    %cst_56 = arith.constant dense<0.000000e+00> : vector<16x8xf32>
    %88 = tpu.matmul %83, %85, %cst_56 {dimension_numbers = #tpu.dot_dimension_numbers<[1], [1], [0], [0], [0, 0, 1, 0], [], []>} : vector<16x32xf32>, vector<8x32xf32>, vector<16x8xf32> -> vector<16x8xf32>
    %cst_57 = arith.constant dense<0xFF800000> : vector<16xf32>
    %89 = vector.multi_reduction <maximumf>, %88, %cst_57 [1] : vector<16x8xf32> to vector<16xf32>
    %90 = vector.shape_cast %89 : vector<16xf32> to vector<16x1xf32>
    %91 = vector.broadcast %90 : vector<16x1xf32> to vector<16x8xf32>
    %92 = arith.subf %88, %91 : vector<16x8xf32>
    %93 = math.exp %92 : vector<16x8xf32>
    %cst_58 = arith.constant dense<0.000000e+00> : vector<16xf32>
    %94 = vector.multi_reduction <add>, %93, %cst_58 [1] : vector<16x8xf32> to vector<16xf32>
    %95 = vector.shape_cast %94 : vector<16xf32> to vector<16x1xf32>
    %96 = tpu.reciprocal %95 {approx = true} : vector<16x1xf32> -> vector<16x1xf32>
    %97 = vector.broadcast %96 : vector<16x1xf32> to vector<16x8xf32>
    %98 = arith.mulf %93, %97 : vector<16x8xf32>
    %cst_59 = arith.constant dense<0.000000e+00> : vector<16x32xf32>
    %99 = tpu.matmul %98, %87, %cst_59 {dimension_numbers = #tpu.dot_dimension_numbers<[1], [0], [0], [1], [0, 0, 1, 1], [], []>} : vector<16x8xf32>, vector<8x32xf32>, vector<16x32xf32> -> vector<16x32xf32>
    %c16 = arith.constant 16 : index
    %c0_60 = arith.constant 0 : index
    %100 = vector.load %arg12[%c16, %c0_60] : memref<32x128xf32, #tpu.memory_space<vmem>>, vector<16x32xf32>
    tpu.vector_store %arg12[%c16, %c0_60], %99 {strides = array<i32>} : memref<32x128xf32, #tpu.memory_space<vmem>>, vector<16x32xf32>,
    %101 = vector.extract_strided_slice %82 {offsets = [0, 32], sizes = [16, 32], strides = [1, 1]} : vector<16x128xf32> to vector<16x32xf32>
    %c1_61 = arith.constant 1 : index
    %c0_62 = arith.constant 0 : index
    %c32_63 = arith.constant 32 : index
    %102 = vector.load %arg10[%c1_61, %c0_62, %c32_63] : memref<2x8x128xf32, #tpu.memory_space<vmem>>, vector<1x8x32xf32>
    %103 = vector.shape_cast %102 : vector<1x8x32xf32> to vector<8x32xf32>
    %c1_64 = arith.constant 1 : index
    %c0_65 = arith.constant 0 : index
    %c32_66 = arith.constant 32 : index
    %104 = vector.load %arg11[%c1_64, %c0_65, %c32_66] : memref<2x8x128xf32, #tpu.memory_space<vmem>>, vector<1x8x32xf32>
    %105 = vector.shape_cast %104 : vector<1x8x32xf32> to vector<8x32xf32>
    %cst_67 = arith.constant dense<0.000000e+00> : vector<16x8xf32>
    %106 = tpu.matmul %101, %103, %cst_67 {dimension_numbers = #tpu.dot_dimension_numbers<[1], [1], [0], [0], [0, 0, 1, 0], [], []>} : vector<16x32xf32>, vector<8x32xf32>, vector<16x8xf32> -> vector<16x8xf32>
    %cst_68 = arith.constant dense<0xFF800000> : vector<16xf32>
    %107 = vector.multi_reduction <maximumf>, %106, %cst_68 [1] : vector<16x8xf32> to vector<16xf32>
    %108 = vector.shape_cast %107 : vector<16xf32> to vector<16x1xf32>
    %109 = vector.broadcast %108 : vector<16x1xf32> to vector<16x8xf32>
    %110 = arith.subf %106, %109 : vector<16x8xf32>
    %111 = math.exp %110 : vector<16x8xf32>
    %cst_69 = arith.constant dense<0.000000e+00> : vector<16xf32>
    %112 = vector.multi_reduction <add>, %111, %cst_69 [1] : vector<16x8xf32> to vector<16xf32>
    %113 = vector.shape_cast %112 : vector<16xf32> to vector<16x1xf32>
    %114 = tpu.reciprocal %113 {approx = true} : vector<16x1xf32> -> vector<16x1xf32>
    %115 = vector.broadcast %114 : vector<16x1xf32> to vector<16x8xf32>
    %116 = arith.mulf %111, %115 : vector<16x8xf32>
    %cst_70 = arith.constant dense<0.000000e+00> : vector<16x32xf32>
    %117 = tpu.matmul %116, %105, %cst_70 {dimension_numbers = #tpu.dot_dimension_numbers<[1], [0], [0], [1], [0, 0, 1, 1], [], []>} : vector<16x8xf32>, vector<8x32xf32>, vector<16x32xf32> -> vector<16x32xf32>
    %c16_71 = arith.constant 16 : index
    %c32_72 = arith.constant 32 : index
    %118 = vector.load %arg12[%c16_71, %c32_72] : memref<32x128xf32, #tpu.memory_space<vmem>>, vector<16x32xf32>
    tpu.vector_store %arg12[%c16_71, %c32_72], %117 {strides = array<i32>} : memref<32x128xf32, #tpu.memory_space<vmem>>, vector<16x32xf32>,
    %119 = vector.extract_strided_slice %82 {offsets = [0, 64], sizes = [16, 32], strides = [1, 1]} : vector<16x128xf32> to vector<16x32xf32>
    %c1_73 = arith.constant 1 : index
    %c0_74 = arith.constant 0 : index
    %c64_75 = arith.constant 64 : index
    %120 = vector.load %arg10[%c1_73, %c0_74, %c64_75] : memref<2x8x128xf32, #tpu.memory_space<vmem>>, vector<1x8x32xf32>
    %121 = vector.shape_cast %120 : vector<1x8x32xf32> to vector<8x32xf32>
    %c1_76 = arith.constant 1 : index
    %c0_77 = arith.constant 0 : index
    %c64_78 = arith.constant 64 : index
    %122 = vector.load %arg11[%c1_76, %c0_77, %c64_78] : memref<2x8x128xf32, #tpu.memory_space<vmem>>, vector<1x8x32xf32>
    %123 = vector.shape_cast %122 : vector<1x8x32xf32> to vector<8x32xf32>
    %cst_79 = arith.constant dense<0.000000e+00> : vector<16x8xf32>
    %124 = tpu.matmul %119, %121, %cst_79 {dimension_numbers = #tpu.dot_dimension_numbers<[1], [1], [0], [0], [0, 0, 1, 0], [], []>} : vector<16x32xf32>, vector<8x32xf32>, vector<16x8xf32> -> vector<16x8xf32>
    %cst_80 = arith.constant dense<0xFF800000> : vector<16xf32>
    %125 = vector.multi_reduction <maximumf>, %124, %cst_80 [1] : vector<16x8xf32> to vector<16xf32>
    %126 = vector.shape_cast %125 : vector<16xf32> to vector<16x1xf32>
    %127 = vector.broadcast %126 : vector<16x1xf32> to vector<16x8xf32>
    %128 = arith.subf %124, %127 : vector<16x8xf32>
    %129 = math.exp %128 : vector<16x8xf32>
    %cst_81 = arith.constant dense<0.000000e+00> : vector<16xf32>
    %130 = vector.multi_reduction <add>, %129, %cst_81 [1] : vector<16x8xf32> to vector<16xf32>
    %131 = vector.shape_cast %130 : vector<16xf32> to vector<16x1xf32>
    %132 = tpu.reciprocal %131 {approx = true} : vector<16x1xf32> -> vector<16x1xf32>
    %133 = vector.broadcast %132 : vector<16x1xf32> to vector<16x8xf32>
    %134 = arith.mulf %129, %133 : vector<16x8xf32>
    %cst_82 = arith.constant dense<0.000000e+00> : vector<16x32xf32>
    %135 = tpu.matmul %134, %123, %cst_82 {dimension_numbers = #tpu.dot_dimension_numbers<[1], [0], [0], [1], [0, 0, 1, 1], [], []>} : vector<16x8xf32>, vector<8x32xf32>, vector<16x32xf32> -> vector<16x32xf32>
    %c16_83 = arith.constant 16 : index
    %c64_84 = arith.constant 64 : index
    %136 = vector.load %arg12[%c16_83, %c64_84] : memref<32x128xf32, #tpu.memory_space<vmem>>, vector<16x32xf32>
    tpu.vector_store %arg12[%c16_83, %c64_84], %135 {strides = array<i32>} : memref<32x128xf32, #tpu.memory_space<vmem>>, vector<16x32xf32>,
    %137 = vector.extract_strided_slice %82 {offsets = [0, 96], sizes = [16, 32], strides = [1, 1]} : vector<16x128xf32> to vector<16x32xf32>
    %c1_85 = arith.constant 1 : index
    %c0_86 = arith.constant 0 : index
    %c96_87 = arith.constant 96 : index
    %138 = vector.load %arg10[%c1_85, %c0_86, %c96_87] : memref<2x8x128xf32, #tpu.memory_space<vmem>>, vector<1x8x32xf32>
    %139 = vector.shape_cast %138 : vector<1x8x32xf32> to vector<8x32xf32>
    %c1_88 = arith.constant 1 : index
    %c0_89 = arith.constant 0 : index
    %c96_90 = arith.constant 96 : index
    %140 = vector.load %arg11[%c1_88, %c0_89, %c96_90] : memref<2x8x128xf32, #tpu.memory_space<vmem>>, vector<1x8x32xf32>
    %141 = vector.shape_cast %140 : vector<1x8x32xf32> to vector<8x32xf32>
    %cst_91 = arith.constant dense<0.000000e+00> : vector<16x8xf32>
    %142 = tpu.matmul %137, %139, %cst_91 {dimension_numbers = #tpu.dot_dimension_numbers<[1], [1], [0], [0], [0, 0, 1, 0], [], []>} : vector<16x32xf32>, vector<8x32xf32>, vector<16x8xf32> -> vector<16x8xf32>
    %cst_92 = arith.constant dense<0xFF800000> : vector<16xf32>
    %143 = vector.multi_reduction <maximumf>, %142, %cst_92 [1] : vector<16x8xf32> to vector<16xf32>
    %144 = vector.shape_cast %143 : vector<16xf32> to vector<16x1xf32>
    %145 = vector.broadcast %144 : vector<16x1xf32> to vector<16x8xf32>
    %146 = arith.subf %142, %145 : vector<16x8xf32>
    %147 = math.exp %146 : vector<16x8xf32>
    %cst_93 = arith.constant dense<0.000000e+00> : vector<16xf32>
    %148 = vector.multi_reduction <add>, %147, %cst_93 [1] : vector<16x8xf32> to vector<16xf32>
    %149 = vector.shape_cast %148 : vector<16xf32> to vector<16x1xf32>
    %150 = tpu.reciprocal %149 {approx = true} : vector<16x1xf32> -> vector<16x1xf32>
    %151 = vector.broadcast %150 : vector<16x1xf32> to vector<16x8xf32>
    %152 = arith.mulf %147, %151 : vector<16x8xf32>
    %cst_94 = arith.constant dense<0.000000e+00> : vector<16x32xf32>
    %153 = tpu.matmul %152, %141, %cst_94 {dimension_numbers = #tpu.dot_dimension_numbers<[1], [0], [0], [1], [0, 0, 1, 1], [], []>} : vector<16x8xf32>, vector<8x32xf32>, vector<16x32xf32> -> vector<16x32xf32>
    %c16_95 = arith.constant 16 : index
    %c96_96 = arith.constant 96 : index
    %154 = vector.load %arg12[%c16_95, %c96_96] : memref<32x128xf32, #tpu.memory_space<vmem>>, vector<16x32xf32>
    tpu.vector_store %arg12[%c16_95, %c96_96], %153 {strides = array<i32>} : memref<32x128xf32, #tpu.memory_space<vmem>>, vector<16x32xf32>,
    %c0_97 = arith.constant 0 : index
    %c0_98 = arith.constant 0 : index
    %155 = vector.load %arg12[%c0_97, %c0_98] : memref<32x128xf32, #tpu.memory_space<vmem>>, vector<32x128xf32>
    %c0_99 = arith.constant 0 : index
    %c0_100 = arith.constant 0 : index
    %156 = vector.load %arg7[%c0_99, %c0_100] : memref<128x128xf32, #tpu.memory_space<vmem>>, vector<128x128xf32>
    %cst_101 = arith.constant dense<0.000000e+00> : vector<32x128xf32>
    %157 = tpu.matmul %155, %156, %cst_101 {dimension_numbers = #tpu.dot_dimension_numbers<[1], [0], [0], [1], [0, 0, 1, 1], [], []>} : vector<32x128xf32>, vector<128x128xf32>, vector<32x128xf32> -> vector<32x128xf32>
    %c0_102 = arith.constant 0 : index
    %c0_103 = arith.constant 0 : index
    %158 = vector.load %arg8[%c0_102, %c0_103] : memref<1x128xf32, #tpu.memory_space<vmem>>, vector<1x128xf32>
    %159 = vector.broadcast %158 : vector<1x128xf32> to vector<32x128xf32>
    %160 = arith.addf %157, %159 : vector<32x128xf32>
    %161 = vector.shape_cast %160 : vector<32x128xf32> to vector<2x16x128xf32>
    %c0_104 = arith.constant 0 : index
    %c0_105 = arith.constant 0 : index
    %c0_106 = arith.constant 0 : index
    %162 = vector.load %arg9[%c0_104, %c0_105, %c0_106] : memref<2x16x128xf32, #tpu.memory_space<vmem>>, vector<2x16x128xf32>
    tpu.vector_store %arg9[%c0_104, %c0_105, %c0_106], %161 {strides = array<i32>} : memref<2x16x128xf32, #tpu.memory_space<vmem>>, vector<2x16x128xf32>,
    return
  }
  func.func @transform_0(%arg0: i32, %arg1: i32) -> (i32, i32, i32) {
    %c0_i32 = arith.constant 0 : i32
    %c0_i32_0 = arith.constant 0 : i32
    return %arg0, %arg1, %c0_i32 : i32, i32, i32
  }
  func.func @transform_1(%arg0: i32, %arg1: i32) -> (i32, i32, i32) {
    %c0_i32 = arith.constant 0 : i32
    %c0_i32_0 = arith.constant 0 : i32
    %c0_i32_1 = arith.constant 0 : i32
    return %arg0, %c0_i32, %c0_i32_0 : i32, i32, i32
  }
  func.func @transform_2(%arg0: i32, %arg1: i32) -> (i32, i32) {
    %c0_i32 = arith.constant 0 : i32
    %c0_i32_0 = arith.constant 0 : i32
    %c0_i32_1 = arith.constant 0 : i32
    return %c0_i32, %c0_i32_0 : i32, i32
  }
  func.func @transform_3(%arg0: i32, %arg1: i32) -> (i32, i32) {
    %c0_i32 = arith.constant 0 : i32
    %c0_i32_0 = arith.constant 0 : i32
    %c0_i32_1 = arith.constant 0 : i32
    return %c0_i32, %c0_i32_0 : i32, i32
  }
  func.func @transform_4(%arg0: i32, %arg1: i32) -> (i32, i32) {
    %c0_i32 = arith.constant 0 : i32
    %c0_i32_0 = arith.constant 0 : i32
    %c0_i32_1 = arith.constant 0 : i32
    return %c0_i32, %c0_i32_0 : i32, i32
  }
  func.func @transform_5(%arg0: i32, %arg1: i32) -> (i32, i32) {
    %c0_i32 = arith.constant 0 : i32
    %c0_i32_0 = arith.constant 0 : i32
    %c0_i32_1 = arith.constant 0 : i32
    return %c0_i32, %c0_i32_0 : i32, i32
  }
  func.func @transform_6(%arg0: i32, %arg1: i32) -> (i32, i32) {
    %c0_i32 = arith.constant 0 : i32
    %c0_i32_0 = arith.constant 0 : i32
    %c0_i32_1 = arith.constant 0 : i32
    return %c0_i32, %c0_i32_0 : i32, i32
  }
  func.func @transform_7(%arg0: i32, %arg1: i32) -> (i32, i32, i32) {
    %c0_i32 = arith.constant 0 : i32
    %c0_i32_0 = arith.constant 0 : i32
    return %arg0, %arg1, %c0_i32 : i32, i32, i32
  }
}

module attributes {stable_mosaic.version = 11 : i64} {
  func.func @_cross_attention_kernel(%arg0: i32, %arg1: i32, %arg2: memref<2x16x128xf32, #tpu.memory_space<vmem>>, %arg3: memref<2x8x128xf32, #tpu.memory_space<vmem>>, %arg4: memref<128x128xf32, #tpu.memory_space<vmem>>, %arg5: memref<128x128xf32, #tpu.memory_space<vmem>>, %arg6: memref<128x128xf32, #tpu.memory_space<vmem>>, %arg7: memref<128x128xf32, #tpu.memory_space<vmem>>, %arg8: memref<1x128xf32, #tpu.memory_space<vmem>>, %arg9: memref<2x16x128xf32, #tpu.memory_space<vmem>>, %arg10: memref<2x8x128xf32, #tpu.memory_space<vmem>>, %arg11: memref<2x8x128xf32, #tpu.memory_space<vmem>>, %arg12: memref<32x128xf32, #tpu.memory_space<vmem>>) attributes {dimension_semantics = [#tpu.dimension_semantics<parallel>, #tpu.dimension_semantics<arbitrary>], iteration_bounds = array<i64: 1, 1>, scalar_prefetch = 0 : i64, scratch_operands = 3 : i64, tpu.core_type = #tpu.core_type<tc>, window_params = [{transform_indices = @transform_0, window_bounds = array<i64: 2, 16, 128>}, {transform_indices = @transform_1, window_bounds = array<i64: 2, 8, 128>}, {pipeline_mode = #tpu.pipeline_mode<synchronous>, transform_indices = @transform_2, window_bounds = array<i64: 128, 128>}, {pipeline_mode = #tpu.pipeline_mode<synchronous>, transform_indices = @transform_3, window_bounds = array<i64: 128, 128>}, {pipeline_mode = #tpu.pipeline_mode<synchronous>, transform_indices = @transform_4, window_bounds = array<i64: 128, 128>}, {pipeline_mode = #tpu.pipeline_mode<synchronous>, transform_indices = @transform_5, window_bounds = array<i64: 128, 128>}, {pipeline_mode = #tpu.pipeline_mode<synchronous>, transform_indices = @transform_6, window_bounds = array<i64: 1, 128>}, {transform_indices = @transform_7, window_bounds = array<i64: 2, 16, 128>}]} {
    %c0_i32 = arith.constant 0 : i32
    %0 = arith.cmpi eq, %arg1, %c0_i32 : i32
    %1 = arith.extui %0 : i1 to i32
    %c0_i32_0 = arith.constant 0 : i32
    %2 = arith.cmpi ne, %1, %c0_i32_0 : i32
    scf.if %2 {
      %c0_107 = arith.constant 0 : index
      %c0_108 = arith.constant 0 : index
      %c0_109 = arith.constant 0 : index
      %163 = vector.load %arg3[%c0_107, %c0_108, %c0_109] : memref<2x8x128xf32, #tpu.memory_space<vmem>>, vector<2x8x128xf32>
      %164 = vector.shape_cast %163 : vector<2x8x128xf32> to vector<16x128xf32>
      %c0_110 = arith.constant 0 : index
      %c0_111 = arith.constant 0 : index
      %165 = vector.load %arg5[%c0_110, %c0_111] : memref<128x128xf32, #tpu.memory_space<vmem>>, vector<128x128xf32>
      %cst_112 = arith.constant dense<0.000000e+00> : vector<16x128xf32>
      %166 = tpu.matmul %164, %165, %cst_112 {dimension_numbers = #tpu.dot_dimension_numbers<[1], [0], [0], [1], [0, 0, 1, 1], [], []>} : vector<16x128xf32>, vector<128x128xf32>, vector<16x128xf32> -> vector<16x128xf32>
      %c0_113 = arith.constant 0 : index
      %c0_114 = arith.constant 0 : index
      %167 = vector.load %arg6[%c0_113, %c0_114] : memref<128x128xf32, #tpu.memory_space<vmem>>, vector<128x128xf32>
      %cst_115 = arith.constant dense<0.000000e+00> : vector<16x128xf32>
      %168 = tpu.matmul %164, %167, %cst_115 {dimension_numbers = #tpu.dot_dimension_numbers<[1], [0], [0], [1], [0, 0, 1, 1], [], []>} : vector<16x128xf32>, vector<128x128xf32>, vector<16x128xf32> -> vector<16x128xf32>
      %169 = vector.shape_cast %166 : vector<16x128xf32> to vector<2x8x128xf32>
      %c0_116 = arith.constant 0 : index
      %c0_117 = arith.constant 0 : index
      %c0_118 = arith.constant 0 : index
      %170 = vector.load %arg10[%c0_116, %c0_117, %c0_118] : memref<2x8x128xf32, #tpu.memory_space<vmem>>, vector<2x8x128xf32>
      tpu.vector_store %arg10[%c0_116, %c0_117, %c0_118], %169 {strides = array<i32>} : memref<2x8x128xf32, #tpu.memory_space<vmem>>, vector<2x8x128xf32>,
      %171 = vector.shape_cast %168 : vector<16x128xf32> to vector<2x8x128xf32>
      %c0_119 = arith.constant 0 : index
      %c0_120 = arith.constant 0 : index
      %c0_121 = arith.constant 0 : index
      %172 = vector.load %arg11[%c0_119, %c0_120, %c0_121] : memref<2x8x128xf32, #tpu.memory_space<vmem>>, vector<2x8x128xf32>
      tpu.vector_store %arg11[%c0_119, %c0_120, %c0_121], %171 {strides = array<i32>} : memref<2x8x128xf32, #tpu.memory_space<vmem>>, vector<2x8x128xf32>,
    } else {
    }
    %c0 = arith.constant 0 : index
    %c0_1 = arith.constant 0 : index
    %c0_2 = arith.constant 0 : index
    %3 = vector.load %arg2[%c0, %c0_1, %c0_2] : memref<2x16x128xf32, #tpu.memory_space<vmem>>, vector<2x16x128xf32>
    %4 = vector.shape_cast %3 : vector<2x16x128xf32> to vector<32x128xf32>
    %c0_3 = arith.constant 0 : index
    %c0_4 = arith.constant 0 : index
    %5 = vector.load %arg4[%c0_3, %c0_4] : memref<128x128xf32, #tpu.memory_space<vmem>>, vector<128x128xf32>
    %cst = arith.constant dense<0.000000e+00> : vector<32x128xf32>
    %6 = tpu.matmul %4, %5, %cst {dimension_numbers = #tpu.dot_dimension_numbers<[1], [0], [0], [1], [0, 0, 1, 1], [], []>} : vector<32x128xf32>, vector<128x128xf32>, vector<32x128xf32> -> vector<32x128xf32>
    %cst_5 = arith.constant 0.176776692 : f32
    %7 = vector.broadcast %cst_5 : f32 to vector<32x128xf32>
    %8 = arith.mulf %6, %7 : vector<32x128xf32>
    %9 = vector.extract_strided_slice %8 {offsets = [0, 0], sizes = [16, 128], strides = [1, 1]} : vector<32x128xf32> to vector<16x128xf32>
    %10 = vector.extract_strided_slice %9 {offsets = [0, 0], sizes = [16, 32], strides = [1, 1]} : vector<16x128xf32> to vector<16x32xf32>
    %c0_6 = arith.constant 0 : index
    %c0_7 = arith.constant 0 : index
    %c0_8 = arith.constant 0 : index
    %11 = vector.load %arg10[%c0_6, %c0_7, %c0_8] : memref<2x8x128xf32, #tpu.memory_space<vmem>>, vector<1x8x32xf32>
    %12 = vector.shape_cast %11 : vector<1x8x32xf32> to vector<8x32xf32>
    %c0_9 = arith.constant 0 : index
    %c0_10 = arith.constant 0 : index
    %c0_11 = arith.constant 0 : index
    %13 = vector.load %arg11[%c0_9, %c0_10, %c0_11] : memref<2x8x128xf32, #tpu.memory_space<vmem>>, vector<1x8x32xf32>
    %14 = vector.shape_cast %13 : vector<1x8x32xf32> to vector<8x32xf32>
    %cst_12 = arith.constant dense<0.000000e+00> : vector<16x8xf32>
    %15 = tpu.matmul %10, %12, %cst_12 {dimension_numbers = #tpu.dot_dimension_numbers<[1], [1], [0], [0], [0, 0, 1, 0], [], []>} : vector<16x32xf32>, vector<8x32xf32>, vector<16x8xf32> -> vector<16x8xf32>
    %cst_13 = arith.constant dense<0xFF800000> : vector<16xf32>
    %16 = vector.multi_reduction <maximumf>, %15, %cst_13 [1] : vector<16x8xf32> to vector<16xf32>
    %17 = vector.shape_cast %16 : vector<16xf32> to vector<16x1xf32>
    %18 = vector.broadcast %17 : vector<16x1xf32> to vector<16x8xf32>
    %19 = arith.subf %15, %18 : vector<16x8xf32>
    %20 = math.exp %19 : vector<16x8xf32>
    %cst_14 = arith.constant dense<0.000000e+00> : vector<16xf32>
    %21 = vector.multi_reduction <add>, %20, %cst_14 [1] : vector<16x8xf32> to vector<16xf32>
    %22 = vector.shape_cast %21 : vector<16xf32> to vector<16x1xf32>
    %23 = tpu.reciprocal %22 {approx = true} : vector<16x1xf32> -> vector<16x1xf32>
    %24 = vector.broadcast %23 : vector<16x1xf32> to vector<16x8xf32>
    %25 = arith.mulf %20, %24 : vector<16x8xf32>
    %cst_15 = arith.constant dense<0.000000e+00> : vector<16x32xf32>
    %26 = tpu.matmul %25, %14, %cst_15 {dimension_numbers = #tpu.dot_dimension_numbers<[1], [0], [0], [1], [0, 0, 1, 1], [], []>} : vector<16x8xf32>, vector<8x32xf32>, vector<16x32xf32> -> vector<16x32xf32>
    %c0_16 = arith.constant 0 : index
    %c0_17 = arith.constant 0 : index
    %27 = vector.load %arg12[%c0_16, %c0_17] : memref<32x128xf32, #tpu.memory_space<vmem>>, vector<16x32xf32>
    tpu.vector_store %arg12[%c0_16, %c0_17], %26 {strides = array<i32>} : memref<32x128xf32, #tpu.memory_space<vmem>>, vector<16x32xf32>,
    %28 = vector.extract_strided_slice %9 {offsets = [0, 32], sizes = [16, 32], strides = [1, 1]} : vector<16x128xf32> to vector<16x32xf32>
    %c0_18 = arith.constant 0 : index
    %c0_19 = arith.constant 0 : index
    %c32 = arith.constant 32 : index
    %29 = vector.load %arg10[%c0_18, %c0_19, %c32] : memref<2x8x128xf32, #tpu.memory_space<vmem>>, vector<1x8x32xf32>
    %30 = vector.shape_cast %29 : vector<1x8x32xf32> to vector<8x32xf32>
    %c0_20 = arith.constant 0 : index
    %c0_21 = arith.constant 0 : index
    %c32_22 = arith.constant 32 : index
    %31 = vector.load %arg11[%c0_20, %c0_21, %c32_22] : memref<2x8x128xf32, #tpu.memory_space<vmem>>, vector<1x8x32xf32>
    %32 = vector.shape_cast %31 : vector<1x8x32xf32> to vector<8x32xf32>
    %cst_23 = arith.constant dense<0.000000e+00> : vector<16x8xf32>
    %33 = tpu.matmul %28, %30, %cst_23 {dimension_numbers = #tpu.dot_dimension_numbers<[1], [1], [0], [0], [0, 0, 1, 0], [], []>} : vector<16x32xf32>, vector<8x32xf32>, vector<16x8xf32> -> vector<16x8xf32>
    %cst_24 = arith.constant dense<0xFF800000> : vector<16xf32>
    %34 = vector.multi_reduction <maximumf>, %33, %cst_24 [1] : vector<16x8xf32> to vector<16xf32>
    %35 = vector.shape_cast %34 : vector<16xf32> to vector<16x1xf32>
    %36 = vector.broadcast %35 : vector<16x1xf32> to vector<16x8xf32>
    %37 = arith.subf %33, %36 : vector<16x8xf32>
    %38 = math.exp %37 : vector<16x8xf32>
    %cst_25 = arith.constant dense<0.000000e+00> : vector<16xf32>
    %39 = vector.multi_reduction <add>, %38, %cst_25 [1] : vector<16x8xf32> to vector<16xf32>
    %40 = vector.shape_cast %39 : vector<16xf32> to vector<16x1xf32>
    %41 = tpu.reciprocal %40 {approx = true} : vector<16x1xf32> -> vector<16x1xf32>
    %42 = vector.broadcast %41 : vector<16x1xf32> to vector<16x8xf32>
    %43 = arith.mulf %38, %42 : vector<16x8xf32>
    %cst_26 = arith.constant dense<0.000000e+00> : vector<16x32xf32>
    %44 = tpu.matmul %43, %32, %cst_26 {dimension_numbers = #tpu.dot_dimension_numbers<[1], [0], [0], [1], [0, 0, 1, 1], [], []>} : vector<16x8xf32>, vector<8x32xf32>, vector<16x32xf32> -> vector<16x32xf32>
    %c0_27 = arith.constant 0 : index
    %c32_28 = arith.constant 32 : index
    %45 = vector.load %arg12[%c0_27, %c32_28] : memref<32x128xf32, #tpu.memory_space<vmem>>, vector<16x32xf32>
    tpu.vector_store %arg12[%c0_27, %c32_28], %44 {strides = array<i32>} : memref<32x128xf32, #tpu.memory_space<vmem>>, vector<16x32xf32>,
    %46 = vector.extract_strided_slice %9 {offsets = [0, 64], sizes = [16, 32], strides = [1, 1]} : vector<16x128xf32> to vector<16x32xf32>
    %c0_29 = arith.constant 0 : index
    %c0_30 = arith.constant 0 : index
    %c64 = arith.constant 64 : index
    %47 = vector.load %arg10[%c0_29, %c0_30, %c64] : memref<2x8x128xf32, #tpu.memory_space<vmem>>, vector<1x8x32xf32>
    %48 = vector.shape_cast %47 : vector<1x8x32xf32> to vector<8x32xf32>
    %c0_31 = arith.constant 0 : index
    %c0_32 = arith.constant 0 : index
    %c64_33 = arith.constant 64 : index
    %49 = vector.load %arg11[%c0_31, %c0_32, %c64_33] : memref<2x8x128xf32, #tpu.memory_space<vmem>>, vector<1x8x32xf32>
    %50 = vector.shape_cast %49 : vector<1x8x32xf32> to vector<8x32xf32>
    %cst_34 = arith.constant dense<0.000000e+00> : vector<16x8xf32>
    %51 = tpu.matmul %46, %48, %cst_34 {dimension_numbers = #tpu.dot_dimension_numbers<[1], [1], [0], [0], [0, 0, 1, 0], [], []>} : vector<16x32xf32>, vector<8x32xf32>, vector<16x8xf32> -> vector<16x8xf32>
    %cst_35 = arith.constant dense<0xFF800000> : vector<16xf32>
    %52 = vector.multi_reduction <maximumf>, %51, %cst_35 [1] : vector<16x8xf32> to vector<16xf32>
    %53 = vector.shape_cast %52 : vector<16xf32> to vector<16x1xf32>
    %54 = vector.broadcast %53 : vector<16x1xf32> to vector<16x8xf32>
    %55 = arith.subf %51, %54 : vector<16x8xf32>
    %56 = math.exp %55 : vector<16x8xf32>
    %cst_36 = arith.constant dense<0.000000e+00> : vector<16xf32>
    %57 = vector.multi_reduction <add>, %56, %cst_36 [1] : vector<16x8xf32> to vector<16xf32>
    %58 = vector.shape_cast %57 : vector<16xf32> to vector<16x1xf32>
    %59 = tpu.reciprocal %58 {approx = true} : vector<16x1xf32> -> vector<16x1xf32>
    %60 = vector.broadcast %59 : vector<16x1xf32> to vector<16x8xf32>
    %61 = arith.mulf %56, %60 : vector<16x8xf32>
    %cst_37 = arith.constant dense<0.000000e+00> : vector<16x32xf32>
    %62 = tpu.matmul %61, %50, %cst_37 {dimension_numbers = #tpu.dot_dimension_numbers<[1], [0], [0], [1], [0, 0, 1, 1], [], []>} : vector<16x8xf32>, vector<8x32xf32>, vector<16x32xf32> -> vector<16x32xf32>
    %c0_38 = arith.constant 0 : index
    %c64_39 = arith.constant 64 : index
    %63 = vector.load %arg12[%c0_38, %c64_39] : memref<32x128xf32, #tpu.memory_space<vmem>>, vector<16x32xf32>
    tpu.vector_store %arg12[%c0_38, %c64_39], %62 {strides = array<i32>} : memref<32x128xf32, #tpu.memory_space<vmem>>, vector<16x32xf32>,
    %64 = vector.extract_strided_slice %9 {offsets = [0, 96], sizes = [16, 32], strides = [1, 1]} : vector<16x128xf32> to vector<16x32xf32>
    %c0_40 = arith.constant 0 : index
    %c0_41 = arith.constant 0 : index
    %c96 = arith.constant 96 : index
    %65 = vector.load %arg10[%c0_40, %c0_41, %c96] : memref<2x8x128xf32, #tpu.memory_space<vmem>>, vector<1x8x32xf32>
    %66 = vector.shape_cast %65 : vector<1x8x32xf32> to vector<8x32xf32>
    %c0_42 = arith.constant 0 : index
    %c0_43 = arith.constant 0 : index
    %c96_44 = arith.constant 96 : index
    %67 = vector.load %arg11[%c0_42, %c0_43, %c96_44] : memref<2x8x128xf32, #tpu.memory_space<vmem>>, vector<1x8x32xf32>
    %68 = vector.shape_cast %67 : vector<1x8x32xf32> to vector<8x32xf32>
    %cst_45 = arith.constant dense<0.000000e+00> : vector<16x8xf32>
    %69 = tpu.matmul %64, %66, %cst_45 {dimension_numbers = #tpu.dot_dimension_numbers<[1], [1], [0], [0], [0, 0, 1, 0], [], []>} : vector<16x32xf32>, vector<8x32xf32>, vector<16x8xf32> -> vector<16x8xf32>
    %cst_46 = arith.constant dense<0xFF800000> : vector<16xf32>
    %70 = vector.multi_reduction <maximumf>, %69, %cst_46 [1] : vector<16x8xf32> to vector<16xf32>
    %71 = vector.shape_cast %70 : vector<16xf32> to vector<16x1xf32>
    %72 = vector.broadcast %71 : vector<16x1xf32> to vector<16x8xf32>
    %73 = arith.subf %69, %72 : vector<16x8xf32>
    %74 = math.exp %73 : vector<16x8xf32>
    %cst_47 = arith.constant dense<0.000000e+00> : vector<16xf32>
    %75 = vector.multi_reduction <add>, %74, %cst_47 [1] : vector<16x8xf32> to vector<16xf32>
    %76 = vector.shape_cast %75 : vector<16xf32> to vector<16x1xf32>
    %77 = tpu.reciprocal %76 {approx = true} : vector<16x1xf32> -> vector<16x1xf32>
    %78 = vector.broadcast %77 : vector<16x1xf32> to vector<16x8xf32>
    %79 = arith.mulf %74, %78 : vector<16x8xf32>
    %cst_48 = arith.constant dense<0.000000e+00> : vector<16x32xf32>
    %80 = tpu.matmul %79, %68, %cst_48 {dimension_numbers = #tpu.dot_dimension_numbers<[1], [0], [0], [1], [0, 0, 1, 1], [], []>} : vector<16x8xf32>, vector<8x32xf32>, vector<16x32xf32> -> vector<16x32xf32>
    %c0_49 = arith.constant 0 : index
    %c96_50 = arith.constant 96 : index
    %81 = vector.load %arg12[%c0_49, %c96_50] : memref<32x128xf32, #tpu.memory_space<vmem>>, vector<16x32xf32>
    tpu.vector_store %arg12[%c0_49, %c96_50], %80 {strides = array<i32>} : memref<32x128xf32, #tpu.memory_space<vmem>>, vector<16x32xf32>,
    %82 = vector.extract_strided_slice %8 {offsets = [16, 0], sizes = [16, 128], strides = [1, 1]} : vector<32x128xf32> to vector<16x128xf32>
    %83 = vector.extract_strided_slice %82 {offsets = [0, 0], sizes = [16, 32], strides = [1, 1]} : vector<16x128xf32> to vector<16x32xf32>
    %c1 = arith.constant 1 : index
    %c0_51 = arith.constant 0 : index
    %c0_52 = arith.constant 0 : index
    %84 = vector.load %arg10[%c1, %c0_51, %c0_52] : memref<2x8x128xf32, #tpu.memory_space<vmem>>, vector<1x8x32xf32>
    %85 = vector.shape_cast %84 : vector<1x8x32xf32> to vector<8x32xf32>
    %c1_53 = arith.constant 1 : index
    %c0_54 = arith.constant 0 : index
    %c0_55 = arith.constant 0 : index
    %86 = vector.load %arg11[%c1_53, %c0_54, %c0_55] : memref<2x8x128xf32, #tpu.memory_space<vmem>>, vector<1x8x32xf32>
    %87 = vector.shape_cast %86 : vector<1x8x32xf32> to vector<8x32xf32>
    %cst_56 = arith.constant dense<0.000000e+00> : vector<16x8xf32>
    %88 = tpu.matmul %83, %85, %cst_56 {dimension_numbers = #tpu.dot_dimension_numbers<[1], [1], [0], [0], [0, 0, 1, 0], [], []>} : vector<16x32xf32>, vector<8x32xf32>, vector<16x8xf32> -> vector<16x8xf32>
    %cst_57 = arith.constant dense<0xFF800000> : vector<16xf32>
    %89 = vector.multi_reduction <maximumf>, %88, %cst_57 [1] : vector<16x8xf32> to vector<16xf32>
    %90 = vector.shape_cast %89 : vector<16xf32> to vector<16x1xf32>
    %91 = vector.broadcast %90 : vector<16x1xf32> to vector<16x8xf32>
    %92 = arith.subf %88, %91 : vector<16x8xf32>
    %93 = math.exp %92 : vector<16x8xf32>
    %cst_58 = arith.constant dense<0.000000e+00> : vector<16xf32>
    %94 = vector.multi_reduction <add>, %93, %cst_58 [1] : vector<16x8xf32> to vector<16xf32>
    %95 = vector.shape_cast %94 : vector<16xf32> to vector<16x1xf32>
    %96 = tpu.reciprocal %95 {approx = true} : vector<16x1xf32> -> vector<16x1xf32>
    %97 = vector.broadcast %96 : vector<16x1xf32> to vector<16x8xf32>
    %98 = arith.mulf %93, %97 : vector<16x8xf32>
    %cst_59 = arith.constant dense<0.000000e+00> : vector<16x32xf32>
    %99 = tpu.matmul %98, %87, %cst_59 {dimension_numbers = #tpu.dot_dimension_numbers<[1], [0], [0], [1], [0, 0, 1, 1], [], []>} : vector<16x8xf32>, vector<8x32xf32>, vector<16x32xf32> -> vector<16x32xf32>
    %c16 = arith.constant 16 : index
    %c0_60 = arith.constant 0 : index
    %100 = vector.load %arg12[%c16, %c0_60] : memref<32x128xf32, #tpu.memory_space<vmem>>, vector<16x32xf32>
    tpu.vector_store %arg12[%c16, %c0_60], %99 {strides = array<i32>} : memref<32x128xf32, #tpu.memory_space<vmem>>, vector<16x32xf32>,
    %101 = vector.extract_strided_slice %82 {offsets = [0, 32], sizes = [16, 32], strides = [1, 1]} : vector<16x128xf32> to vector<16x32xf32>
    %c1_61 = arith.constant 1 : index
    %c0_62 = arith.constant 0 : index
    %c32_63 = arith.constant 32 : index
    %102 = vector.load %arg10[%c1_61, %c0_62, %c32_63] : memref<2x8x128xf32, #tpu.memory_space<vmem>>, vector<1x8x32xf32>
    %103 = vector.shape_cast %102 : vector<1x8x32xf32> to vector<8x32xf32>
    %c1_64 = arith.constant 1 : index
    %c0_65 = arith.constant 0 : index
    %c32_66 = arith.constant 32 : index
    %104 = vector.load %arg11[%c1_64, %c0_65, %c32_66] : memref<2x8x128xf32, #tpu.memory_space<vmem>>, vector<1x8x32xf32>
    %105 = vector.shape_cast %104 : vector<1x8x32xf32> to vector<8x32xf32>
    %cst_67 = arith.constant dense<0.000000e+00> : vector<16x8xf32>
    %106 = tpu.matmul %101, %103, %cst_67 {dimension_numbers = #tpu.dot_dimension_numbers<[1], [1], [0], [0], [0, 0, 1, 0], [], []>} : vector<16x32xf32>, vector<8x32xf32>, vector<16x8xf32> -> vector<16x8xf32>
    %cst_68 = arith.constant dense<0xFF800000> : vector<16xf32>
    %107 = vector.multi_reduction <maximumf>, %106, %cst_68 [1] : vector<16x8xf32> to vector<16xf32>
    %108 = vector.shape_cast %107 : vector<16xf32> to vector<16x1xf32>
    %109 = vector.broadcast %108 : vector<16x1xf32> to vector<16x8xf32>
    %110 = arith.subf %106, %109 : vector<16x8xf32>
    %111 = math.exp %110 : vector<16x8xf32>
    %cst_69 = arith.constant dense<0.000000e+00> : vector<16xf32>
    %112 = vector.multi_reduction <add>, %111, %cst_69 [1] : vector<16x8xf32> to vector<16xf32>
    %113 = vector.shape_cast %112 : vector<16xf32> to vector<16x1xf32>
    %114 = tpu.reciprocal %113 {approx = true} : vector<16x1xf32> -> vector<16x1xf32>
    %115 = vector.broadcast %114 : vector<16x1xf32> to vector<16x8xf32>
    %116 = arith.mulf %111, %115 : vector<16x8xf32>
    %cst_70 = arith.constant dense<0.000000e+00> : vector<16x32xf32>
    %117 = tpu.matmul %116, %105, %cst_70 {dimension_numbers = #tpu.dot_dimension_numbers<[1], [0], [0], [1], [0, 0, 1, 1], [], []>} : vector<16x8xf32>, vector<8x32xf32>, vector<16x32xf32> -> vector<16x32xf32>
    %c16_71 = arith.constant 16 : index
    %c32_72 = arith.constant 32 : index
    %118 = vector.load %arg12[%c16_71, %c32_72] : memref<32x128xf32, #tpu.memory_space<vmem>>, vector<16x32xf32>
    tpu.vector_store %arg12[%c16_71, %c32_72], %117 {strides = array<i32>} : memref<32x128xf32, #tpu.memory_space<vmem>>, vector<16x32xf32>,
    %119 = vector.extract_strided_slice %82 {offsets = [0, 64], sizes = [16, 32], strides = [1, 1]} : vector<16x128xf32> to vector<16x32xf32>
    %c1_73 = arith.constant 1 : index
    %c0_74 = arith.constant 0 : index
    %c64_75 = arith.constant 64 : index
    %120 = vector.load %arg10[%c1_73, %c0_74, %c64_75] : memref<2x8x128xf32, #tpu.memory_space<vmem>>, vector<1x8x32xf32>
    %121 = vector.shape_cast %120 : vector<1x8x32xf32> to vector<8x32xf32>
    %c1_76 = arith.constant 1 : index
    %c0_77 = arith.constant 0 : index
    %c64_78 = arith.constant 64 : index
    %122 = vector.load %arg11[%c1_76, %c0_77, %c64_78] : memref<2x8x128xf32, #tpu.memory_space<vmem>>, vector<1x8x32xf32>
    %123 = vector.shape_cast %122 : vector<1x8x32xf32> to vector<8x32xf32>
    %cst_79 = arith.constant dense<0.000000e+00> : vector<16x8xf32>
    %124 = tpu.matmul %119, %121, %cst_79 {dimension_numbers = #tpu.dot_dimension_numbers<[1], [1], [0], [0], [0, 0, 1, 0], [], []>} : vector<16x32xf32>, vector<8x32xf32>, vector<16x8xf32> -> vector<16x8xf32>
    %cst_80 = arith.constant dense<0xFF800000> : vector<16xf32>
    %125 = vector.multi_reduction <maximumf>, %124, %cst_80 [1] : vector<16x8xf32> to vector<16xf32>
    %126 = vector.shape_cast %125 : vector<16xf32> to vector<16x1xf32>
    %127 = vector.broadcast %126 : vector<16x1xf32> to vector<16x8xf32>
    %128 = arith.subf %124, %127 : vector<16x8xf32>
    %129 = math.exp %128 : vector<16x8xf32>
    %cst_81 = arith.constant dense<0.000000e+00> : vector<16xf32>
    %130 = vector.multi_reduction <add>, %129, %cst_81 [1] : vector<16x8xf32> to vector<16xf32>
    %131 = vector.shape_cast %130 : vector<16xf32> to vector<16x1xf32>
    %132 = tpu.reciprocal %131 {approx = true} : vector<16x1xf32> -> vector<16x1xf32>
    %133 = vector.broadcast %132 : vector<16x1xf32> to vector<16x8xf32>
    %134 = arith.mulf %129, %133 : vector<16x8xf32>
    %cst_82 = arith.constant dense<0.000000e+00> : vector<16x32xf32>
    %135 = tpu.matmul %134, %123, %cst_82 {dimension_numbers = #tpu.dot_dimension_numbers<[1], [0], [0], [1], [0, 0, 1, 1], [], []>} : vector<16x8xf32>, vector<8x32xf32>, vector<16x32xf32> -> vector<16x32xf32>
    %c16_83 = arith.constant 16 : index
    %c64_84 = arith.constant 64 : index
    %136 = vector.load %arg12[%c16_83, %c64_84] : memref<32x128xf32, #tpu.memory_space<vmem>>, vector<16x32xf32>
    tpu.vector_store %arg12[%c16_83, %c64_84], %135 {strides = array<i32>} : memref<32x128xf32, #tpu.memory_space<vmem>>, vector<16x32xf32>,
    %137 = vector.extract_strided_slice %82 {offsets = [0, 96], sizes = [16, 32], strides = [1, 1]} : vector<16x128xf32> to vector<16x32xf32>
    %c1_85 = arith.constant 1 : index
    %c0_86 = arith.constant 0 : index
    %c96_87 = arith.constant 96 : index
    %138 = vector.load %arg10[%c1_85, %c0_86, %c96_87] : memref<2x8x128xf32, #tpu.memory_space<vmem>>, vector<1x8x32xf32>
    %139 = vector.shape_cast %138 : vector<1x8x32xf32> to vector<8x32xf32>
    %c1_88 = arith.constant 1 : index
    %c0_89 = arith.constant 0 : index
    %c96_90 = arith.constant 96 : index
    %140 = vector.load %arg11[%c1_88, %c0_89, %c96_90] : memref<2x8x128xf32, #tpu.memory_space<vmem>>, vector<1x8x32xf32>
    %141 = vector.shape_cast %140 : vector<1x8x32xf32> to vector<8x32xf32>
    %cst_91 = arith.constant dense<0.000000e+00> : vector<16x8xf32>
    %142 = tpu.matmul %137, %139, %cst_91 {dimension_numbers = #tpu.dot_dimension_numbers<[1], [1], [0], [0], [0, 0, 1, 0], [], []>} : vector<16x32xf32>, vector<8x32xf32>, vector<16x8xf32> -> vector<16x8xf32>
    %cst_92 = arith.constant dense<0xFF800000> : vector<16xf32>
    %143 = vector.multi_reduction <maximumf>, %142, %cst_92 [1] : vector<16x8xf32> to vector<16xf32>
    %144 = vector.shape_cast %143 : vector<16xf32> to vector<16x1xf32>
    %145 = vector.broadcast %144 : vector<16x1xf32> to vector<16x8xf32>
    %146 = arith.subf %142, %145 : vector<16x8xf32>
    %147 = math.exp %146 : vector<16x8xf32>
    %cst_93 = arith.constant dense<0.000000e+00> : vector<16xf32>
    %148 = vector.multi_reduction <add>, %147, %cst_93 [1] : vector<16x8xf32> to vector<16xf32>
    %149 = vector.shape_cast %148 : vector<16xf32> to vector<16x1xf32>
    %150 = tpu.reciprocal %149 {approx = true} : vector<16x1xf32> -> vector<16x1xf32>
    %151 = vector.broadcast %150 : vector<16x1xf32> to vector<16x8xf32>
    %152 = arith.mulf %147, %151 : vector<16x8xf32>
    %cst_94 = arith.constant dense<0.000000e+00> : vector<16x32xf32>
    %153 = tpu.matmul %152, %141, %cst_94 {dimension_numbers = #tpu.dot_dimension_numbers<[1], [0], [0], [1], [0, 0, 1, 1], [], []>} : vector<16x8xf32>, vector<8x32xf32>, vector<16x32xf32> -> vector<16x32xf32>
    %c16_95 = arith.constant 16 : index
    %c96_96 = arith.constant 96 : index
    %154 = vector.load %arg12[%c16_95, %c96_96] : memref<32x128xf32, #tpu.memory_space<vmem>>, vector<16x32xf32>
    tpu.vector_store %arg12[%c16_95, %c96_96], %153 {strides = array<i32>} : memref<32x128xf32, #tpu.memory_space<vmem>>, vector<16x32xf32>,
    %c0_97 = arith.constant 0 : index
    %c0_98 = arith.constant 0 : index
    %155 = vector.load %arg12[%c0_97, %c0_98] : memref<32x128xf32, #tpu.memory_space<vmem>>, vector<32x128xf32>
    %c0_99 = arith.constant 0 : index
    %c0_100 = arith.constant 0 : index
    %156 = vector.load %arg7[%c0_99, %c0_100] : memref<128x128xf32, #tpu.memory_space<vmem>>, vector<128x128xf32>
    %cst_101 = arith.constant dense<0.000000e+00> : vector<32x128xf32>
    %157 = tpu.matmul %155, %156, %cst_101 {dimension_numbers = #tpu.dot_dimension_numbers<[1], [0], [0], [1], [0, 0, 1, 1], [], []>} : vector<32x128xf32>, vector<128x128xf32>, vector<32x128xf32> -> vector<32x128xf32>
    %c0_102 = arith.constant 0 : index
    %c0_103 = arith.constant 0 : index
    %158 = vector.load %arg8[%c0_102, %c0_103] : memref<1x128xf32, #tpu.memory_space<vmem>>, vector<1x128xf32>
    %159 = vector.broadcast %158 : vector<1x128xf32> to vector<32x128xf32>
    %160 = arith.addf %157, %159 : vector<32x128xf32>
    %161 = vector.shape_cast %160 : vector<32x128xf32> to vector<2x16x128xf32>
    %c0_104 = arith.constant 0 : index
    %c0_105 = arith.constant 0 : index
    %c0_106 = arith.constant 0 : index
    %162 = vector.load %arg9[%c0_104, %c0_105, %c0_106] : memref<2x16x128xf32, #tpu.memory_space<vmem>>, vector<2x16x128xf32>
    tpu.vector_store %arg9[%c0_104, %c0_105, %c0_106], %161 {strides = array<i32>} : memref<2x16x128xf32, #tpu.memory_space<vmem>>, vector<2x16x128xf32>,
    return
  }
  func.func @transform_0(%arg0: i32, %arg1: i32) -> (i32, i32, i32) {
    %c0_i32 = arith.constant 0 : i32
    %c0_i32_0 = arith.constant 0 : i32
    return %arg0, %arg1, %c0_i32 : i32, i32, i32
  }
  func.func @transform_1(%arg0: i32, %arg1: i32) -> (i32, i32, i32) {
    %c0_i32 = arith.constant 0 : i32
    %c0_i32_0 = arith.constant 0 : i32
    %c0_i32_1 = arith.constant 0 : i32
    return %arg0, %c0_i32, %c0_i32_0 : i32, i32, i32
  }
  func.func @transform_2(%arg0: i32, %arg1: i32) -> (i32, i32) {
    %c0_i32 = arith.constant 0 : i32
    %c0_i32_0 = arith.constant 0 : i32
    %c0_i32_1 = arith.constant 0 : i32
    return %c0_i32, %c0_i32_0 : i32, i32
  }
  func.func @transform_3(%arg0: i32, %arg1: i32) -> (i32, i32) {
    %c0_i32 = arith.constant 0 : i32
    %c0_i32_0 = arith.constant 0 : i32
    %c0_i32_1 = arith.constant 0 : i32
    return %c0_i32, %c0_i32_0 : i32, i32
  }
  func.func @transform_4(%arg0: i32, %arg1: i32) -> (i32, i32) {
    %c0_i32 = arith.constant 0 : i32
    %c0_i32_0 = arith.constant 0 : i32
    %c0_i32_1 = arith.constant 0 : i32
    return %c0_i32, %c0_i32_0 : i32, i32
  }
  func.func @transform_5(%arg0: i32, %arg1: i32) -> (i32, i32) {
    %c0_i32 = arith.constant 0 : i32
    %c0_i32_0 = arith.constant 0 : i32
    %c0_i32_1 = arith.constant 0 : i32
    return %c0_i32, %c0_i32_0 : i32, i32
  }
  func.func @transform_6(%arg0: i32, %arg1: i32) -> (i32, i32) {
    %c0_i32 = arith.constant 0 : i32
    %c0_i32_0 = arith.constant 0 : i32
    %c0_i32_1 = arith.constant 0 : i32
    return %c0_i32, %c0_i32_0 : i32, i32
  }
  func.func @transform_7(%arg0: i32, %arg1: i32) -> (i32, i32, i32) {
    %c0_i32 = arith.constant 0 : i32
    %c0_i32_0 = arith.constant 0 : i32
    return %arg0, %arg1, %c0_i32 : i32, i32, i32
  }
}

</mosaic_0001>

<llo_original>
// kernel: tpu_custom_call.1
$region0: #{tpu_custom_call.1}
  #allocation0 [shape = 'u32[]', space=smem, size = 0x4, offset = 0x4, fixed_abs, tag = 'smem constant byte address 0x4 - core index']
  #allocation1 [shape = 'u32[144,128]{1,0:T(1,128)}', space=vmem, size = 0x12000, scoped, tag = 'internal scratch']
  #allocation2 [shape = 'f32[2,8,128]{2,1,0:T(8,128)}', space=vmem, size = 0x2000, scoped, tag = 'scratch operand']
  #allocation3 [shape = 'f32[2,8,128]{2,1,0:T(8,128)}', space=vmem, size = 0x2000, scoped, tag = 'scratch operand']
  #allocation4 [shape = 'f32[32,128]{1,0:T(8,128)}', space=vmem, size = 0x4000, scoped, tag = 'scratch operand']
  %s0 = inlined_call_operand.hbm [shape: f32[2,16,128], index: 0, kind: input, shape index: {}]
  %s1 = inlined_call_operand.hbm [shape: f32[2,8,128], index: 1, kind: input, shape index: {}]
  %s2 = inlined_call_operand.hbm [shape: f32[128,128], index: 2, kind: input, shape index: {}]
  %s3 = inlined_call_operand.hbm [shape: f32[128,128], index: 3, kind: input, shape index: {}]
  %s4 = inlined_call_operand.hbm [shape: f32[128,128], index: 4, kind: input, shape index: {}]
  %s5 = inlined_call_operand.hbm [shape: f32[128,128], index: 5, kind: input, shape index: {}]
  %s6 = inlined_call_operand.vmem [shape: f32[1,128], index: 6, kind: input, shape index: {}]
  %s7 = inlined_call_operand.hbm [shape: f32[2,16,128], index: 7, kind: output, shape index: {}]
  %s8 = sld [smem:[#allocation0]]
  $region66: #{tpu_custom_call.1} parent=0
    _
  %s10 = ssub.s32 1, %s8
  %s11 = scalar_select 0, %s10, %s8
  $region1: #{tpu_custom_call.1} parent=0
    #allocation5 [shape = 'u8[16384]{0}', space=vmem, size = 0x4000, scoped, tag = 'input window, operand 0, single buffered']
    #allocation6 [shape = 's32[1]{0}', space=sflag, size = 0x4, scoped, tag = 'scoped memory for tpu_custom_call.1']
    #allocation7 [shape = 's32[1]{0}', space=sflag, size = 0x4, scoped, tag = 'scoped memory for tpu_custom_call.1']
    #allocation8 [shape = 'u8[8192]{0}', space=vmem, size = 0x2000, scoped, tag = 'input window, operand 1, single buffered']
    #allocation9 [shape = 's32[1]{0}', space=sflag, size = 0x4, scoped, tag = 'scoped memory for tpu_custom_call.1']
    #allocation10 [shape = 'u8[65536]{0}', space=vmem, size = 0x10000, scoped, tag = 'input window, operand 2, single buffered']
    #allocation11 [shape = 'u8[65536]{0}', space=vmem, size = 0x10000, scoped, tag = 'input window, operand 3, single buffered']
    #allocation12 [shape = 's32[1]{0}', space=sflag, size = 0x4, scoped, tag = 'scoped memory for tpu_custom_call.1']
    #allocation13 [shape = 'u8[65536]{0}', space=vmem, size = 0x10000, scoped, tag = 'input window, operand 4, single buffered']
    #allocation14 [shape = 'u8[65536]{0}', space=vmem, size = 0x10000, scoped, tag = 'input window, operand 5, single buffered']
    #allocation15 [shape = 's32[1]{0}', space=sflag, size = 0x4, scoped, tag = 'scoped memory for tpu_custom_call.1']
    #allocation16 [shape = 'u8[16384]{0}', space=vmem, size = 0x4000, scoped, tag = 'output window, operand 0, single buffered']
    %12 = vsyncpa [#allocation6], 0
    %13 = vsyncpa [#allocation9], 0
    %14 = vsyncpa [#allocation12], 0
    %15 = vsyncpa [#allocation15], 0
    %16 = vsyncpa [#allocation7], 0
    // Predicated region
    $region2: #{tpu_custom_call.1} parent=1 // pred_check
      _
    $region3: #{tpu_custom_call.1} parent=1 // pred_check_branch
      %18 = sbr.rel (0) target = $region5
    $region4: #{tpu_custom_call.1} parent=1 // pred_region
      %s20 = ssub.s32 512, 512
      %21 = vsyncadd [#allocation6], %s20
      %s22 = sshll.u32 [#allocation5], 4
      %s23 = int_to_ptr.vmem [resolvable:$true] %s22
      %28 = dma.hbm_to_vmem [thread:$0]  %s0, 512, %s23, [#allocation6], 128, 128, 8
    $region5: #{tpu_custom_call.1} parent=1 // pred_fallthru
      _
    // Predicated region
    $region6: #{tpu_custom_call.1} parent=1 // pred_check
      _
    $region7: #{tpu_custom_call.1} parent=1 // pred_check_branch
      %30 = sbr.rel (0) target = $region9
    $region8: #{tpu_custom_call.1} parent=1 // pred_region
      %s32 = ssub.s32 256, 256
      %33 = vsyncadd [#allocation9], %s32
      %s34 = sshll.u32 [#allocation8], 4
      %s35 = int_to_ptr.vmem [resolvable:$true] %s34
      %40 = dma.hbm_to_vmem [thread:$0]  %s1, 256, %s35, [#allocation9], 128, 128, 8
    $region9: #{tpu_custom_call.1} parent=1 // pred_fallthru
      _
    // Predicated region
    $region10: #{tpu_custom_call.1} parent=1 // pred_check
      _
    $region11: #{tpu_custom_call.1} parent=1 // pred_check_branch
      %42 = sbr.rel (0) target = $region13
    $region12: #{tpu_custom_call.1} parent=1 // pred_region
      %s44 = ssub.s32 2048, 2048
      %45 = vsyncadd [#allocation9], %s44
      %s46 = sshll.u32 [#allocation10], 4
      %s47 = int_to_ptr.vmem [resolvable:$true] %s46
      %52 = dma.hbm_to_vmem [thread:$0]  %s2, 2048, %s47, [#allocation9], 128, 128, 8
    $region13: #{tpu_custom_call.1} parent=1 // pred_fallthru
      _
    // Predicated region
    $region14: #{tpu_custom_call.1} parent=1 // pred_check
      _
    $region15: #{tpu_custom_call.1} parent=1 // pred_check_branch
      %54 = sbr.rel (0) target = $region17
    $region16: #{tpu_custom_call.1} parent=1 // pred_region
      %s56 = ssub.s32 2048, 2048
      %57 = vsyncadd [#allocation12], %s56
      %s58 = sshll.u32 [#allocation11], 4
      %s59 = int_to_ptr.vmem [resolvable:$true] %s58
      %64 = dma.hbm_to_vmem [thread:$0]  %s3, 2048, %s59, [#allocation12], 128, 128, 8
    $region17: #{tpu_custom_call.1} parent=1 // pred_fallthru
      _
    // Predicated region
    $region18: #{tpu_custom_call.1} parent=1 // pred_check
      _
    $region19: #{tpu_custom_call.1} parent=1 // pred_check_branch
      %66 = sbr.rel (0) target = $region21
    $region20: #{tpu_custom_call.1} parent=1 // pred_region
      %s68 = ssub.s32 2048, 2048
      %69 = vsyncadd [#allocation12], %s68
      %s70 = sshll.u32 [#allocation13], 4
      %s71 = int_to_ptr.vmem [resolvable:$true] %s70
      %76 = dma.hbm_to_vmem [thread:$0]  %s4, 2048, %s71, [#allocation12], 128, 128, 8
    $region21: #{tpu_custom_call.1} parent=1 // pred_fallthru
      _
    // Predicated region
    $region22: #{tpu_custom_call.1} parent=1 // pred_check
      _
    $region23: #{tpu_custom_call.1} parent=1 // pred_check_branch
      %78 = sbr.rel (0) target = $region25
    $region24: #{tpu_custom_call.1} parent=1 // pred_region
      %s80 = ssub.s32 2048, 2048
      %81 = vsyncadd [#allocation15], %s80
      %s82 = sshll.u32 [#allocation14], 4
      %s83 = int_to_ptr.vmem [resolvable:$true] %s82
      %88 = dma.hbm_to_vmem [thread:$0]  %s5, 2048, %s83, [#allocation15], 128, 128, 8
    $region25: #{tpu_custom_call.1} parent=1 // pred_fallthru
      _
    // Predicated region
    $region26: #{tpu_custom_call.1} parent=1 // pred_check
      _
    $region27: #{tpu_custom_call.1} parent=1 // pred_check_branch
      %90 = sbr.rel (0) target = $region29
    $region28: #{tpu_custom_call.1} parent=1 // pred_region
      _
    $region29: #{tpu_custom_call.1} parent=1 // pred_fallthru
      _
    // Predicated region
    $region30: #{tpu_custom_call.1} parent=1 // pred_check
      _
    $region31: #{tpu_custom_call.1} parent=1 // pred_check_branch
      %92 = sbr.rel (0) target = $region33
    $region32: #{tpu_custom_call.1} parent=1 // pred_region
      %93 = dma.done [#allocation6], 512
    $region33: #{tpu_custom_call.1} parent=1 // pred_fallthru
      _
    // Predicated region
    $region34: #{tpu_custom_call.1} parent=1 // pred_check
      _
    $region35: #{tpu_custom_call.1} parent=1 // pred_check_branch
      %95 = sbr.rel (0) target = $region37
    $region36: #{tpu_custom_call.1} parent=1 // pred_region
      %96 = dma.done [#allocation9], 256
    $region37: #{tpu_custom_call.1} parent=1 // pred_fallthru
      _
    // Predicated region
    $region38: #{tpu_custom_call.1} parent=1 // pred_check
      _
    $region39: #{tpu_custom_call.1} parent=1 // pred_check_branch
      %98 = sbr.rel (0) target = $region41
    $region40: #{tpu_custom_call.1} parent=1 // pred_region
      %99 = dma.done [#allocation9], 2048
    $region41: #{tpu_custom_call.1} parent=1 // pred_fallthru
      _
    // Predicated region
    $region42: #{tpu_custom_call.1} parent=1 // pred_check
      _
    $region43: #{tpu_custom_call.1} parent=1 // pred_check_branch
      %101 = sbr.rel (0) target = $region45
    $region44: #{tpu_custom_call.1} parent=1 // pred_region
      %102 = dma.done [#allocation12], 2048
    $region45: #{tpu_custom_call.1} parent=1 // pred_fallthru
      _
    // Predicated region
    $region46: #{tpu_custom_call.1} parent=1 // pred_check
      _
    $region47: #{tpu_custom_call.1} parent=1 // pred_check_branch
      %104 = sbr.rel (0) target = $region49
    $region48: #{tpu_custom_call.1} parent=1 // pred_region
      %105 = dma.done [#allocation12], 2048
    $region49: #{tpu_custom_call.1} parent=1 // pred_fallthru
      _
    // Predicated region
    $region50: #{tpu_custom_call.1} parent=1 // pred_check
      _
    $region51: #{tpu_custom_call.1} parent=1 // pred_check_branch
      %107 = sbr.rel (0) target = $region53
    $region52: #{tpu_custom_call.1} parent=1 // pred_region
      %108 = dma.done [#allocation15], 2048
    $region53: #{tpu_custom_call.1} parent=1 // pred_fallthru
      _
    %p109 = scmp.eq.s32.totalorder 0, 0
    // Predicated region
    $region54: #{tpu_custom_call.1} parent=1 // pred_check
      %p110 = pneg %p109
    $region55: #{tpu_custom_call.1} parent=1 // pred_check_branch
      %112 = sbr.rel (%p110) target = $region57
    $region56: #{tpu_custom_call.1} parent=1 // pred_region
      %v113 = vld [vmem:[#allocation8] sm:$0xff]
      %v114 = vld [vmem:[#allocation8 + $0x8] sm:$0xff]
      %v115 = vld [vmem:[#allocation11] sm:$0xff]
      %v116 = vld [vmem:[#allocation11 + $0x8] sm:$0xff]
      %v117 = vld [vmem:[#allocation11 + $0x10] sm:$0xff]
      %v118 = vld [vmem:[#allocation11 + $0x18] sm:$0xff]
      %v119 = vld [vmem:[#allocation11 + $0x20] sm:$0xff]
      %v120 = vld [vmem:[#allocation11 + $0x28] sm:$0xff]
      %v121 = vld [vmem:[#allocation11 + $0x30] sm:$0xff]
      %v122 = vld [vmem:[#allocation11 + $0x38] sm:$0xff]
      %v123 = vld [vmem:[#allocation11 + $0x40] sm:$0xff]
      %v124 = vld [vmem:[#allocation11 + $0x48] sm:$0xff]
      %v125 = vld [vmem:[#allocation11 + $0x50] sm:$0xff]
      %v126 = vld [vmem:[#allocation11 + $0x58] sm:$0xff]
      %v127 = vld [vmem:[#allocation11 + $0x60] sm:$0xff]
      %v128 = vld [vmem:[#allocation11 + $0x68] sm:$0xff]
      %v129 = vld [vmem:[#allocation11 + $0x70] sm:$0xff]
      %v130 = vld [vmem:[#allocation11 + $0x78] sm:$0xff]
      %131 = vmatprep.subr.mxu0 0.0
      %132 = vmatpush1.msra.mxu0 %v115
      %133 = vmatprep.subr.mxu0 0.0
      %134 = vmatpush1.msra.mxu0 %v116
      %135 = vmatprep.subr.mxu0 0.0
      %136 = vmatpush1.msra.mxu0 %v117
      %137 = vmatprep.subr.mxu0 0.0
      %138 = vmatpush1.msra.mxu0 %v118
      %139 = vmatprep.subr.mxu0 0.0
      %140 = vmatpush1.msra.mxu0 %v119
      %141 = vmatprep.subr.mxu0 0.0
      %142 = vmatpush1.msra.mxu0 %v120
      %143 = vmatprep.subr.mxu0 0.0
      %144 = vmatpush1.msra.mxu0 %v121
      %145 = vmatprep.subr.mxu0 0.0
      %146 = vmatpush1.msra.mxu0 %v122
      %147 = vmatprep.subr.mxu0 0.0
      %148 = vmatpush1.msra.mxu0 %v123
      %149 = vmatprep.subr.mxu0 0.0
      %150 = vmatpush1.msra.mxu0 %v124
      %151 = vmatprep.subr.mxu0 0.0
      %152 = vmatpush1.msra.mxu0 %v125
      %153 = vmatprep.subr.mxu0 0.0
      %154 = vmatpush1.msra.mxu0 %v126
      %155 = vmatprep.subr.mxu0 0.0
      %156 = vmatpush1.msra.mxu0 %v127
      %157 = vmatprep.subr.mxu0 0.0
      %158 = vmatpush1.msra.mxu0 %v128
      %159 = vmatprep.subr.mxu0 0.0
      %160 = vmatpush1.msra.mxu0 %v129
      %161 = vmatprep.subr.mxu0 0.0
      %162 = vmatpush1.msra.mxu0 %v130
      %163 = vmatprep.subr.mxu0 0.0
      %164 = vmatpush1.msra.mxu0 0.0
      %165 = vmatprep.subr.mxu0 0.0
      %166 = vmatpush1.msra.mxu0 0.0
      %167 = vmatprep.subr.mxu0 0.0
      %168 = vmatpush1.msra.mxu0 0.0
      %169 = vmatprep.subr.mxu0 0.0
      %170 = vmatpush1.msra.mxu0 0.0
      %171 = vmatprep.subr.mxu0 0.0
      %172 = vmatpush1.msra.mxu0 0.0
      %173 = vmatprep.subr.mxu0 0.0
      %174 = vmatpush1.msra.mxu0 0.0
      %175 = vmatprep.subr.mxu0 0.0
      %176 = vmatpush1.msra.mxu0 0.0
      %177 = vmatprep.subr.mxu0 0.0
      %178 = vmatpush1.msra.mxu0 0.0
      %179 = vmatprep.subr.mxu0 0.0
      %180 = vmatpush1.msra.mxu0 0.0
      %181 = vmatprep.subr.mxu0 0.0
      %182 = vmatpush1.msra.mxu0 0.0
      %183 = vmatprep.subr.mxu0 0.0
      %184 = vmatpush1.msra.mxu0 0.0
      %185 = vmatprep.subr.mxu0 0.0
      %186 = vmatpush1.msra.mxu0 0.0
      %187 = vmatprep.subr.mxu0 0.0
      %188 = vmatpush1.msra.mxu0 0.0
      %189 = vmatprep.subr.mxu0 0.0
      %190 = vmatpush1.msra.mxu0 0.0
      %191 = vmatprep.subr.mxu0 0.0
      %192 = vmatpush1.msra.mxu0 0.0
      %193 = vmatprep.subr.mxu0 0.0
      %194 = vmatpush1.msra.mxu0 0.0
      %195 = vmatprep.mubr.f32.mxu0 0.0
      %196 = vmatmul.mubr.f32.gmra.mrb[0].mxu0 %v113
      %v197 = vpop.f32.mrb[0].mxu0
      %v198 = vadd.f32 0.0, %v197
      %v199 = vpop.f32.mrb[0].mxu0
      %200 = vmatprep.mubr.f32.mxu0 0.0
      %201 = vmatmul.mubr.f32.gmra.mrb[0].mxu0 %v114
      %v202 = vpop.f32.mrb[0].mxu0
      %v203 = vadd.f32 0.0, %v202
      %v204 = vpop.f32.mrb[0].mxu0
      %205 = vdwg.mxu0
      %v206 = vld [vmem:[#allocation13] sm:$0xff]
      %v207 = vld [vmem:[#allocation13 + $0x8] sm:$0xff]
      %v208 = vld [vmem:[#allocation13 + $0x10] sm:$0xff]
      %v209 = vld [vmem:[#allocation13 + $0x18] sm:$0xff]
      %v210 = vld [vmem:[#allocation13 + $0x20] sm:$0xff]
      %v211 = vld [vmem:[#allocation13 + $0x28] sm:$0xff]
      %v212 = vld [vmem:[#allocation13 + $0x30] sm:$0xff]
      %v213 = vld [vmem:[#allocation13 + $0x38] sm:$0xff]
      %v214 = vld [vmem:[#allocation13 + $0x40] sm:$0xff]
      %v215 = vld [vmem:[#allocation13 + $0x48] sm:$0xff]
      %v216 = vld [vmem:[#allocation13 + $0x50] sm:$0xff]
      %v217 = vld [vmem:[#allocation13 + $0x58] sm:$0xff]
      %v218 = vld [vmem:[#allocation13 + $0x60] sm:$0xff]
      %v219 = vld [vmem:[#allocation13 + $0x68] sm:$0xff]
      %v220 = vld [vmem:[#allocation13 + $0x70] sm:$0xff]
      %v221 = vld [vmem:[#allocation13 + $0x78] sm:$0xff]
      %222 = vmatprep.subr.mxu0 0.0
      %223 = vmatpush1.msra.mxu0 %v206
      %224 = vmatprep.subr.mxu0 0.0
      %225 = vmatpush1.msra.mxu0 %v207
      %226 = vmatprep.subr.mxu0 0.0
      %227 = vmatpush1.msra.mxu0 %v208
      %228 = vmatprep.subr.mxu0 0.0
      %229 = vmatpush1.msra.mxu0 %v209
      %230 = vmatprep.subr.mxu0 0.0
      %231 = vmatpush1.msra.mxu0 %v210
      %232 = vmatprep.subr.mxu0 0.0
      %233 = vmatpush1.msra.mxu0 %v211
      %234 = vmatprep.subr.mxu0 0.0
      %235 = vmatpush1.msra.mxu0 %v212
      %236 = vmatprep.subr.mxu0 0.0
      %237 = vmatpush1.msra.mxu0 %v213
      %238 = vmatprep.subr.mxu0 0.0
      %239 = vmatpush1.msra.mxu0 %v214
      %240 = vmatprep.subr.mxu0 0.0
      %241 = vmatpush1.msra.mxu0 %v215
      %242 = vmatprep.subr.mxu0 0.0
      %243 = vmatpush1.msra.mxu0 %v216
      %244 = vmatprep.subr.mxu0 0.0
      %245 = vmatpush1.msra.mxu0 %v217
      %246 = vmatprep.subr.mxu0 0.0
      %247 = vmatpush1.msra.mxu0 %v218
      %248 = vmatprep.subr.mxu0 0.0
      %249 = vmatpush1.msra.mxu0 %v219
      %250 = vmatprep.subr.mxu0 0.0
      %251 = vmatpush1.msra.mxu0 %v220
      %252 = vmatprep.subr.mxu0 0.0
      %253 = vmatpush1.msra.mxu0 %v221
      %254 = vmatprep.subr.mxu0 0.0
      %255 = vmatpush1.msra.mxu0 0.0
      %256 = vmatprep.subr.mxu0 0.0
      %257 = vmatpush1.msra.mxu0 0.0
      %258 = vmatprep.subr.mxu0 0.0
      %259 = vmatpush1.msra.mxu0 0.0
      %260 = vmatprep.subr.mxu0 0.0
      %261 = vmatpush1.msra.mxu0 0.0
      %262 = vmatprep.subr.mxu0 0.0
      %263 = vmatpush1.msra.mxu0 0.0
      %264 = vmatprep.subr.mxu0 0.0
      %265 = vmatpush1.msra.mxu0 0.0
      %266 = vmatprep.subr.mxu0 0.0
      %267 = vmatpush1.msra.mxu0 0.0
      %268 = vmatprep.subr.mxu0 0.0
      %269 = vmatpush1.msra.mxu0 0.0
      %270 = vmatprep.subr.mxu0 0.0
      %271 = vmatpush1.msra.mxu0 0.0
      %272 = vmatprep.subr.mxu0 0.0
      %273 = vmatpush1.msra.mxu0 0.0
      %274 = vmatprep.subr.mxu0 0.0
      %275 = vmatpush1.msra.mxu0 0.0
      %276 = vmatprep.subr.mxu0 0.0
      %277 = vmatpush1.msra.mxu0 0.0
      %278 = vmatprep.subr.mxu0 0.0
      %279 = vmatpush1.msra.mxu0 0.0
      %280 = vmatprep.subr.mxu0 0.0
      %281 = vmatpush1.msra.mxu0 0.0
      %282 = vmatprep.subr.mxu0 0.0
      %283 = vmatpush1.msra.mxu0 0.0
      %284 = vmatprep.subr.mxu0 0.0
      %285 = vmatpush1.msra.mxu0 0.0
      %286 = vmatprep.mubr.f32.mxu0 0.0
      %287 = vmatmul.mubr.f32.gmra.mrb[0].mxu0 %v113
      %v288 = vpop.f32.mrb[0].mxu0
      %v289 = vadd.f32 0.0, %v288
      %v290 = vpop.f32.mrb[0].mxu0
      %291 = vmatprep.mubr.f32.mxu0 0.0
      %292 = vmatmul.mubr.f32.gmra.mrb[0].mxu0 %v114
      %v293 = vpop.f32.mrb[0].mxu0
      %v294 = vadd.f32 0.0, %v293
      %v295 = vpop.f32.mrb[0].mxu0
      %296 = vdwg.mxu0
      %297 = vst [vmem:[#allocation2] sm:$0xff] %v198
      %298 = vst [vmem:[#allocation2 + $0x8] sm:$0xff] %v203
      %299 = vst [vmem:[#allocation3] sm:$0xff] %v289
      %300 = vst [vmem:[#allocation3 + $0x8] sm:$0xff] %v294
    $region57: #{tpu_custom_call.1} parent=1 // pred_fallthru
      _
    %v301 = vld [vmem:[#allocation5] sm:$0xff]
    %v302 = vld [vmem:[#allocation5 + $0x8] sm:$0xff]
    %v303 = vld [vmem:[#allocation5 + $0x10] sm:$0xff]
    %v304 = vld [vmem:[#allocation5 + $0x18] sm:$0xff]
    %v305 = vld [vmem:[#allocation10] sm:$0xff]
    %v306 = vld [vmem:[#allocation10 + $0x8] sm:$0xff]
    %v307 = vld [vmem:[#allocation10 + $0x10] sm:$0xff]
    %v308 = vld [vmem:[#allocation10 + $0x18] sm:$0xff]
    %v309 = vld [vmem:[#allocation10 + $0x20] sm:$0xff]
    %v310 = vld [vmem:[#allocation10 + $0x28] sm:$0xff]
    %v311 = vld [vmem:[#allocation10 + $0x30] sm:$0xff]
    %v312 = vld [vmem:[#allocation10 + $0x38] sm:$0xff]
    %v313 = vld [vmem:[#allocation10 + $0x40] sm:$0xff]
    %v314 = vld [vmem:[#allocation10 + $0x48] sm:$0xff]
    %v315 = vld [vmem:[#allocation10 + $0x50] sm:$0xff]
    %v316 = vld [vmem:[#allocation10 + $0x58] sm:$0xff]
    %v317 = vld [vmem:[#allocation10 + $0x60] sm:$0xff]
    %v318 = vld [vmem:[#allocation10 + $0x68] sm:$0xff]
    %v319 = vld [vmem:[#allocation10 + $0x70] sm:$0xff]
    %v320 = vld [vmem:[#allocation10 + $0x78] sm:$0xff]
    %321 = vmatprep.subr.mxu0 0.0
    %322 = vmatpush1.msra.mxu0 %v305
    %323 = vmatprep.subr.mxu0 0.0
    %324 = vmatpush1.msra.mxu0 %v306
    %325 = vmatprep.subr.mxu0 0.0
    %326 = vmatpush1.msra.mxu0 %v307
    %327 = vmatprep.subr.mxu0 0.0
    %328 = vmatpush1.msra.mxu0 %v308
    %329 = vmatprep.subr.mxu0 0.0
    %330 = vmatpush1.msra.mxu0 %v309
    %331 = vmatprep.subr.mxu0 0.0
    %332 = vmatpush1.msra.mxu0 %v310
    %333 = vmatprep.subr.mxu0 0.0
    %334 = vmatpush1.msra.mxu0 %v311
    %335 = vmatprep.subr.mxu0 0.0
    %336 = vmatpush1.msra.mxu0 %v312
    %337 = vmatprep.subr.mxu0 0.0
    %338 = vmatpush1.msra.mxu0 %v313
    %339 = vmatprep.subr.mxu0 0.0
    %340 = vmatpush1.msra.mxu0 %v314
    %341 = vmatprep.subr.mxu0 0.0
    %342 = vmatpush1.msra.mxu0 %v315
    %343 = vmatprep.subr.mxu0 0.0
    %344 = vmatpush1.msra.mxu0 %v316
    %345 = vmatprep.subr.mxu0 0.0
    %346 = vmatpush1.msra.mxu0 %v317
    %347 = vmatprep.subr.mxu0 0.0
    %348 = vmatpush1.msra.mxu0 %v318
    %349 = vmatprep.subr.mxu0 0.0
    %350 = vmatpush1.msra.mxu0 %v319
    %351 = vmatprep.subr.mxu0 0.0
    %352 = vmatpush1.msra.mxu0 %v320
    %353 = vmatprep.subr.mxu0 0.0
    %354 = vmatpush1.msra.mxu0 0.0
    %355 = vmatprep.subr.mxu0 0.0
    %356 = vmatpush1.msra.mxu0 0.0
    %357 = vmatprep.subr.mxu0 0.0
    %358 = vmatpush1.msra.mxu0 0.0
    %359 = vmatprep.subr.mxu0 0.0
    %360 = vmatpush1.msra.mxu0 0.0
    %361 = vmatprep.subr.mxu0 0.0
    %362 = vmatpush1.msra.mxu0 0.0
    %363 = vmatprep.subr.mxu0 0.0
    %364 = vmatpush1.msra.mxu0 0.0
    %365 = vmatprep.subr.mxu0 0.0
    %366 = vmatpush1.msra.mxu0 0.0
    %367 = vmatprep.subr.mxu0 0.0
    %368 = vmatpush1.msra.mxu0 0.0
    %369 = vmatprep.subr.mxu0 0.0
    %370 = vmatpush1.msra.mxu0 0.0
    %371 = vmatprep.subr.mxu0 0.0
    %372 = vmatpush1.msra.mxu0 0.0
    %373 = vmatprep.subr.mxu0 0.0
    %374 = vmatpush1.msra.mxu0 0.0
    %375 = vmatprep.subr.mxu0 0.0
    %376 = vmatpush1.msra.mxu0 0.0
    %377 = vmatprep.subr.mxu0 0.0
    %378 = vmatpush1.msra.mxu0 0.0
    %379 = vmatprep.subr.mxu0 0.0
    %380 = vmatpush1.msra.mxu0 0.0
    %381 = vmatprep.subr.mxu0 0.0
    %382 = vmatpush1.msra.mxu0 0.0
    %383 = vmatprep.subr.mxu0 0.0
    %384 = vmatpush1.msra.mxu0 0.0
    %385 = vmatprep.mubr.f32.mxu0 0.0
    %386 = vmatmul.mubr.f32.gmra.mrb[0].mxu0 %v301
    %v387 = vpop.f32.mrb[0].mxu0
    %v388 = vadd.f32 0.0, %v387
    %v389 = vpop.f32.mrb[0].mxu0
    %390 = vmatprep.mubr.f32.mxu0 0.0
    %391 = vmatmul.mubr.f32.gmra.mrb[0].mxu0 %v302
    %v392 = vpop.f32.mrb[0].mxu0
    %v393 = vadd.f32 0.0, %v392
    %v394 = vpop.f32.mrb[0].mxu0
    %395 = vmatprep.mubr.f32.mxu0 0.0
    %396 = vmatmul.mubr.f32.gmra.mrb[0].mxu0 %v303
    %v397 = vpop.f32.mrb[0].mxu0
    %v398 = vadd.f32 0.0, %v397
    %v399 = vpop.f32.mrb[0].mxu0
    %400 = vmatprep.mubr.f32.mxu0 0.0
    %401 = vmatmul.mubr.f32.gmra.mrb[0].mxu0 %v304
    %v402 = vpop.f32.mrb[0].mxu0
    %v403 = vadd.f32 0.0, %v402
    %v404 = vpop.f32.mrb[0].mxu0
    %405 = vdwg.mxu0
    %v406 = vmul.f32 %v388, 0.17677669
    %v407 = vmul.f32 %v393, 0.17677669
    %v408 = vmul.f32 %v398, 0.17677669
    %v409 = vmul.f32 %v403, 0.17677669
    %v410 = vld [vmem:[#allocation2] sm:$0xff]
    %v411 = vld [vmem:[#allocation3] sm:$0xff]
    %vm412 = vcmask 261120
    %v414 = vsel %vm412, %v406, 0
    %v417 = vsel %vm412, %v407, 0
    %v420 = vsel %vm412, %v410, 0
    %422 = vmatprep.subr.mxu0 0.0
    %423 = vmatpush1.xpose.msra.mxu0 %v420
    %424 = vmatprep.subr.mxu0 0.0
    %425 = vmatpush1.xpose.msra.mxu0 0.0
    %426 = vmatprep.subr.mxu0 0.0
    %427 = vmatpush1.xpose.msra.mxu0 0.0
    %428 = vmatprep.subr.mxu0 0.0
    %429 = vmatpush1.xpose.msra.mxu0 0.0
    %430 = vmatprep.subr.mxu0 0.0
    %431 = vmatpush1.xpose.msra.mxu0 0.0
    %432 = vmatprep.subr.mxu0 0.0
    %433 = vmatpush1.xpose.msra.mxu0 0.0
    %434 = vmatprep.subr.mxu0 0.0
    %435 = vmatpush1.xpose.msra.mxu0 0.0
    %436 = vmatprep.subr.mxu0 0.0
    %437 = vmatpush1.xpose.msra.mxu0 0.0
    %438 = vmatprep.subr.mxu0 0.0
    %439 = vmatpush1.xpose.msra.mxu0 0.0
    %440 = vmatprep.subr.mxu0 0.0
    %441 = vmatpush1.xpose.msra.mxu0 0.0
    %442 = vmatprep.subr.mxu0 0.0
    %443 = vmatpush1.xpose.msra.mxu0 0.0
    %444 = vmatprep.subr.mxu0 0.0
    %445 = vmatpush1.xpose.msra.mxu0 0.0
    %446 = vmatprep.subr.mxu0 0.0
    %447 = vmatpush1.xpose.msra.mxu0 0.0
    %448 = vmatprep.subr.mxu0 0.0
    %449 = vmatpush1.xpose.msra.mxu0 0.0
    %450 = vmatprep.subr.mxu0 0.0
    %451 = vmatpush1.xpose.msra.mxu0 0.0
    %452 = vmatprep.subr.mxu0 0.0
    %453 = vmatpush1.xpose.msra.mxu0 0.0
    %454 = vmatprep.subr.mxu0 0.0
    %455 = vmatpush1.xpose.msra.mxu0 0.0
    %456 = vmatprep.subr.mxu0 0.0
    %457 = vmatpush1.xpose.msra.mxu0 0.0
    %458 = vmatprep.subr.mxu0 0.0
    %459 = vmatpush1.xpose.msra.mxu0 0.0
    %460 = vmatprep.subr.mxu0 0.0
    %461 = vmatpush1.xpose.msra.mxu0 0.0
    %462 = vmatprep.subr.mxu0 0.0
    %463 = vmatpush1.xpose.msra.mxu0 0.0
    %464 = vmatprep.subr.mxu0 0.0
    %465 = vmatpush1.xpose.msra.mxu0 0.0
    %466 = vmatprep.subr.mxu0 0.0
    %467 = vmatpush1.xpose.msra.mxu0 0.0
    %468 = vmatprep.subr.mxu0 0.0
    %469 = vmatpush1.xpose.msra.mxu0 0.0
    %470 = vmatprep.subr.mxu0 0.0
    %471 = vmatpush1.xpose.msra.mxu0 0.0
    %472 = vmatprep.subr.mxu0 0.0
    %473 = vmatpush1.xpose.msra.mxu0 0.0
    %474 = vmatprep.subr.mxu0 0.0
    %475 = vmatpush1.xpose.msra.mxu0 0.0
    %476 = vmatprep.subr.mxu0 0.0
    %477 = vmatpush1.xpose.msra.mxu0 0.0
    %478 = vmatprep.subr.mxu0 0.0
    %479 = vmatpush1.xpose.msra.mxu0 0.0
    %480 = vmatprep.subr.mxu0 0.0
    %481 = vmatpush1.xpose.msra.mxu0 0.0
    %482 = vmatprep.subr.mxu0 0.0
    %483 = vmatpush1.xpose.msra.mxu0 0.0
    %484 = vmatprep.subr.mxu0 0.0
    %485 = vmatpush1.xpose.msra.mxu0 0.0
    %486 = vmatprep.mubr.f32.mxu0 0.0
    %487 = vmatmul.mubr.f32.gmra.mrb[0].mxu0 %v414
    %v488 = vpop.f32.mrb[0].mxu0
    %v489 = vadd.f32 0.0, %v488
    %v490 = vpop.f32.mrb[0].mxu0
    %491 = vmatprep.mubr.f32.mxu0 0.0
    %492 = vmatmul.mubr.f32.gmra.mrb[0].mxu0 %v417
    %v493 = vpop.f32.mrb[0].mxu0
    %v494 = vadd.f32 0.0, %v493
    %v495 = vpop.f32.mrb[0].mxu0
    %496 = vdwg.mxu0
    %vm497 = vcmask 64512
    %v498 = vsel %vm497, %v489, -inf
    %499 = vmax.xlane.f32.xlu0 %v498
    %v500 = vpop.xlane.xlu0 %499
    %v501 = vsel %vm497, %v494, -inf
    %502 = vmax.xlane.f32.xlu0 %v501
    %v503 = vpop.xlane.xlu0 %502
    %v504 = vsub.f32 %v489, %v500
    %v505 = vsub.f32 %v494, %v503
    %v506 = vmul.f32 %v504, 1.442695
    %v507 = vpow.pop %v506
    %v508 = vmul.f32 %v505, 1.442695
    %v509 = vpow.pop %v508
    %v510 = vsel %vm497, %v507, 0.0
    %511 = vadd.xlane.f32.xlu0 %v510
    %v512 = vpop.xlane.xlu0 %511
    %v513 = vsel %vm497, %v509, 0.0
    %514 = vadd.xlane.f32.xlu0 %v513
    %v515 = vpop.xlane.xlu0 %514
    %v516 = vrcp.pop %v512
    %v517 = vrcp.pop %v515
    %v518 = vmul.f32 %v507, %v516
    %v519 = vmul.f32 %v509, %v517
    %v521 = vsel %vm497, %v518, 0
    %v524 = vsel %vm497, %v519, 0
    %526 = vmatprep.subr.mxu0 0.0
    %527 = vmatpush1.msra.mxu0 %v411
    %528 = vmatprep.subr.mxu0 0.0
    %529 = vmatpush1.msra.mxu0 0.0
    %530 = vmatprep.subr.mxu0 0.0
    %531 = vmatpush1.msra.mxu0 0.0
    %532 = vmatprep.subr.mxu0 0.0
    %533 = vmatpush1.msra.mxu0 0.0
    %534 = vmatprep.subr.mxu0 0.0
    %535 = vmatpush1.msra.mxu0 0.0
    %536 = vmatprep.subr.mxu0 0.0
    %537 = vmatpush1.msra.mxu0 0.0
    %538 = vmatprep.subr.mxu0 0.0
    %539 = vmatpush1.msra.mxu0 0.0
    %540 = vmatprep.subr.mxu0 0.0
    %541 = vmatpush1.msra.mxu0 0.0
    %542 = vmatprep.subr.mxu0 0.0
    %543 = vmatpush1.msra.mxu0 0.0
    %544 = vmatprep.subr.mxu0 0.0
    %545 = vmatpush1.msra.mxu0 0.0
    %546 = vmatprep.subr.mxu0 0.0
    %547 = vmatpush1.msra.mxu0 0.0
    %548 = vmatprep.subr.mxu0 0.0
    %549 = vmatpush1.msra.mxu0 0.0
    %550 = vmatprep.subr.mxu0 0.0
    %551 = vmatpush1.msra.mxu0 0.0
    %552 = vmatprep.subr.mxu0 0.0
    %553 = vmatpush1.msra.mxu0 0.0
    %554 = vmatprep.subr.mxu0 0.0
    %555 = vmatpush1.msra.mxu0 0.0
    %556 = vmatprep.subr.mxu0 0.0
    %557 = vmatpush1.msra.mxu0 0.0
    %558 = vmatprep.subr.mxu0 0.0
    %559 = vmatpush1.msra.mxu0 0.0
    %560 = vmatprep.subr.mxu0 0.0
    %561 = vmatpush1.msra.mxu0 0.0
    %562 = vmatprep.subr.mxu0 0.0
    %563 = vmatpush1.msra.mxu0 0.0
    %564 = vmatprep.subr.mxu0 0.0
    %565 = vmatpush1.msra.mxu0 0.0
    %566 = vmatprep.subr.mxu0 0.0
    %567 = vmatpush1.msra.mxu0 0.0
    %568 = vmatprep.subr.mxu0 0.0
    %569 = vmatpush1.msra.mxu0 0.0
    %570 = vmatprep.subr.mxu0 0.0
    %571 = vmatpush1.msra.mxu0 0.0
    %572 = vmatprep.subr.mxu0 0.0
    %573 = vmatpush1.msra.mxu0 0.0
    %574 = vmatprep.subr.mxu0 0.0
    %575 = vmatpush1.msra.mxu0 0.0
    %576 = vmatprep.subr.mxu0 0.0
    %577 = vmatpush1.msra.mxu0 0.0
    %578 = vmatprep.subr.mxu0 0.0
    %579 = vmatpush1.msra.mxu0 0.0
    %580 = vmatprep.subr.mxu0 0.0
    %581 = vmatpush1.msra.mxu0 0.0
    %582 = vmatprep.subr.mxu0 0.0
    %583 = vmatpush1.msra.mxu0 0.0
    %584 = vmatprep.subr.mxu0 0.0
    %585 = vmatpush1.msra.mxu0 0.0
    %586 = vmatprep.subr.mxu0 0.0
    %587 = vmatpush1.msra.mxu0 0.0
    %588 = vmatprep.subr.mxu0 0.0
    %589 = vmatpush1.msra.mxu0 0.0
    %590 = vmatprep.mubr.f32.mxu0 0.0
    %591 = vmatmul.mubr.f32.gmra.mrb[0].mxu0 %v521
    %v592 = vpop.f32.mrb[0].mxu0
    %v593 = vadd.f32 0.0, %v592
    %v594 = vpop.f32.mrb[0].mxu0
    %595 = vmatprep.mubr.f32.mxu0 0.0
    %596 = vmatmul.mubr.f32.gmra.mrb[0].mxu0 %v524
    %v597 = vpop.f32.mrb[0].mxu0
    %v598 = vadd.f32 0.0, %v597
    %v599 = vpop.f32.mrb[0].mxu0
    %600 = vdwg.mxu0
    %601 = vst.msk [vmem:[#allocation4] sm:$0xff] %vm412, %v593
    %602 = vst.msk [vmem:[#allocation4 + $0x8] sm:$0xff] %vm412, %v598
    %v603 = vld [vmem:[#allocation2] sm:$0xff]
    %v604 = vld [vmem:[#allocation3] sm:$0xff]
    %605 = vrot.lane.b32.xlu0 %v406, 96
    %v606 = vpop.permute.xlu0 %605
    %607 = vrot.lane.b32.xlu0 %v407, 96
    %v608 = vpop.permute.xlu0 %607
    %610 = vrot.lane.b32.xlu0 %v603, 96
    %v611 = vpop.permute.xlu0 %610
    %v612 = vsel %vm412, %v606, 0
    %v614 = vsel %vm412, %v608, 0
    %v616 = vsel %vm412, %v611, 0
    %618 = vmatprep.subr.mxu0 0.0
    %619 = vmatpush1.xpose.msra.mxu0 %v616
    %620 = vmatprep.subr.mxu0 0.0
    %621 = vmatpush1.xpose.msra.mxu0 0.0
    %622 = vmatprep.subr.mxu0 0.0
    %623 = vmatpush1.xpose.msra.mxu0 0.0
    %624 = vmatprep.subr.mxu0 0.0
    %625 = vmatpush1.xpose.msra.mxu0 0.0
    %626 = vmatprep.subr.mxu0 0.0
    %627 = vmatpush1.xpose.msra.mxu0 0.0
    %628 = vmatprep.subr.mxu0 0.0
    %629 = vmatpush1.xpose.msra.mxu0 0.0
    %630 = vmatprep.subr.mxu0 0.0
    %631 = vmatpush1.xpose.msra.mxu0 0.0
    %632 = vmatprep.subr.mxu0 0.0
    %633 = vmatpush1.xpose.msra.mxu0 0.0
    %634 = vmatprep.subr.mxu0 0.0
    %635 = vmatpush1.xpose.msra.mxu0 0.0
    %636 = vmatprep.subr.mxu0 0.0
    %637 = vmatpush1.xpose.msra.mxu0 0.0
    %638 = vmatprep.subr.mxu0 0.0
    %639 = vmatpush1.xpose.msra.mxu0 0.0
    %640 = vmatprep.subr.mxu0 0.0
    %641 = vmatpush1.xpose.msra.mxu0 0.0
    %642 = vmatprep.subr.mxu0 0.0
    %643 = vmatpush1.xpose.msra.mxu0 0.0
    %644 = vmatprep.subr.mxu0 0.0
    %645 = vmatpush1.xpose.msra.mxu0 0.0
    %646 = vmatprep.subr.mxu0 0.0
    %647 = vmatpush1.xpose.msra.mxu0 0.0
    %648 = vmatprep.subr.mxu0 0.0
    %649 = vmatpush1.xpose.msra.mxu0 0.0
    %650 = vmatprep.subr.mxu0 0.0
    %651 = vmatpush1.xpose.msra.mxu0 0.0
    %652 = vmatprep.subr.mxu0 0.0
    %653 = vmatpush1.xpose.msra.mxu0 0.0
    %654 = vmatprep.subr.mxu0 0.0
    %655 = vmatpush1.xpose.msra.mxu0 0.0
    %656 = vmatprep.subr.mxu0 0.0
    %657 = vmatpush1.xpose.msra.mxu0 0.0
    %658 = vmatprep.subr.mxu0 0.0
    %659 = vmatpush1.xpose.msra.mxu0 0.0
    %660 = vmatprep.subr.mxu0 0.0
    %661 = vmatpush1.xpose.msra.mxu0 0.0
    %662 = vmatprep.subr.mxu0 0.0
    %663 = vmatpush1.xpose.msra.mxu0 0.0
    %664 = vmatprep.subr.mxu0 0.0
    %665 = vmatpush1.xpose.msra.mxu0 0.0
    %666 = vmatprep.subr.mxu0 0.0
    %667 = vmatpush1.xpose.msra.mxu0 0.0
    %668 = vmatprep.subr.mxu0 0.0
    %669 = vmatpush1.xpose.msra.mxu0 0.0
    %670 = vmatprep.subr.mxu0 0.0
    %671 = vmatpush1.xpose.msra.mxu0 0.0
    %672 = vmatprep.subr.mxu0 0.0
    %673 = vmatpush1.xpose.msra.mxu0 0.0
    %674 = vmatprep.subr.mxu0 0.0
    %675 = vmatpush1.xpose.msra.mxu0 0.0
    %676 = vmatprep.subr.mxu0 0.0
    %677 = vmatpush1.xpose.msra.mxu0 0.0
    %678 = vmatprep.subr.mxu0 0.0
    %679 = vmatpush1.xpose.msra.mxu0 0.0
    %680 = vmatprep.subr.mxu0 0.0
    %681 = vmatpush1.xpose.msra.mxu0 0.0
    %682 = vmatprep.mubr.f32.mxu0 0.0
    %683 = vmatmul.mubr.f32.gmra.mrb[0].mxu0 %v612
    %v684 = vpop.f32.mrb[0].mxu0
    %v685 = vadd.f32 0.0, %v684
    %v686 = vpop.f32.mrb[0].mxu0
    %687 = vmatprep.mubr.f32.mxu0 0.0
    %688 = vmatmul.mubr.f32.gmra.mrb[0].mxu0 %v614
    %v689 = vpop.f32.mrb[0].mxu0
    %v690 = vadd.f32 0.0, %v689
    %v691 = vpop.f32.mrb[0].mxu0
    %692 = vdwg.mxu0
    %v693 = vsel %vm497, %v685, -inf
    %694 = vmax.xlane.f32.xlu0 %v693
    %v695 = vpop.xlane.xlu0 %694
    %v696 = vsel %vm497, %v690, -inf
    %697 = vmax.xlane.f32.xlu0 %v696
    %v698 = vpop.xlane.xlu0 %697
    %v699 = vsub.f32 %v685, %v695
    %v700 = vsub.f32 %v690, %v698
    %v701 = vmul.f32 %v699, 1.442695
    %v702 = vpow.pop %v701
    %v703 = vmul.f32 %v700, 1.442695
    %v704 = vpow.pop %v703
    %v705 = vsel %vm497, %v702, 0.0
    %706 = vadd.xlane.f32.xlu0 %v705
    %v707 = vpop.xlane.xlu0 %706
    %v708 = vsel %vm497, %v704, 0.0
    %709 = vadd.xlane.f32.xlu0 %v708
    %v710 = vpop.xlane.xlu0 %709
    %v711 = vrcp.pop %v707
    %v712 = vrcp.pop %v710
    %v713 = vmul.f32 %v702, %v711
    %v714 = vmul.f32 %v704, %v712
    %716 = vrot.lane.b32.xlu0 %v604, 96
    %v717 = vpop.permute.xlu0 %716
    %v720 = vsel %vm497, %v713, 0
    %v723 = vsel %vm497, %v714, 0
    %725 = vmatprep.subr.mxu0 0.0
    %726 = vmatpush1.msra.mxu0 %v717
    %727 = vmatprep.subr.mxu0 0.0
    %728 = vmatpush1.msra.mxu0 0.0
    %729 = vmatprep.subr.mxu0 0.0
    %730 = vmatpush1.msra.mxu0 0.0
    %731 = vmatprep.subr.mxu0 0.0
    %732 = vmatpush1.msra.mxu0 0.0
    %733 = vmatprep.subr.mxu0 0.0
    %734 = vmatpush1.msra.mxu0 0.0
    %735 = vmatprep.subr.mxu0 0.0
    %736 = vmatpush1.msra.mxu0 0.0
    %737 = vmatprep.subr.mxu0 0.0
    %738 = vmatpush1.msra.mxu0 0.0
    %739 = vmatprep.subr.mxu0 0.0
    %740 = vmatpush1.msra.mxu0 0.0
    %741 = vmatprep.subr.mxu0 0.0
    %742 = vmatpush1.msra.mxu0 0.0
    %743 = vmatprep.subr.mxu0 0.0
    %744 = vmatpush1.msra.mxu0 0.0
    %745 = vmatprep.subr.mxu0 0.0
    %746 = vmatpush1.msra.mxu0 0.0
    %747 = vmatprep.subr.mxu0 0.0
    %748 = vmatpush1.msra.mxu0 0.0
    %749 = vmatprep.subr.mxu0 0.0
    %750 = vmatpush1.msra.mxu0 0.0
    %751 = vmatprep.subr.mxu0 0.0
    %752 = vmatpush1.msra.mxu0 0.0
    %753 = vmatprep.subr.mxu0 0.0
    %754 = vmatpush1.msra.mxu0 0.0
    %755 = vmatprep.subr.mxu0 0.0
    %756 = vmatpush1.msra.mxu0 0.0
    %757 = vmatprep.subr.mxu0 0.0
    %758 = vmatpush1.msra.mxu0 0.0
    %759 = vmatprep.subr.mxu0 0.0
    %760 = vmatpush1.msra.mxu0 0.0
    %761 = vmatprep.subr.mxu0 0.0
    %762 = vmatpush1.msra.mxu0 0.0
    %763 = vmatprep.subr.mxu0 0.0
    %764 = vmatpush1.msra.mxu0 0.0
    %765 = vmatprep.subr.mxu0 0.0
    %766 = vmatpush1.msra.mxu0 0.0
    %767 = vmatprep.subr.mxu0 0.0
    %768 = vmatpush1.msra.mxu0 0.0
    %769 = vmatprep.subr.mxu0 0.0
    %770 = vmatpush1.msra.mxu0 0.0
    %771 = vmatprep.subr.mxu0 0.0
    %772 = vmatpush1.msra.mxu0 0.0
    %773 = vmatprep.subr.mxu0 0.0
    %774 = vmatpush1.msra.mxu0 0.0
    %775 = vmatprep.subr.mxu0 0.0
    %776 = vmatpush1.msra.mxu0 0.0
    %777 = vmatprep.subr.mxu0 0.0
    %778 = vmatpush1.msra.mxu0 0.0
    %779 = vmatprep.subr.mxu0 0.0
    %780 = vmatpush1.msra.mxu0 0.0
    %781 = vmatprep.subr.mxu0 0.0
    %782 = vmatpush1.msra.mxu0 0.0
    %783 = vmatprep.subr.mxu0 0.0
    %784 = vmatpush1.msra.mxu0 0.0
    %785 = vmatprep.subr.mxu0 0.0
    %786 = vmatpush1.msra.mxu0 0.0
    %787 = vmatprep.subr.mxu0 0.0
    %788 = vmatpush1.msra.mxu0 0.0
    %789 = vmatprep.mubr.f32.mxu0 0.0
    %790 = vmatmul.mubr.f32.gmra.mrb[0].mxu0 %v720
    %v791 = vpop.f32.mrb[0].mxu0
    %v792 = vadd.f32 0.0, %v791
    %v793 = vpop.f32.mrb[0].mxu0
    %794 = vmatprep.mubr.f32.mxu0 0.0
    %795 = vmatmul.mubr.f32.gmra.mrb[0].mxu0 %v723
    %v796 = vpop.f32.mrb[0].mxu0
    %v797 = vadd.f32 0.0, %v796
    %v798 = vpop.f32.mrb[0].mxu0
    %799 = vdwg.mxu0
    %802 = vrot.lane.b32.xlu0 %v792, 32
    %v803 = vpop.permute.xlu0 %802
    %804 = vrot.lane.b32.xlu0 %v797, 32
    %v805 = vpop.permute.xlu0 %804
    %vm808 = vcmask 523520
    %809 = vst.msk [vmem:[#allocation4] sm:$0xff] %vm808, %v803
    %810 = vst.msk [vmem:[#allocation4 + $0x8] sm:$0xff] %vm808, %v805
    %v811 = vld [vmem:[#allocation2] sm:$0xff]
    %v812 = vld [vmem:[#allocation3] sm:$0xff]
    %813 = vrot.lane.b32.xlu0 %v406, 64
    %v814 = vpop.permute.xlu0 %813
    %815 = vrot.lane.b32.xlu0 %v407, 64
    %v816 = vpop.permute.xlu0 %815
    %818 = vrot.lane.b32.xlu0 %v811, 64
    %v819 = vpop.permute.xlu0 %818
    %v820 = vsel %vm412, %v814, 0
    %v822 = vsel %vm412, %v816, 0
    %v824 = vsel %vm412, %v819, 0
    %826 = vmatprep.subr.mxu0 0.0
    %827 = vmatpush1.xpose.msra.mxu0 %v824
    %828 = vmatprep.subr.mxu0 0.0
    %829 = vmatpush1.xpose.msra.mxu0 0.0
    %830 = vmatprep.subr.mxu0 0.0
    %831 = vmatpush1.xpose.msra.mxu0 0.0
    %832 = vmatprep.subr.mxu0 0.0
    %833 = vmatpush1.xpose.msra.mxu0 0.0
    %834 = vmatprep.subr.mxu0 0.0
    %835 = vmatpush1.xpose.msra.mxu0 0.0
    %836 = vmatprep.subr.mxu0 0.0
    %837 = vmatpush1.xpose.msra.mxu0 0.0
    %838 = vmatprep.subr.mxu0 0.0
    %839 = vmatpush1.xpose.msra.mxu0 0.0
    %840 = vmatprep.subr.mxu0 0.0
    %841 = vmatpush1.xpose.msra.mxu0 0.0
    %842 = vmatprep.subr.mxu0 0.0
    %843 = vmatpush1.xpose.msra.mxu0 0.0
    %844 = vmatprep.subr.mxu0 0.0
    %845 = vmatpush1.xpose.msra.mxu0 0.0
    %846 = vmatprep.subr.mxu0 0.0
    %847 = vmatpush1.xpose.msra.mxu0 0.0
    %848 = vmatprep.subr.mxu0 0.0
    %849 = vmatpush1.xpose.msra.mxu0 0.0
    %850 = vmatprep.subr.mxu0 0.0
    %851 = vmatpush1.xpose.msra.mxu0 0.0
    %852 = vmatprep.subr.mxu0 0.0
    %853 = vmatpush1.xpose.msra.mxu0 0.0
    %854 = vmatprep.subr.mxu0 0.0
    %855 = vmatpush1.xpose.msra.mxu0 0.0
    %856 = vmatprep.subr.mxu0 0.0
    %857 = vmatpush1.xpose.msra.mxu0 0.0
    %858 = vmatprep.subr.mxu0 0.0
    %859 = vmatpush1.xpose.msra.mxu0 0.0
    %860 = vmatprep.subr.mxu0 0.0
    %861 = vmatpush1.xpose.msra.mxu0 0.0
    %862 = vmatprep.subr.mxu0 0.0
    %863 = vmatpush1.xpose.msra.mxu0 0.0
    %864 = vmatprep.subr.mxu0 0.0
    %865 = vmatpush1.xpose.msra.mxu0 0.0
    %866 = vmatprep.subr.mxu0 0.0
    %867 = vmatpush1.xpose.msra.mxu0 0.0
    %868 = vmatprep.subr.mxu0 0.0
    %869 = vmatpush1.xpose.msra.mxu0 0.0
    %870 = vmatprep.subr.mxu0 0.0
    %871 = vmatpush1.xpose.msra.mxu0 0.0
    %872 = vmatprep.subr.mxu0 0.0
    %873 = vmatpush1.xpose.msra.mxu0 0.0
    %874 = vmatprep.subr.mxu0 0.0
    %875 = vmatpush1.xpose.msra.mxu0 0.0
    %876 = vmatprep.subr.mxu0 0.0
    %877 = vmatpush1.xpose.msra.mxu0 0.0
    %878 = vmatprep.subr.mxu0 0.0
    %879 = vmatpush1.xpose.msra.mxu0 0.0
    %880 = vmatprep.subr.mxu0 0.0
    %881 = vmatpush1.xpose.msra.mxu0 0.0
    %882 = vmatprep.subr.mxu0 0.0
    %883 = vmatpush1.xpose.msra.mxu0 0.0
    %884 = vmatprep.subr.mxu0 0.0
    %885 = vmatpush1.xpose.msra.mxu0 0.0
    %886 = vmatprep.subr.mxu0 0.0
    %887 = vmatpush1.xpose.msra.mxu0 0.0
    %888 = vmatprep.subr.mxu0 0.0
    %889 = vmatpush1.xpose.msra.mxu0 0.0
    %890 = vmatprep.mubr.f32.mxu0 0.0
    %891 = vmatmul.mubr.f32.gmra.mrb[0].mxu0 %v820
    %v892 = vpop.f32.mrb[0].mxu0
    %v893 = vadd.f32 0.0, %v892
    %v894 = vpop.f32.mrb[0].mxu0
    %895 = vmatprep.mubr.f32.mxu0 0.0
    %896 = vmatmul.mubr.f32.gmra.mrb[0].mxu0 %v822
    %v897 = vpop.f32.mrb[0].mxu0
    %v898 = vadd.f32 0.0, %v897
    %v899 = vpop.f32.mrb[0].mxu0
    %900 = vdwg.mxu0
    %v901 = vsel %vm497, %v893, -inf
    %902 = vmax.xlane.f32.xlu0 %v901
    %v903 = vpop.xlane.xlu0 %902
    %v904 = vsel %vm497, %v898, -inf
    %905 = vmax.xlane.f32.xlu0 %v904
    %v906 = vpop.xlane.xlu0 %905
    %v907 = vsub.f32 %v893, %v903
    %v908 = vsub.f32 %v898, %v906
    %v909 = vmul.f32 %v907, 1.442695
    %v910 = vpow.pop %v909
    %v911 = vmul.f32 %v908, 1.442695
    %v912 = vpow.pop %v911
    %v913 = vsel %vm497, %v910, 0.0
    %914 = vadd.xlane.f32.xlu0 %v913
    %v915 = vpop.xlane.xlu0 %914
    %v916 = vsel %vm497, %v912, 0.0
    %917 = vadd.xlane.f32.xlu0 %v916
    %v918 = vpop.xlane.xlu0 %917
    %v919 = vrcp.pop %v915
    %v920 = vrcp.pop %v918
    %v921 = vmul.f32 %v910, %v919
    %v922 = vmul.f32 %v912, %v920
    %924 = vrot.lane.b32.xlu0 %v812, 64
    %v925 = vpop.permute.xlu0 %924
    %v928 = vsel %vm497, %v921, 0
    %v931 = vsel %vm497, %v922, 0
    %933 = vmatprep.subr.mxu0 0.0
    %934 = vmatpush1.msra.mxu0 %v925
    %935 = vmatprep.subr.mxu0 0.0
    %936 = vmatpush1.msra.mxu0 0.0
    %937 = vmatprep.subr.mxu0 0.0
    %938 = vmatpush1.msra.mxu0 0.0
    %939 = vmatprep.subr.mxu0 0.0
    %940 = vmatpush1.msra.mxu0 0.0
    %941 = vmatprep.subr.mxu0 0.0
    %942 = vmatpush1.msra.mxu0 0.0
    %943 = vmatprep.subr.mxu0 0.0
    %944 = vmatpush1.msra.mxu0 0.0
    %945 = vmatprep.subr.mxu0 0.0
    %946 = vmatpush1.msra.mxu0 0.0
    %947 = vmatprep.subr.mxu0 0.0
    %948 = vmatpush1.msra.mxu0 0.0
    %949 = vmatprep.subr.mxu0 0.0
    %950 = vmatpush1.msra.mxu0 0.0
    %951 = vmatprep.subr.mxu0 0.0
    %952 = vmatpush1.msra.mxu0 0.0
    %953 = vmatprep.subr.mxu0 0.0
    %954 = vmatpush1.msra.mxu0 0.0
    %955 = vmatprep.subr.mxu0 0.0
    %956 = vmatpush1.msra.mxu0 0.0
    %957 = vmatprep.subr.mxu0 0.0
    %958 = vmatpush1.msra.mxu0 0.0
    %959 = vmatprep.subr.mxu0 0.0
    %960 = vmatpush1.msra.mxu0 0.0
    %961 = vmatprep.subr.mxu0 0.0
    %962 = vmatpush1.msra.mxu0 0.0
    %963 = vmatprep.subr.mxu0 0.0
    %964 = vmatpush1.msra.mxu0 0.0
    %965 = vmatprep.subr.mxu0 0.0
    %966 = vmatpush1.msra.mxu0 0.0
    %967 = vmatprep.subr.mxu0 0.0
    %968 = vmatpush1.msra.mxu0 0.0
    %969 = vmatprep.subr.mxu0 0.0
    %970 = vmatpush1.msra.mxu0 0.0
    %971 = vmatprep.subr.mxu0 0.0
    %972 = vmatpush1.msra.mxu0 0.0
    %973 = vmatprep.subr.mxu0 0.0
    %974 = vmatpush1.msra.mxu0 0.0
    %975 = vmatprep.subr.mxu0 0.0
    %976 = vmatpush1.msra.mxu0 0.0
    %977 = vmatprep.subr.mxu0 0.0
    %978 = vmatpush1.msra.mxu0 0.0
    %979 = vmatprep.subr.mxu0 0.0
    %980 = vmatpush1.msra.mxu0 0.0
    %981 = vmatprep.subr.mxu0 0.0
    %982 = vmatpush1.msra.mxu0 0.0
    %983 = vmatprep.subr.mxu0 0.0
    %984 = vmatpush1.msra.mxu0 0.0
    %985 = vmatprep.subr.mxu0 0.0
    %986 = vmatpush1.msra.mxu0 0.0
    %987 = vmatprep.subr.mxu0 0.0
    %988 = vmatpush1.msra.mxu0 0.0
    %989 = vmatprep.subr.mxu0 0.0
    %990 = vmatpush1.msra.mxu0 0.0
    %991 = vmatprep.subr.mxu0 0.0
    %992 = vmatpush1.msra.mxu0 0.0
    %993 = vmatprep.subr.mxu0 0.0
    %994 = vmatpush1.msra.mxu0 0.0
    %995 = vmatprep.subr.mxu0 0.0
    %996 = vmatpush1.msra.mxu0 0.0
    %997 = vmatprep.mubr.f32.mxu0 0.0
    %998 = vmatmul.mubr.f32.gmra.mrb[0].mxu0 %v928
    %v999 = vpop.f32.mrb[0].mxu0
    %v1000 = vadd.f32 0.0, %v999
    %v1001 = vpop.f32.mrb[0].mxu0
    %1002 = vmatprep.mubr.f32.mxu0 0.0
    %1003 = vmatmul.mubr.f32.gmra.mrb[0].mxu0 %v931
    %v1004 = vpop.f32.mrb[0].mxu0
    %v1005 = vadd.f32 0.0, %v1004
    %v1006 = vpop.f32.mrb[0].mxu0
    %1007 = vdwg.mxu0
    %1010 = vrot.lane.b32.xlu0 %v1000, 64
    %v1011 = vpop.permute.xlu0 %1010
    %1012 = vrot.lane.b32.xlu0 %v1005, 64
    %v1013 = vpop.permute.xlu0 %1012
    %vm1016 = vcmask 785920
    %1017 = vst.msk [vmem:[#allocation4] sm:$0xff] %vm1016, %v1011
    %1018 = vst.msk [vmem:[#allocation4 + $0x8] sm:$0xff] %vm1016, %v1013
    %v1019 = vld [vmem:[#allocation2] sm:$0xff]
    %v1020 = vld [vmem:[#allocation3] sm:$0xff]
    %1021 = vrot.lane.b32.xlu0 %v406, 32
    %v1022 = vpop.permute.xlu0 %1021
    %1023 = vrot.lane.b32.xlu0 %v407, 32
    %v1024 = vpop.permute.xlu0 %1023
    %1026 = vrot.lane.b32.xlu0 %v1019, 32
    %v1027 = vpop.permute.xlu0 %1026
    %v1028 = vsel %vm412, %v1022, 0
    %v1030 = vsel %vm412, %v1024, 0
    %v1032 = vsel %vm412, %v1027, 0
    %1034 = vmatprep.subr.mxu0 0.0
    %1035 = vmatpush1.xpose.msra.mxu0 %v1032
    %1036 = vmatprep.subr.mxu0 0.0
    %1037 = vmatpush1.xpose.msra.mxu0 0.0
    %1038 = vmatprep.subr.mxu0 0.0
    %1039 = vmatpush1.xpose.msra.mxu0 0.0
    %1040 = vmatprep.subr.mxu0 0.0
    %1041 = vmatpush1.xpose.msra.mxu0 0.0
    %1042 = vmatprep.subr.mxu0 0.0
    %1043 = vmatpush1.xpose.msra.mxu0 0.0
    %1044 = vmatprep.subr.mxu0 0.0
    %1045 = vmatpush1.xpose.msra.mxu0 0.0
    %1046 = vmatprep.subr.mxu0 0.0
    %1047 = vmatpush1.xpose.msra.mxu0 0.0
    %1048 = vmatprep.subr.mxu0 0.0
    %1049 = vmatpush1.xpose.msra.mxu0 0.0
    %1050 = vmatprep.subr.mxu0 0.0
    %1051 = vmatpush1.xpose.msra.mxu0 0.0
    %1052 = vmatprep.subr.mxu0 0.0
    %1053 = vmatpush1.xpose.msra.mxu0 0.0
    %1054 = vmatprep.subr.mxu0 0.0
    %1055 = vmatpush1.xpose.msra.mxu0 0.0
    %1056 = vmatprep.subr.mxu0 0.0
    %1057 = vmatpush1.xpose.msra.mxu0 0.0
    %1058 = vmatprep.subr.mxu0 0.0
    %1059 = vmatpush1.xpose.msra.mxu0 0.0
    %1060 = vmatprep.subr.mxu0 0.0
    %1061 = vmatpush1.xpose.msra.mxu0 0.0
    %1062 = vmatprep.subr.mxu0 0.0
    %1063 = vmatpush1.xpose.msra.mxu0 0.0
    %1064 = vmatprep.subr.mxu0 0.0
    %1065 = vmatpush1.xpose.msra.mxu0 0.0
    %1066 = vmatprep.subr.mxu0 0.0
    %1067 = vmatpush1.xpose.msra.mxu0 0.0
    %1068 = vmatprep.subr.mxu0 0.0
    %1069 = vmatpush1.xpose.msra.mxu0 0.0
    %1070 = vmatprep.subr.mxu0 0.0
    %1071 = vmatpush1.xpose.msra.mxu0 0.0
    %1072 = vmatprep.subr.mxu0 0.0
    %1073 = vmatpush1.xpose.msra.mxu0 0.0
    %1074 = vmatprep.subr.mxu0 0.0
    %1075 = vmatpush1.xpose.msra.mxu0 0.0
    %1076 = vmatprep.subr.mxu0 0.0
    %1077 = vmatpush1.xpose.msra.mxu0 0.0
    %1078 = vmatprep.subr.mxu0 0.0
    %1079 = vmatpush1.xpose.msra.mxu0 0.0
    %1080 = vmatprep.subr.mxu0 0.0
    %1081 = vmatpush1.xpose.msra.mxu0 0.0
    %1082 = vmatprep.subr.mxu0 0.0
    %1083 = vmatpush1.xpose.msra.mxu0 0.0
    %1084 = vmatprep.subr.mxu0 0.0
    %1085 = vmatpush1.xpose.msra.mxu0 0.0
    %1086 = vmatprep.subr.mxu0 0.0
    %1087 = vmatpush1.xpose.msra.mxu0 0.0
    %1088 = vmatprep.subr.mxu0 0.0
    %1089 = vmatpush1.xpose.msra.mxu0 0.0
    %1090 = vmatprep.subr.mxu0 0.0
    %1091 = vmatpush1.xpose.msra.mxu0 0.0
    %1092 = vmatprep.subr.mxu0 0.0
    %1093 = vmatpush1.xpose.msra.mxu0 0.0
    %1094 = vmatprep.subr.mxu0 0.0
    %1095 = vmatpush1.xpose.msra.mxu0 0.0
    %1096 = vmatprep.subr.mxu0 0.0
    %1097 = vmatpush1.xpose.msra.mxu0 0.0
    %1098 = vmatprep.mubr.f32.mxu0 0.0
    %1099 = vmatmul.mubr.f32.gmra.mrb[0].mxu0 %v1028
    %v1100 = vpop.f32.mrb[0].mxu0
    %v1101 = vadd.f32 0.0, %v1100
    %v1102 = vpop.f32.mrb[0].mxu0
    %1103 = vmatprep.mubr.f32.mxu0 0.0
    %1104 = vmatmul.mubr.f32.gmra.mrb[0].mxu0 %v1030
    %v1105 = vpop.f32.mrb[0].mxu0
    %v1106 = vadd.f32 0.0, %v1105
    %v1107 = vpop.f32.mrb[0].mxu0
    %1108 = vdwg.mxu0
    %v1109 = vsel %vm497, %v1101, -inf
    %1110 = vmax.xlane.f32.xlu0 %v1109
    %v1111 = vpop.xlane.xlu0 %1110
    %v1112 = vsel %vm497, %v1106, -inf
    %1113 = vmax.xlane.f32.xlu0 %v1112
    %v1114 = vpop.xlane.xlu0 %1113
    %v1115 = vsub.f32 %v1101, %v1111
    %v1116 = vsub.f32 %v1106, %v1114
    %v1117 = vmul.f32 %v1115, 1.442695
    %v1118 = vpow.pop %v1117
    %v1119 = vmul.f32 %v1116, 1.442695
    %v1120 = vpow.pop %v1119
    %v1121 = vsel %vm497, %v1118, 0.0
    %1122 = vadd.xlane.f32.xlu0 %v1121
    %v1123 = vpop.xlane.xlu0 %1122
    %v1124 = vsel %vm497, %v1120, 0.0
    %1125 = vadd.xlane.f32.xlu0 %v1124
    %v1126 = vpop.xlane.xlu0 %1125
    %v1127 = vrcp.pop %v1123
    %v1128 = vrcp.pop %v1126
    %v1129 = vmul.f32 %v1118, %v1127
    %v1130 = vmul.f32 %v1120, %v1128
    %1132 = vrot.lane.b32.xlu0 %v1020, 32
    %v1133 = vpop.permute.xlu0 %1132
    %v1136 = vsel %vm497, %v1129, 0
    %v1139 = vsel %vm497, %v1130, 0
    %1141 = vmatprep.subr.mxu0 0.0
    %1142 = vmatpush1.msra.mxu0 %v1133
    %1143 = vmatprep.subr.mxu0 0.0
    %1144 = vmatpush1.msra.mxu0 0.0
    %1145 = vmatprep.subr.mxu0 0.0
    %1146 = vmatpush1.msra.mxu0 0.0
    %1147 = vmatprep.subr.mxu0 0.0
    %1148 = vmatpush1.msra.mxu0 0.0
    %1149 = vmatprep.subr.mxu0 0.0
    %1150 = vmatpush1.msra.mxu0 0.0
    %1151 = vmatprep.subr.mxu0 0.0
    %1152 = vmatpush1.msra.mxu0 0.0
    %1153 = vmatprep.subr.mxu0 0.0
    %1154 = vmatpush1.msra.mxu0 0.0
    %1155 = vmatprep.subr.mxu0 0.0
    %1156 = vmatpush1.msra.mxu0 0.0
    %1157 = vmatprep.subr.mxu0 0.0
    %1158 = vmatpush1.msra.mxu0 0.0
    %1159 = vmatprep.subr.mxu0 0.0
    %1160 = vmatpush1.msra.mxu0 0.0
    %1161 = vmatprep.subr.mxu0 0.0
    %1162 = vmatpush1.msra.mxu0 0.0
    %1163 = vmatprep.subr.mxu0 0.0
    %1164 = vmatpush1.msra.mxu0 0.0
    %1165 = vmatprep.subr.mxu0 0.0
    %1166 = vmatpush1.msra.mxu0 0.0
    %1167 = vmatprep.subr.mxu0 0.0
    %1168 = vmatpush1.msra.mxu0 0.0
    %1169 = vmatprep.subr.mxu0 0.0
    %1170 = vmatpush1.msra.mxu0 0.0
    %1171 = vmatprep.subr.mxu0 0.0
    %1172 = vmatpush1.msra.mxu0 0.0
    %1173 = vmatprep.subr.mxu0 0.0
    %1174 = vmatpush1.msra.mxu0 0.0
    %1175 = vmatprep.subr.mxu0 0.0
    %1176 = vmatpush1.msra.mxu0 0.0
    %1177 = vmatprep.subr.mxu0 0.0
    %1178 = vmatpush1.msra.mxu0 0.0
    %1179 = vmatprep.subr.mxu0 0.0
    %1180 = vmatpush1.msra.mxu0 0.0
    %1181 = vmatprep.subr.mxu0 0.0
    %1182 = vmatpush1.msra.mxu0 0.0
    %1183 = vmatprep.subr.mxu0 0.0
    %1184 = vmatpush1.msra.mxu0 0.0
    %1185 = vmatprep.subr.mxu0 0.0
    %1186 = vmatpush1.msra.mxu0 0.0
    %1187 = vmatprep.subr.mxu0 0.0
    %1188 = vmatpush1.msra.mxu0 0.0
    %1189 = vmatprep.subr.mxu0 0.0
    %1190 = vmatpush1.msra.mxu0 0.0
    %1191 = vmatprep.subr.mxu0 0.0
    %1192 = vmatpush1.msra.mxu0 0.0
    %1193 = vmatprep.subr.mxu0 0.0
    %1194 = vmatpush1.msra.mxu0 0.0
    %1195 = vmatprep.subr.mxu0 0.0
    %1196 = vmatpush1.msra.mxu0 0.0
    %1197 = vmatprep.subr.mxu0 0.0
    %1198 = vmatpush1.msra.mxu0 0.0
    %1199 = vmatprep.subr.mxu0 0.0
    %1200 = vmatpush1.msra.mxu0 0.0
    %1201 = vmatprep.subr.mxu0 0.0
    %1202 = vmatpush1.msra.mxu0 0.0
    %1203 = vmatprep.subr.mxu0 0.0
    %1204 = vmatpush1.msra.mxu0 0.0
    %1205 = vmatprep.mubr.f32.mxu0 0.0
    %1206 = vmatmul.mubr.f32.gmra.mrb[0].mxu0 %v1136
    %v1207 = vpop.f32.mrb[0].mxu0
    %v1208 = vadd.f32 0.0, %v1207
    %v1209 = vpop.f32.mrb[0].mxu0
    %1210 = vmatprep.mubr.f32.mxu0 0.0
    %1211 = vmatmul.mubr.f32.gmra.mrb[0].mxu0 %v1139
    %v1212 = vpop.f32.mrb[0].mxu0
    %v1213 = vadd.f32 0.0, %v1212
    %v1214 = vpop.f32.mrb[0].mxu0
    %1215 = vdwg.mxu0
    %1218 = vrot.lane.b32.xlu0 %v1208, 96
    %v1219 = vpop.permute.xlu0 %1218
    %1220 = vrot.lane.b32.xlu0 %v1213, 96
    %v1221 = vpop.permute.xlu0 %1220
    %vm1224 = vcmask 1048320
    %1225 = vst.msk [vmem:[#allocation4] sm:$0xff] %vm1224, %v1219
    %1226 = vst.msk [vmem:[#allocation4 + $0x8] sm:$0xff] %vm1224, %v1221
    %s1227 = scalar_lea.vmem [#allocation2], 8
    %v1228 = vld [vmem:[%s1227] sm:$0xff]
    %s1229 = scalar_lea.vmem [#allocation3], 8
    %v1230 = vld [vmem:[%s1229] sm:$0xff]
    %v1232 = vsel %vm412, %v408, 0
    %v1235 = vsel %vm412, %v409, 0
    %v1238 = vsel %vm412, %v1228, 0
    %1240 = vmatprep.subr.mxu0 0.0
    %1241 = vmatpush1.xpose.msra.mxu0 %v1238
    %1242 = vmatprep.subr.mxu0 0.0
    %1243 = vmatpush1.xpose.msra.mxu0 0.0
    %1244 = vmatprep.subr.mxu0 0.0
    %1245 = vmatpush1.xpose.msra.mxu0 0.0
    %1246 = vmatprep.subr.mxu0 0.0
    %1247 = vmatpush1.xpose.msra.mxu0 0.0
    %1248 = vmatprep.subr.mxu0 0.0
    %1249 = vmatpush1.xpose.msra.mxu0 0.0
    %1250 = vmatprep.subr.mxu0 0.0
    %1251 = vmatpush1.xpose.msra.mxu0 0.0
    %1252 = vmatprep.subr.mxu0 0.0
    %1253 = vmatpush1.xpose.msra.mxu0 0.0
    %1254 = vmatprep.subr.mxu0 0.0
    %1255 = vmatpush1.xpose.msra.mxu0 0.0
    %1256 = vmatprep.subr.mxu0 0.0
    %1257 = vmatpush1.xpose.msra.mxu0 0.0
    %1258 = vmatprep.subr.mxu0 0.0
    %1259 = vmatpush1.xpose.msra.mxu0 0.0
    %1260 = vmatprep.subr.mxu0 0.0
    %1261 = vmatpush1.xpose.msra.mxu0 0.0
    %1262 = vmatprep.subr.mxu0 0.0
    %1263 = vmatpush1.xpose.msra.mxu0 0.0
    %1264 = vmatprep.subr.mxu0 0.0
    %1265 = vmatpush1.xpose.msra.mxu0 0.0
    %1266 = vmatprep.subr.mxu0 0.0
    %1267 = vmatpush1.xpose.msra.mxu0 0.0
    %1268 = vmatprep.subr.mxu0 0.0
    %1269 = vmatpush1.xpose.msra.mxu0 0.0
    %1270 = vmatprep.subr.mxu0 0.0
    %1271 = vmatpush1.xpose.msra.mxu0 0.0
    %1272 = vmatprep.subr.mxu0 0.0
    %1273 = vmatpush1.xpose.msra.mxu0 0.0
    %1274 = vmatprep.subr.mxu0 0.0
    %1275 = vmatpush1.xpose.msra.mxu0 0.0
    %1276 = vmatprep.subr.mxu0 0.0
    %1277 = vmatpush1.xpose.msra.mxu0 0.0
    %1278 = vmatprep.subr.mxu0 0.0
    %1279 = vmatpush1.xpose.msra.mxu0 0.0
    %1280 = vmatprep.subr.mxu0 0.0
    %1281 = vmatpush1.xpose.msra.mxu0 0.0
    %1282 = vmatprep.subr.mxu0 0.0
    %1283 = vmatpush1.xpose.msra.mxu0 0.0
    %1284 = vmatprep.subr.mxu0 0.0
    %1285 = vmatpush1.xpose.msra.mxu0 0.0
    %1286 = vmatprep.subr.mxu0 0.0
    %1287 = vmatpush1.xpose.msra.mxu0 0.0
    %1288 = vmatprep.subr.mxu0 0.0
    %1289 = vmatpush1.xpose.msra.mxu0 0.0
    %1290 = vmatprep.subr.mxu0 0.0
    %1291 = vmatpush1.xpose.msra.mxu0 0.0
    %1292 = vmatprep.subr.mxu0 0.0
    %1293 = vmatpush1.xpose.msra.mxu0 0.0
    %1294 = vmatprep.subr.mxu0 0.0
    %1295 = vmatpush1.xpose.msra.mxu0 0.0
    %1296 = vmatprep.subr.mxu0 0.0
    %1297 = vmatpush1.xpose.msra.mxu0 0.0
    %1298 = vmatprep.subr.mxu0 0.0
    %1299 = vmatpush1.xpose.msra.mxu0 0.0
    %1300 = vmatprep.subr.mxu0 0.0
    %1301 = vmatpush1.xpose.msra.mxu0 0.0
    %1302 = vmatprep.subr.mxu0 0.0
    %1303 = vmatpush1.xpose.msra.mxu0 0.0
    %1304 = vmatprep.mubr.f32.mxu0 0.0
    %1305 = vmatmul.mubr.f32.gmra.mrb[0].mxu0 %v1232
    %v1306 = vpop.f32.mrb[0].mxu0
    %v1307 = vadd.f32 0.0, %v1306
    %v1308 = vpop.f32.mrb[0].mxu0
    %1309 = vmatprep.mubr.f32.mxu0 0.0
    %1310 = vmatmul.mubr.f32.gmra.mrb[0].mxu0 %v1235
    %v1311 = vpop.f32.mrb[0].mxu0
    %v1312 = vadd.f32 0.0, %v1311
    %v1313 = vpop.f32.mrb[0].mxu0
    %1314 = vdwg.mxu0
    %v1315 = vsel %vm497, %v1307, -inf
    %1316 = vmax.xlane.f32.xlu0 %v1315
    %v1317 = vpop.xlane.xlu0 %1316
    %v1318 = vsel %vm497, %v1312, -inf
    %1319 = vmax.xlane.f32.xlu0 %v1318
    %v1320 = vpop.xlane.xlu0 %1319
    %v1321 = vsub.f32 %v1307, %v1317
    %v1322 = vsub.f32 %v1312, %v1320
    %v1323 = vmul.f32 %v1321, 1.442695
    %v1324 = vpow.pop %v1323
    %v1325 = vmul.f32 %v1322, 1.442695
    %v1326 = vpow.pop %v1325
    %v1327 = vsel %vm497, %v1324, 0.0
    %1328 = vadd.xlane.f32.xlu0 %v1327
    %v1329 = vpop.xlane.xlu0 %1328
    %v1330 = vsel %vm497, %v1326, 0.0
    %1331 = vadd.xlane.f32.xlu0 %v1330
    %v1332 = vpop.xlane.xlu0 %1331
    %v1333 = vrcp.pop %v1329
    %v1334 = vrcp.pop %v1332
    %v1335 = vmul.f32 %v1324, %v1333
    %v1336 = vmul.f32 %v1326, %v1334
    %v1338 = vsel %vm497, %v1335, 0
    %v1341 = vsel %vm497, %v1336, 0
    %1343 = vmatprep.subr.mxu0 0.0
    %1344 = vmatpush1.msra.mxu0 %v1230
    %1345 = vmatprep.subr.mxu0 0.0
    %1346 = vmatpush1.msra.mxu0 0.0
    %1347 = vmatprep.subr.mxu0 0.0
    %1348 = vmatpush1.msra.mxu0 0.0
    %1349 = vmatprep.subr.mxu0 0.0
    %1350 = vmatpush1.msra.mxu0 0.0
    %1351 = vmatprep.subr.mxu0 0.0
    %1352 = vmatpush1.msra.mxu0 0.0
    %1353 = vmatprep.subr.mxu0 0.0
    %1354 = vmatpush1.msra.mxu0 0.0
    %1355 = vmatprep.subr.mxu0 0.0
    %1356 = vmatpush1.msra.mxu0 0.0
    %1357 = vmatprep.subr.mxu0 0.0
    %1358 = vmatpush1.msra.mxu0 0.0
    %1359 = vmatprep.subr.mxu0 0.0
    %1360 = vmatpush1.msra.mxu0 0.0
    %1361 = vmatprep.subr.mxu0 0.0
    %1362 = vmatpush1.msra.mxu0 0.0
    %1363 = vmatprep.subr.mxu0 0.0
    %1364 = vmatpush1.msra.mxu0 0.0
    %1365 = vmatprep.subr.mxu0 0.0
    %1366 = vmatpush1.msra.mxu0 0.0
    %1367 = vmatprep.subr.mxu0 0.0
    %1368 = vmatpush1.msra.mxu0 0.0
    %1369 = vmatprep.subr.mxu0 0.0
    %1370 = vmatpush1.msra.mxu0 0.0
    %1371 = vmatprep.subr.mxu0 0.0
    %1372 = vmatpush1.msra.mxu0 0.0
    %1373 = vmatprep.subr.mxu0 0.0
    %1374 = vmatpush1.msra.mxu0 0.0
    %1375 = vmatprep.subr.mxu0 0.0
    %1376 = vmatpush1.msra.mxu0 0.0
    %1377 = vmatprep.subr.mxu0 0.0
    %1378 = vmatpush1.msra.mxu0 0.0
    %1379 = vmatprep.subr.mxu0 0.0
    %1380 = vmatpush1.msra.mxu0 0.0
    %1381 = vmatprep.subr.mxu0 0.0
    %1382 = vmatpush1.msra.mxu0 0.0
    %1383 = vmatprep.subr.mxu0 0.0
    %1384 = vmatpush1.msra.mxu0 0.0
    %1385 = vmatprep.subr.mxu0 0.0
    %1386 = vmatpush1.msra.mxu0 0.0
    %1387 = vmatprep.subr.mxu0 0.0
    %1388 = vmatpush1.msra.mxu0 0.0
    %1389 = vmatprep.subr.mxu0 0.0
    %1390 = vmatpush1.msra.mxu0 0.0
    %1391 = vmatprep.subr.mxu0 0.0
    %1392 = vmatpush1.msra.mxu0 0.0
    %1393 = vmatprep.subr.mxu0 0.0
    %1394 = vmatpush1.msra.mxu0 0.0
    %1395 = vmatprep.subr.mxu0 0.0
    %1396 = vmatpush1.msra.mxu0 0.0
    %1397 = vmatprep.subr.mxu0 0.0
    %1398 = vmatpush1.msra.mxu0 0.0
    %1399 = vmatprep.subr.mxu0 0.0
    %1400 = vmatpush1.msra.mxu0 0.0
    %1401 = vmatprep.subr.mxu0 0.0
    %1402 = vmatpush1.msra.mxu0 0.0
    %1403 = vmatprep.subr.mxu0 0.0
    %1404 = vmatpush1.msra.mxu0 0.0
    %1405 = vmatprep.subr.mxu0 0.0
    %1406 = vmatpush1.msra.mxu0 0.0
    %1407 = vmatprep.mubr.f32.mxu0 0.0
    %1408 = vmatmul.mubr.f32.gmra.mrb[0].mxu0 %v1338
    %v1409 = vpop.f32.mrb[0].mxu0
    %v1410 = vadd.f32 0.0, %v1409
    %v1411 = vpop.f32.mrb[0].mxu0
    %1412 = vmatprep.mubr.f32.mxu0 0.0
    %1413 = vmatmul.mubr.f32.gmra.mrb[0].mxu0 %v1341
    %v1414 = vpop.f32.mrb[0].mxu0
    %v1415 = vadd.f32 0.0, %v1414
    %v1416 = vpop.f32.mrb[0].mxu0
    %1417 = vdwg.mxu0
    %1418 = vst.msk [vmem:[#allocation4 + $0x10] sm:$0xff] %vm412, %v1410
    %1419 = vst.msk [vmem:[#allocation4 + $0x18] sm:$0xff] %vm412, %v1415
    %v1420 = vld [vmem:[%s1227] sm:$0xff]
    %v1421 = vld [vmem:[%s1229] sm:$0xff]
    %1422 = vrot.lane.b32.xlu0 %v408, 96
    %v1423 = vpop.permute.xlu0 %1422
    %1424 = vrot.lane.b32.xlu0 %v409, 96
    %v1425 = vpop.permute.xlu0 %1424
    %1427 = vrot.lane.b32.xlu0 %v1420, 96
    %v1428 = vpop.permute.xlu0 %1427
    %v1429 = vsel %vm412, %v1423, 0
    %v1431 = vsel %vm412, %v1425, 0
    %v1433 = vsel %vm412, %v1428, 0
    %1435 = vmatprep.subr.mxu0 0.0
    %1436 = vmatpush1.xpose.msra.mxu0 %v1433
    %1437 = vmatprep.subr.mxu0 0.0
    %1438 = vmatpush1.xpose.msra.mxu0 0.0
    %1439 = vmatprep.subr.mxu0 0.0
    %1440 = vmatpush1.xpose.msra.mxu0 0.0
    %1441 = vmatprep.subr.mxu0 0.0
    %1442 = vmatpush1.xpose.msra.mxu0 0.0
    %1443 = vmatprep.subr.mxu0 0.0
    %1444 = vmatpush1.xpose.msra.mxu0 0.0
    %1445 = vmatprep.subr.mxu0 0.0
    %1446 = vmatpush1.xpose.msra.mxu0 0.0
    %1447 = vmatprep.subr.mxu0 0.0
    %1448 = vmatpush1.xpose.msra.mxu0 0.0
    %1449 = vmatprep.subr.mxu0 0.0
    %1450 = vmatpush1.xpose.msra.mxu0 0.0
    %1451 = vmatprep.subr.mxu0 0.0
    %1452 = vmatpush1.xpose.msra.mxu0 0.0
    %1453 = vmatprep.subr.mxu0 0.0
    %1454 = vmatpush1.xpose.msra.mxu0 0.0
    %1455 = vmatprep.subr.mxu0 0.0
    %1456 = vmatpush1.xpose.msra.mxu0 0.0
    %1457 = vmatprep.subr.mxu0 0.0
    %1458 = vmatpush1.xpose.msra.mxu0 0.0
    %1459 = vmatprep.subr.mxu0 0.0
    %1460 = vmatpush1.xpose.msra.mxu0 0.0
    %1461 = vmatprep.subr.mxu0 0.0
    %1462 = vmatpush1.xpose.msra.mxu0 0.0
    %1463 = vmatprep.subr.mxu0 0.0
    %1464 = vmatpush1.xpose.msra.mxu0 0.0
    %1465 = vmatprep.subr.mxu0 0.0
    %1466 = vmatpush1.xpose.msra.mxu0 0.0
    %1467 = vmatprep.subr.mxu0 0.0
    %1468 = vmatpush1.xpose.msra.mxu0 0.0
    %1469 = vmatprep.subr.mxu0 0.0
    %1470 = vmatpush1.xpose.msra.mxu0 0.0
    %1471 = vmatprep.subr.mxu0 0.0
    %1472 = vmatpush1.xpose.msra.mxu0 0.0
    %1473 = vmatprep.subr.mxu0 0.0
    %1474 = vmatpush1.xpose.msra.mxu0 0.0
    %1475 = vmatprep.subr.mxu0 0.0
    %1476 = vmatpush1.xpose.msra.mxu0 0.0
    %1477 = vmatprep.subr.mxu0 0.0
    %1478 = vmatpush1.xpose.msra.mxu0 0.0
    %1479 = vmatprep.subr.mxu0 0.0
    %1480 = vmatpush1.xpose.msra.mxu0 0.0
    %1481 = vmatprep.subr.mxu0 0.0
    %1482 = vmatpush1.xpose.msra.mxu0 0.0
    %1483 = vmatprep.subr.mxu0 0.0
    %1484 = vmatpush1.xpose.msra.mxu0 0.0
    %1485 = vmatprep.subr.mxu0 0.0
    %1486 = vmatpush1.xpose.msra.mxu0 0.0
    %1487 = vmatprep.subr.mxu0 0.0
    %1488 = vmatpush1.xpose.msra.mxu0 0.0
    %1489 = vmatprep.subr.mxu0 0.0
    %1490 = vmatpush1.xpose.msra.mxu0 0.0
    %1491 = vmatprep.subr.mxu0 0.0
    %1492 = vmatpush1.xpose.msra.mxu0 0.0
    %1493 = vmatprep.subr.mxu0 0.0
    %1494 = vmatpush1.xpose.msra.mxu0 0.0
    %1495 = vmatprep.subr.mxu0 0.0
    %1496 = vmatpush1.xpose.msra.mxu0 0.0
    %1497 = vmatprep.subr.mxu0 0.0
    %1498 = vmatpush1.xpose.msra.mxu0 0.0
    %1499 = vmatprep.mubr.f32.mxu0 0.0
    %1500 = vmatmul.mubr.f32.gmra.mrb[0].mxu0 %v1429
    %v1501 = vpop.f32.mrb[0].mxu0
    %v1502 = vadd.f32 0.0, %v1501
    %v1503 = vpop.f32.mrb[0].mxu0
    %1504 = vmatprep.mubr.f32.mxu0 0.0
    %1505 = vmatmul.mubr.f32.gmra.mrb[0].mxu0 %v1431
    %v1506 = vpop.f32.mrb[0].mxu0
    %v1507 = vadd.f32 0.0, %v1506
    %v1508 = vpop.f32.mrb[0].mxu0
    %1509 = vdwg.mxu0
    %v1510 = vsel %vm497, %v1502, -inf
    %1511 = vmax.xlane.f32.xlu0 %v1510
    %v1512 = vpop.xlane.xlu0 %1511
    %v1513 = vsel %vm497, %v1507, -inf
    %1514 = vmax.xlane.f32.xlu0 %v1513
    %v1515 = vpop.xlane.xlu0 %1514
    %v1516 = vsub.f32 %v1502, %v1512
    %v1517 = vsub.f32 %v1507, %v1515
    %v1518 = vmul.f32 %v1516, 1.442695
    %v1519 = vpow.pop %v1518
    %v1520 = vmul.f32 %v1517, 1.442695
    %v1521 = vpow.pop %v1520
    %v1522 = vsel %vm497, %v1519, 0.0
    %1523 = vadd.xlane.f32.xlu0 %v1522
    %v1524 = vpop.xlane.xlu0 %1523
    %v1525 = vsel %vm497, %v1521, 0.0
    %1526 = vadd.xlane.f32.xlu0 %v1525
    %v1527 = vpop.xlane.xlu0 %1526
    %v1528 = vrcp.pop %v1524
    %v1529 = vrcp.pop %v1527
    %v1530 = vmul.f32 %v1519, %v1528
    %v1531 = vmul.f32 %v1521, %v1529
    %1533 = vrot.lane.b32.xlu0 %v1421, 96
    %v1534 = vpop.permute.xlu0 %1533
    %v1537 = vsel %vm497, %v1530, 0
    %v1540 = vsel %vm497, %v1531, 0
    %1542 = vmatprep.subr.mxu0 0.0
    %1543 = vmatpush1.msra.mxu0 %v1534
    %1544 = vmatprep.subr.mxu0 0.0
    %1545 = vmatpush1.msra.mxu0 0.0
    %1546 = vmatprep.subr.mxu0 0.0
    %1547 = vmatpush1.msra.mxu0 0.0
    %1548 = vmatprep.subr.mxu0 0.0
    %1549 = vmatpush1.msra.mxu0 0.0
    %1550 = vmatprep.subr.mxu0 0.0
    %1551 = vmatpush1.msra.mxu0 0.0
    %1552 = vmatprep.subr.mxu0 0.0
    %1553 = vmatpush1.msra.mxu0 0.0
    %1554 = vmatprep.subr.mxu0 0.0
    %1555 = vmatpush1.msra.mxu0 0.0
    %1556 = vmatprep.subr.mxu0 0.0
    %1557 = vmatpush1.msra.mxu0 0.0
    %1558 = vmatprep.subr.mxu0 0.0
    %1559 = vmatpush1.msra.mxu0 0.0
    %1560 = vmatprep.subr.mxu0 0.0
    %1561 = vmatpush1.msra.mxu0 0.0
    %1562 = vmatprep.subr.mxu0 0.0
    %1563 = vmatpush1.msra.mxu0 0.0
    %1564 = vmatprep.subr.mxu0 0.0
    %1565 = vmatpush1.msra.mxu0 0.0
    %1566 = vmatprep.subr.mxu0 0.0
    %1567 = vmatpush1.msra.mxu0 0.0
    %1568 = vmatprep.subr.mxu0 0.0
    %1569 = vmatpush1.msra.mxu0 0.0
    %1570 = vmatprep.subr.mxu0 0.0
    %1571 = vmatpush1.msra.mxu0 0.0
    %1572 = vmatprep.subr.mxu0 0.0
    %1573 = vmatpush1.msra.mxu0 0.0
    %1574 = vmatprep.subr.mxu0 0.0
    %1575 = vmatpush1.msra.mxu0 0.0
    %1576 = vmatprep.subr.mxu0 0.0
    %1577 = vmatpush1.msra.mxu0 0.0
    %1578 = vmatprep.subr.mxu0 0.0
    %1579 = vmatpush1.msra.mxu0 0.0
    %1580 = vmatprep.subr.mxu0 0.0
    %1581 = vmatpush1.msra.mxu0 0.0
    %1582 = vmatprep.subr.mxu0 0.0
    %1583 = vmatpush1.msra.mxu0 0.0
    %1584 = vmatprep.subr.mxu0 0.0
    %1585 = vmatpush1.msra.mxu0 0.0
    %1586 = vmatprep.subr.mxu0 0.0
    %1587 = vmatpush1.msra.mxu0 0.0
    %1588 = vmatprep.subr.mxu0 0.0
    %1589 = vmatpush1.msra.mxu0 0.0
    %1590 = vmatprep.subr.mxu0 0.0
    %1591 = vmatpush1.msra.mxu0 0.0
    %1592 = vmatprep.subr.mxu0 0.0
    %1593 = vmatpush1.msra.mxu0 0.0
    %1594 = vmatprep.subr.mxu0 0.0
    %1595 = vmatpush1.msra.mxu0 0.0
    %1596 = vmatprep.subr.mxu0 0.0
    %1597 = vmatpush1.msra.mxu0 0.0
    %1598 = vmatprep.subr.mxu0 0.0
    %1599 = vmatpush1.msra.mxu0 0.0
    %1600 = vmatprep.subr.mxu0 0.0
    %1601 = vmatpush1.msra.mxu0 0.0
    %1602 = vmatprep.subr.mxu0 0.0
    %1603 = vmatpush1.msra.mxu0 0.0
    %1604 = vmatprep.subr.mxu0 0.0
    %1605 = vmatpush1.msra.mxu0 0.0
    %1606 = vmatprep.mubr.f32.mxu0 0.0
    %1607 = vmatmul.mubr.f32.gmra.mrb[0].mxu0 %v1537
    %v1608 = vpop.f32.mrb[0].mxu0
    %v1609 = vadd.f32 0.0, %v1608
    %v1610 = vpop.f32.mrb[0].mxu0
    %1611 = vmatprep.mubr.f32.mxu0 0.0
    %1612 = vmatmul.mubr.f32.gmra.mrb[0].mxu0 %v1540
    %v1613 = vpop.f32.mrb[0].mxu0
    %v1614 = vadd.f32 0.0, %v1613
    %v1615 = vpop.f32.mrb[0].mxu0
    %1616 = vdwg.mxu0
    %1619 = vrot.lane.b32.xlu0 %v1609, 32
    %v1620 = vpop.permute.xlu0 %1619
    %1621 = vrot.lane.b32.xlu0 %v1614, 32
    %v1622 = vpop.permute.xlu0 %1621
    %1625 = vst.msk [vmem:[#allocation4 + $0x10] sm:$0xff] %vm808, %v1620
    %1626 = vst.msk [vmem:[#allocation4 + $0x18] sm:$0xff] %vm808, %v1622
    %v1627 = vld [vmem:[%s1227] sm:$0xff]
    %v1628 = vld [vmem:[%s1229] sm:$0xff]
    %1629 = vrot.lane.b32.xlu0 %v408, 64
    %v1630 = vpop.permute.xlu0 %1629
    %1631 = vrot.lane.b32.xlu0 %v409, 64
    %v1632 = vpop.permute.xlu0 %1631
    %1634 = vrot.lane.b32.xlu0 %v1627, 64
    %v1635 = vpop.permute.xlu0 %1634
    %v1636 = vsel %vm412, %v1630, 0
    %v1638 = vsel %vm412, %v1632, 0
    %v1640 = vsel %vm412, %v1635, 0
    %1642 = vmatprep.subr.mxu0 0.0
    %1643 = vmatpush1.xpose.msra.mxu0 %v1640
    %1644 = vmatprep.subr.mxu0 0.0
    %1645 = vmatpush1.xpose.msra.mxu0 0.0
    %1646 = vmatprep.subr.mxu0 0.0
    %1647 = vmatpush1.xpose.msra.mxu0 0.0
    %1648 = vmatprep.subr.mxu0 0.0
    %1649 = vmatpush1.xpose.msra.mxu0 0.0
    %1650 = vmatprep.subr.mxu0 0.0
    %1651 = vmatpush1.xpose.msra.mxu0 0.0
    %1652 = vmatprep.subr.mxu0 0.0
    %1653 = vmatpush1.xpose.msra.mxu0 0.0
    %1654 = vmatprep.subr.mxu0 0.0
    %1655 = vmatpush1.xpose.msra.mxu0 0.0
    %1656 = vmatprep.subr.mxu0 0.0
    %1657 = vmatpush1.xpose.msra.mxu0 0.0
    %1658 = vmatprep.subr.mxu0 0.0
    %1659 = vmatpush1.xpose.msra.mxu0 0.0
    %1660 = vmatprep.subr.mxu0 0.0
    %1661 = vmatpush1.xpose.msra.mxu0 0.0
    %1662 = vmatprep.subr.mxu0 0.0
    %1663 = vmatpush1.xpose.msra.mxu0 0.0
    %1664 = vmatprep.subr.mxu0 0.0
    %1665 = vmatpush1.xpose.msra.mxu0 0.0
    %1666 = vmatprep.subr.mxu0 0.0
    %1667 = vmatpush1.xpose.msra.mxu0 0.0
    %1668 = vmatprep.subr.mxu0 0.0
    %1669 = vmatpush1.xpose.msra.mxu0 0.0
    %1670 = vmatprep.subr.mxu0 0.0
    %1671 = vmatpush1.xpose.msra.mxu0 0.0
    %1672 = vmatprep.subr.mxu0 0.0
    %1673 = vmatpush1.xpose.msra.mxu0 0.0
    %1674 = vmatprep.subr.mxu0 0.0
    %1675 = vmatpush1.xpose.msra.mxu0 0.0
    %1676 = vmatprep.subr.mxu0 0.0
    %1677 = vmatpush1.xpose.msra.mxu0 0.0
    %1678 = vmatprep.subr.mxu0 0.0
    %1679 = vmatpush1.xpose.msra.mxu0 0.0
    %1680 = vmatprep.subr.mxu0 0.0
    %1681 = vmatpush1.xpose.msra.mxu0 0.0
    %1682 = vmatprep.subr.mxu0 0.0
    %1683 = vmatpush1.xpose.msra.mxu0 0.0
    %1684 = vmatprep.subr.mxu0 0.0
    %1685 = vmatpush1.xpose.msra.mxu0 0.0
    %1686 = vmatprep.subr.mxu0 0.0
    %1687 = vmatpush1.xpose.msra.mxu0 0.0
    %1688 = vmatprep.subr.mxu0 0.0
    %1689 = vmatpush1.xpose.msra.mxu0 0.0
    %1690 = vmatprep.subr.mxu0 0.0
    %1691 = vmatpush1.xpose.msra.mxu0 0.0
    %1692 = vmatprep.subr.mxu0 0.0
    %1693 = vmatpush1.xpose.msra.mxu0 0.0
    %1694 = vmatprep.subr.mxu0 0.0
    %1695 = vmatpush1.xpose.msra.mxu0 0.0
    %1696 = vmatprep.subr.mxu0 0.0
    %1697 = vmatpush1.xpose.msra.mxu0 0.0
    %1698 = vmatprep.subr.mxu0 0.0
    %1699 = vmatpush1.xpose.msra.mxu0 0.0
    %1700 = vmatprep.subr.mxu0 0.0
    %1701 = vmatpush1.xpose.msra.mxu0 0.0
    %1702 = vmatprep.subr.mxu0 0.0
    %1703 = vmatpush1.xpose.msra.mxu0 0.0
    %1704 = vmatprep.subr.mxu0 0.0
    %1705 = vmatpush1.xpose.msra.mxu0 0.0
    %1706 = vmatprep.mubr.f32.mxu0 0.0
    %1707 = vmatmul.mubr.f32.gmra.mrb[0].mxu0 %v1636
    %v1708 = vpop.f32.mrb[0].mxu0
    %v1709 = vadd.f32 0.0, %v1708
    %v1710 = vpop.f32.mrb[0].mxu0
    %1711 = vmatprep.mubr.f32.mxu0 0.0
    %1712 = vmatmul.mubr.f32.gmra.mrb[0].mxu0 %v1638
    %v1713 = vpop.f32.mrb[0].mxu0
    %v1714 = vadd.f32 0.0, %v1713
    %v1715 = vpop.f32.mrb[0].mxu0
    %1716 = vdwg.mxu0
    %v1717 = vsel %vm497, %v1709, -inf
    %1718 = vmax.xlane.f32.xlu0 %v1717
    %v1719 = vpop.xlane.xlu0 %1718
    %v1720 = vsel %vm497, %v1714, -inf
    %1721 = vmax.xlane.f32.xlu0 %v1720
    %v1722 = vpop.xlane.xlu0 %1721
    %v1723 = vsub.f32 %v1709, %v1719
    %v1724 = vsub.f32 %v1714, %v1722
    %v1725 = vmul.f32 %v1723, 1.442695
    %v1726 = vpow.pop %v1725
    %v1727 = vmul.f32 %v1724, 1.442695
    %v1728 = vpow.pop %v1727
    %v1729 = vsel %vm497, %v1726, 0.0
    %1730 = vadd.xlane.f32.xlu0 %v1729
    %v1731 = vpop.xlane.xlu0 %1730
    %v1732 = vsel %vm497, %v1728, 0.0
    %1733 = vadd.xlane.f32.xlu0 %v1732
    %v1734 = vpop.xlane.xlu0 %1733
    %v1735 = vrcp.pop %v1731
    %v1736 = vrcp.pop %v1734
    %v1737 = vmul.f32 %v1726, %v1735
    %v1738 = vmul.f32 %v1728, %v1736
    %1740 = vrot.lane.b32.xlu0 %v1628, 64
    %v1741 = vpop.permute.xlu0 %1740
    %v1744 = vsel %vm497, %v1737, 0
    %v1747 = vsel %vm497, %v1738, 0
    %1749 = vmatprep.subr.mxu0 0.0
    %1750 = vmatpush1.msra.mxu0 %v1741
    %1751 = vmatprep.subr.mxu0 0.0
    %1752 = vmatpush1.msra.mxu0 0.0
    %1753 = vmatprep.subr.mxu0 0.0
    %1754 = vmatpush1.msra.mxu0 0.0
    %1755 = vmatprep.subr.mxu0 0.0
    %1756 = vmatpush1.msra.mxu0 0.0
    %1757 = vmatprep.subr.mxu0 0.0
    %1758 = vmatpush1.msra.mxu0 0.0
    %1759 = vmatprep.subr.mxu0 0.0
    %1760 = vmatpush1.msra.mxu0 0.0
    %1761 = vmatprep.subr.mxu0 0.0
    %1762 = vmatpush1.msra.mxu0 0.0
    %1763 = vmatprep.subr.mxu0 0.0
    %1764 = vmatpush1.msra.mxu0 0.0
    %1765 = vmatprep.subr.mxu0 0.0
    %1766 = vmatpush1.msra.mxu0 0.0
    %1767 = vmatprep.subr.mxu0 0.0
    %1768 = vmatpush1.msra.mxu0 0.0
    %1769 = vmatprep.subr.mxu0 0.0
    %1770 = vmatpush1.msra.mxu0 0.0
    %1771 = vmatprep.subr.mxu0 0.0
    %1772 = vmatpush1.msra.mxu0 0.0
    %1773 = vmatprep.subr.mxu0 0.0
    %1774 = vmatpush1.msra.mxu0 0.0
    %1775 = vmatprep.subr.mxu0 0.0
    %1776 = vmatpush1.msra.mxu0 0.0
    %1777 = vmatprep.subr.mxu0 0.0
    %1778 = vmatpush1.msra.mxu0 0.0
    %1779 = vmatprep.subr.mxu0 0.0
    %1780 = vmatpush1.msra.mxu0 0.0
    %1781 = vmatprep.subr.mxu0 0.0
    %1782 = vmatpush1.msra.mxu0 0.0
    %1783 = vmatprep.subr.mxu0 0.0
    %1784 = vmatpush1.msra.mxu0 0.0
    %1785 = vmatprep.subr.mxu0 0.0
    %1786 = vmatpush1.msra.mxu0 0.0
    %1787 = vmatprep.subr.mxu0 0.0
    %1788 = vmatpush1.msra.mxu0 0.0
    %1789 = vmatprep.subr.mxu0 0.0
    %1790 = vmatpush1.msra.mxu0 0.0
    %1791 = vmatprep.subr.mxu0 0.0
    %1792 = vmatpush1.msra.mxu0 0.0
    %1793 = vmatprep.subr.mxu0 0.0
    %1794 = vmatpush1.msra.mxu0 0.0
    %1795 = vmatprep.subr.mxu0 0.0
    %1796 = vmatpush1.msra.mxu0 0.0
    %1797 = vmatprep.subr.mxu0 0.0
    %1798 = vmatpush1.msra.mxu0 0.0
    %1799 = vmatprep.subr.mxu0 0.0
    %1800 = vmatpush1.msra.mxu0 0.0
    %1801 = vmatprep.subr.mxu0 0.0
    %1802 = vmatpush1.msra.mxu0 0.0
    %1803 = vmatprep.subr.mxu0 0.0
    %1804 = vmatpush1.msra.mxu0 0.0
    %1805 = vmatprep.subr.mxu0 0.0
    %1806 = vmatpush1.msra.mxu0 0.0
    %1807 = vmatprep.subr.mxu0 0.0
    %1808 = vmatpush1.msra.mxu0 0.0
    %1809 = vmatprep.subr.mxu0 0.0
    %1810 = vmatpush1.msra.mxu0 0.0
    %1811 = vmatprep.subr.mxu0 0.0
    %1812 = vmatpush1.msra.mxu0 0.0
    %1813 = vmatprep.mubr.f32.mxu0 0.0
    %1814 = vmatmul.mubr.f32.gmra.mrb[0].mxu0 %v1744
    %v1815 = vpop.f32.mrb[0].mxu0
    %v1816 = vadd.f32 0.0, %v1815
    %v1817 = vpop.f32.mrb[0].mxu0
    %1818 = vmatprep.mubr.f32.mxu0 0.0
    %1819 = vmatmul.mubr.f32.gmra.mrb[0].mxu0 %v1747
    %v1820 = vpop.f32.mrb[0].mxu0
    %v1821 = vadd.f32 0.0, %v1820
    %v1822 = vpop.f32.mrb[0].mxu0
    %1823 = vdwg.mxu0
    %1826 = vrot.lane.b32.xlu0 %v1816, 64
    %v1827 = vpop.permute.xlu0 %1826
    %1828 = vrot.lane.b32.xlu0 %v1821, 64
    %v1829 = vpop.permute.xlu0 %1828
    %1832 = vst.msk [vmem:[#allocation4 + $0x10] sm:$0xff] %vm1016, %v1827
    %1833 = vst.msk [vmem:[#allocation4 + $0x18] sm:$0xff] %vm1016, %v1829
    %v1834 = vld [vmem:[%s1227] sm:$0xff]
    %v1835 = vld [vmem:[%s1229] sm:$0xff]
    %1836 = vrot.lane.b32.xlu0 %v408, 32
    %v1837 = vpop.permute.xlu0 %1836
    %1838 = vrot.lane.b32.xlu0 %v409, 32
    %v1839 = vpop.permute.xlu0 %1838
    %1841 = vrot.lane.b32.xlu0 %v1834, 32
    %v1842 = vpop.permute.xlu0 %1841
    %v1843 = vsel %vm412, %v1837, 0
    %v1845 = vsel %vm412, %v1839, 0
    %v1847 = vsel %vm412, %v1842, 0
    %1849 = vmatprep.subr.mxu0 0.0
    %1850 = vmatpush1.xpose.msra.mxu0 %v1847
    %1851 = vmatprep.subr.mxu0 0.0
    %1852 = vmatpush1.xpose.msra.mxu0 0.0
    %1853 = vmatprep.subr.mxu0 0.0
    %1854 = vmatpush1.xpose.msra.mxu0 0.0
    %1855 = vmatprep.subr.mxu0 0.0
    %1856 = vmatpush1.xpose.msra.mxu0 0.0
    %1857 = vmatprep.subr.mxu0 0.0
    %1858 = vmatpush1.xpose.msra.mxu0 0.0
    %1859 = vmatprep.subr.mxu0 0.0
    %1860 = vmatpush1.xpose.msra.mxu0 0.0
    %1861 = vmatprep.subr.mxu0 0.0
    %1862 = vmatpush1.xpose.msra.mxu0 0.0
    %1863 = vmatprep.subr.mxu0 0.0
    %1864 = vmatpush1.xpose.msra.mxu0 0.0
    %1865 = vmatprep.subr.mxu0 0.0
    %1866 = vmatpush1.xpose.msra.mxu0 0.0
    %1867 = vmatprep.subr.mxu0 0.0
    %1868 = vmatpush1.xpose.msra.mxu0 0.0
    %1869 = vmatprep.subr.mxu0 0.0
    %1870 = vmatpush1.xpose.msra.mxu0 0.0
    %1871 = vmatprep.subr.mxu0 0.0
    %1872 = vmatpush1.xpose.msra.mxu0 0.0
    %1873 = vmatprep.subr.mxu0 0.0
    %1874 = vmatpush1.xpose.msra.mxu0 0.0
    %1875 = vmatprep.subr.mxu0 0.0
    %1876 = vmatpush1.xpose.msra.mxu0 0.0
    %1877 = vmatprep.subr.mxu0 0.0
    %1878 = vmatpush1.xpose.msra.mxu0 0.0
    %1879 = vmatprep.subr.mxu0 0.0
    %1880 = vmatpush1.xpose.msra.mxu0 0.0
    %1881 = vmatprep.subr.mxu0 0.0
    %1882 = vmatpush1.xpose.msra.mxu0 0.0
    %1883 = vmatprep.subr.mxu0 0.0
    %1884 = vmatpush1.xpose.msra.mxu0 0.0
    %1885 = vmatprep.subr.mxu0 0.0
    %1886 = vmatpush1.xpose.msra.mxu0 0.0
    %1887 = vmatprep.subr.mxu0 0.0
    %1888 = vmatpush1.xpose.msra.mxu0 0.0
    %1889 = vmatprep.subr.mxu0 0.0
    %1890 = vmatpush1.xpose.msra.mxu0 0.0
    %1891 = vmatprep.subr.mxu0 0.0
    %1892 = vmatpush1.xpose.msra.mxu0 0.0
    %1893 = vmatprep.subr.mxu0 0.0
    %1894 = vmatpush1.xpose.msra.mxu0 0.0
    %1895 = vmatprep.subr.mxu0 0.0
    %1896 = vmatpush1.xpose.msra.mxu0 0.0
    %1897 = vmatprep.subr.mxu0 0.0
    %1898 = vmatpush1.xpose.msra.mxu0 0.0
    %1899 = vmatprep.subr.mxu0 0.0
    %1900 = vmatpush1.xpose.msra.mxu0 0.0
    %1901 = vmatprep.subr.mxu0 0.0
    %1902 = vmatpush1.xpose.msra.mxu0 0.0
    %1903 = vmatprep.subr.mxu0 0.0
    %1904 = vmatpush1.xpose.msra.mxu0 0.0
    %1905 = vmatprep.subr.mxu0 0.0
    %1906 = vmatpush1.xpose.msra.mxu0 0.0
    %1907 = vmatprep.subr.mxu0 0.0
    %1908 = vmatpush1.xpose.msra.mxu0 0.0
    %1909 = vmatprep.subr.mxu0 0.0
    %1910 = vmatpush1.xpose.msra.mxu0 0.0
    %1911 = vmatprep.subr.mxu0 0.0
    %1912 = vmatpush1.xpose.msra.mxu0 0.0
    %1913 = vmatprep.mubr.f32.mxu0 0.0
    %1914 = vmatmul.mubr.f32.gmra.mrb[0].mxu0 %v1843
    %v1915 = vpop.f32.mrb[0].mxu0
    %v1916 = vadd.f32 0.0, %v1915
    %v1917 = vpop.f32.mrb[0].mxu0
    %1918 = vmatprep.mubr.f32.mxu0 0.0
    %1919 = vmatmul.mubr.f32.gmra.mrb[0].mxu0 %v1845
    %v1920 = vpop.f32.mrb[0].mxu0
    %v1921 = vadd.f32 0.0, %v1920
    %v1922 = vpop.f32.mrb[0].mxu0
    %1923 = vdwg.mxu0
    %v1924 = vsel %vm497, %v1916, -inf
    %1925 = vmax.xlane.f32.xlu0 %v1924
    %v1926 = vpop.xlane.xlu0 %1925
    %v1927 = vsel %vm497, %v1921, -inf
    %1928 = vmax.xlane.f32.xlu0 %v1927
    %v1929 = vpop.xlane.xlu0 %1928
    %v1930 = vsub.f32 %v1916, %v1926
    %v1931 = vsub.f32 %v1921, %v1929
    %v1932 = vmul.f32 %v1930, 1.442695
    %v1933 = vpow.pop %v1932
    %v1934 = vmul.f32 %v1931, 1.442695
    %v1935 = vpow.pop %v1934
    %v1936 = vsel %vm497, %v1933, 0.0
    %1937 = vadd.xlane.f32.xlu0 %v1936
    %v1938 = vpop.xlane.xlu0 %1937
    %v1939 = vsel %vm497, %v1935, 0.0
    %1940 = vadd.xlane.f32.xlu0 %v1939
    %v1941 = vpop.xlane.xlu0 %1940
    %v1942 = vrcp.pop %v1938
    %v1943 = vrcp.pop %v1941
    %v1944 = vmul.f32 %v1933, %v1942
    %v1945 = vmul.f32 %v1935, %v1943
    %1947 = vrot.lane.b32.xlu0 %v1835, 32
    %v1948 = vpop.permute.xlu0 %1947
    %v1951 = vsel %vm497, %v1944, 0
    %v1954 = vsel %vm497, %v1945, 0
    %1956 = vmatprep.subr.mxu0 0.0
    %1957 = vmatpush1.msra.mxu0 %v1948
    %1958 = vmatprep.subr.mxu0 0.0
    %1959 = vmatpush1.msra.mxu0 0.0
    %1960 = vmatprep.subr.mxu0 0.0
    %1961 = vmatpush1.msra.mxu0 0.0
    %1962 = vmatprep.subr.mxu0 0.0
    %1963 = vmatpush1.msra.mxu0 0.0
    %1964 = vmatprep.subr.mxu0 0.0
    %1965 = vmatpush1.msra.mxu0 0.0
    %1966 = vmatprep.subr.mxu0 0.0
    %1967 = vmatpush1.msra.mxu0 0.0
    %1968 = vmatprep.subr.mxu0 0.0
    %1969 = vmatpush1.msra.mxu0 0.0
    %1970 = vmatprep.subr.mxu0 0.0
    %1971 = vmatpush1.msra.mxu0 0.0
    %1972 = vmatprep.subr.mxu0 0.0
    %1973 = vmatpush1.msra.mxu0 0.0
    %1974 = vmatprep.subr.mxu0 0.0
    %1975 = vmatpush1.msra.mxu0 0.0
    %1976 = vmatprep.subr.mxu0 0.0
    %1977 = vmatpush1.msra.mxu0 0.0
    %1978 = vmatprep.subr.mxu0 0.0
    %1979 = vmatpush1.msra.mxu0 0.0
    %1980 = vmatprep.subr.mxu0 0.0
    %1981 = vmatpush1.msra.mxu0 0.0
    %1982 = vmatprep.subr.mxu0 0.0
    %1983 = vmatpush1.msra.mxu0 0.0
    %1984 = vmatprep.subr.mxu0 0.0
    %1985 = vmatpush1.msra.mxu0 0.0
    %1986 = vmatprep.subr.mxu0 0.0
    %1987 = vmatpush1.msra.mxu0 0.0
    %1988 = vmatprep.subr.mxu0 0.0
    %1989 = vmatpush1.msra.mxu0 0.0
    %1990 = vmatprep.subr.mxu0 0.0
    %1991 = vmatpush1.msra.mxu0 0.0
    %1992 = vmatprep.subr.mxu0 0.0
    %1993 = vmatpush1.msra.mxu0 0.0
    %1994 = vmatprep.subr.mxu0 0.0
    %1995 = vmatpush1.msra.mxu0 0.0
    %1996 = vmatprep.subr.mxu0 0.0
    %1997 = vmatpush1.msra.mxu0 0.0
    %1998 = vmatprep.subr.mxu0 0.0
    %1999 = vmatpush1.msra.mxu0 0.0
    %2000 = vmatprep.subr.mxu0 0.0
    %2001 = vmatpush1.msra.mxu0 0.0
    %2002 = vmatprep.subr.mxu0 0.0
    %2003 = vmatpush1.msra.mxu0 0.0
    %2004 = vmatprep.subr.mxu0 0.0
    %2005 = vmatpush1.msra.mxu0 0.0
    %2006 = vmatprep.subr.mxu0 0.0
    %2007 = vmatpush1.msra.mxu0 0.0
    %2008 = vmatprep.subr.mxu0 0.0
    %2009 = vmatpush1.msra.mxu0 0.0
    %2010 = vmatprep.subr.mxu0 0.0
    %2011 = vmatpush1.msra.mxu0 0.0
    %2012 = vmatprep.subr.mxu0 0.0
    %2013 = vmatpush1.msra.mxu0 0.0
    %2014 = vmatprep.subr.mxu0 0.0
    %2015 = vmatpush1.msra.mxu0 0.0
    %2016 = vmatprep.subr.mxu0 0.0
    %2017 = vmatpush1.msra.mxu0 0.0
    %2018 = vmatprep.subr.mxu0 0.0
    %2019 = vmatpush1.msra.mxu0 0.0
    %2020 = vmatprep.mubr.f32.mxu0 0.0
    %2021 = vmatmul.mubr.f32.gmra.mrb[0].mxu0 %v1951
    %v2022 = vpop.f32.mrb[0].mxu0
    %v2023 = vadd.f32 0.0, %v2022
    %v2024 = vpop.f32.mrb[0].mxu0
    %2025 = vmatprep.mubr.f32.mxu0 0.0
    %2026 = vmatmul.mubr.f32.gmra.mrb[0].mxu0 %v1954
    %v2027 = vpop.f32.mrb[0].mxu0
    %v2028 = vadd.f32 0.0, %v2027
    %v2029 = vpop.f32.mrb[0].mxu0
    %2030 = vdwg.mxu0
    %2033 = vrot.lane.b32.xlu0 %v2023, 96
    %v2034 = vpop.permute.xlu0 %2033
    %2035 = vrot.lane.b32.xlu0 %v2028, 96
    %v2036 = vpop.permute.xlu0 %2035
    %2039 = vst.msk [vmem:[#allocation4 + $0x10] sm:$0xff] %vm1224, %v2034
    %2040 = vst.msk [vmem:[#allocation4 + $0x18] sm:$0xff] %vm1224, %v2036
    %v2041 = vld [vmem:[#allocation4] sm:$0xff]
    %v2042 = vld [vmem:[#allocation4 + $0x8] sm:$0xff]
    %v2043 = vld [vmem:[#allocation4 + $0x10] sm:$0xff]
    %v2044 = vld [vmem:[#allocation4 + $0x18] sm:$0xff]
    %v2045 = vld [vmem:[#allocation14] sm:$0xff]
    %v2046 = vld [vmem:[#allocation14 + $0x8] sm:$0xff]
    %v2047 = vld [vmem:[#allocation14 + $0x10] sm:$0xff]
    %v2048 = vld [vmem:[#allocation14 + $0x18] sm:$0xff]
    %v2049 = vld [vmem:[#allocation14 + $0x20] sm:$0xff]
    %v2050 = vld [vmem:[#allocation14 + $0x28] sm:$0xff]
    %v2051 = vld [vmem:[#allocation14 + $0x30] sm:$0xff]
    %v2052 = vld [vmem:[#allocation14 + $0x38] sm:$0xff]
    %v2053 = vld [vmem:[#allocation14 + $0x40] sm:$0xff]
    %v2054 = vld [vmem:[#allocation14 + $0x48] sm:$0xff]
    %v2055 = vld [vmem:[#allocation14 + $0x50] sm:$0xff]
    %v2056 = vld [vmem:[#allocation14 + $0x58] sm:$0xff]
    %v2057 = vld [vmem:[#allocation14 + $0x60] sm:$0xff]
    %v2058 = vld [vmem:[#allocation14 + $0x68] sm:$0xff]
    %v2059 = vld [vmem:[#allocation14 + $0x70] sm:$0xff]
    %v2060 = vld [vmem:[#allocation14 + $0x78] sm:$0xff]
    %v2061 = vld [vmem:[%s6] sm:$0x1]
    %v2063 = vlaneseq
    %v2064 = vshrl.u32 %v2063, 7
    %v2065 = vsub.s32 0, %v2064
    %v2066 = vrot.slane %v2061, %v2065
    %2068 = vmatprep.subr.mxu0 0.0
    %2069 = vmatpush1.msra.mxu0 %v2045
    %2070 = vmatprep.subr.mxu0 0.0
    %2071 = vmatpush1.msra.mxu0 %v2046
    %2072 = vmatprep.subr.mxu0 0.0
    %2073 = vmatpush1.msra.mxu0 %v2047
    %2074 = vmatprep.subr.mxu0 0.0
    %2075 = vmatpush1.msra.mxu0 %v2048
    %2076 = vmatprep.subr.mxu0 0.0
    %2077 = vmatpush1.msra.mxu0 %v2049
    %2078 = vmatprep.subr.mxu0 0.0
    %2079 = vmatpush1.msra.mxu0 %v2050
    %2080 = vmatprep.subr.mxu0 0.0
    %2081 = vmatpush1.msra.mxu0 %v2051
    %2082 = vmatprep.subr.mxu0 0.0
    %2083 = vmatpush1.msra.mxu0 %v2052
    %2084 = vmatprep.subr.mxu0 0.0
    %2085 = vmatpush1.msra.mxu0 %v2053
    %2086 = vmatprep.subr.mxu0 0.0
    %2087 = vmatpush1.msra.mxu0 %v2054
    %2088 = vmatprep.subr.mxu0 0.0
    %2089 = vmatpush1.msra.mxu0 %v2055
    %2090 = vmatprep.subr.mxu0 0.0
    %2091 = vmatpush1.msra.mxu0 %v2056
    %2092 = vmatprep.subr.mxu0 0.0
    %2093 = vmatpush1.msra.mxu0 %v2057
    %2094 = vmatprep.subr.mxu0 0.0
    %2095 = vmatpush1.msra.mxu0 %v2058
    %2096 = vmatprep.subr.mxu0 0.0
    %2097 = vmatpush1.msra.mxu0 %v2059
    %2098 = vmatprep.subr.mxu0 0.0
    %2099 = vmatpush1.msra.mxu0 %v2060
    %2100 = vmatprep.subr.mxu0 0.0
    %2101 = vmatpush1.msra.mxu0 0.0
    %2102 = vmatprep.subr.mxu0 0.0
    %2103 = vmatpush1.msra.mxu0 0.0
    %2104 = vmatprep.subr.mxu0 0.0
    %2105 = vmatpush1.msra.mxu0 0.0
    %2106 = vmatprep.subr.mxu0 0.0
    %2107 = vmatpush1.msra.mxu0 0.0
    %2108 = vmatprep.subr.mxu0 0.0
    %2109 = vmatpush1.msra.mxu0 0.0
    %2110 = vmatprep.subr.mxu0 0.0
    %2111 = vmatpush1.msra.mxu0 0.0
    %2112 = vmatprep.subr.mxu0 0.0
    %2113 = vmatpush1.msra.mxu0 0.0
    %2114 = vmatprep.subr.mxu0 0.0
    %2115 = vmatpush1.msra.mxu0 0.0
    %2116 = vmatprep.subr.mxu0 0.0
    %2117 = vmatpush1.msra.mxu0 0.0
    %2118 = vmatprep.subr.mxu0 0.0
    %2119 = vmatpush1.msra.mxu0 0.0
    %2120 = vmatprep.subr.mxu0 0.0
    %2121 = vmatpush1.msra.mxu0 0.0
    %2122 = vmatprep.subr.mxu0 0.0
    %2123 = vmatpush1.msra.mxu0 0.0
    %2124 = vmatprep.subr.mxu0 0.0
    %2125 = vmatpush1.msra.mxu0 0.0
    %2126 = vmatprep.subr.mxu0 0.0
    %2127 = vmatpush1.msra.mxu0 0.0
    %2128 = vmatprep.subr.mxu0 0.0
    %2129 = vmatpush1.msra.mxu0 0.0
    %2130 = vmatprep.subr.mxu0 0.0
    %2131 = vmatpush1.msra.mxu0 0.0
    %2132 = vmatprep.mubr.f32.mxu0 0.0
    %2133 = vmatmul.mubr.f32.gmra.mrb[0].mxu0 %v2041
    %v2134 = vpop.f32.mrb[0].mxu0
    %v2135 = vadd.f32 %v2066, %v2134
    %v2136 = vpop.f32.mrb[0].mxu0
    %2137 = vmatprep.mubr.f32.mxu0 0.0
    %2138 = vmatmul.mubr.f32.gmra.mrb[0].mxu0 %v2042
    %v2139 = vpop.f32.mrb[0].mxu0
    %v2140 = vadd.f32 %v2066, %v2139
    %v2141 = vpop.f32.mrb[0].mxu0
    %2142 = vmatprep.mubr.f32.mxu0 0.0
    %2143 = vmatmul.mubr.f32.gmra.mrb[0].mxu0 %v2043
    %v2144 = vpop.f32.mrb[0].mxu0
    %v2145 = vadd.f32 %v2066, %v2144
    %v2146 = vpop.f32.mrb[0].mxu0
    %2147 = vmatprep.mubr.f32.mxu0 0.0
    %2148 = vmatmul.mubr.f32.gmra.mrb[0].mxu0 %v2044
    %v2149 = vpop.f32.mrb[0].mxu0
    %v2150 = vadd.f32 %v2066, %v2149
    %v2151 = vpop.f32.mrb[0].mxu0
    %2152 = vdwg.mxu0
    %2153 = vst [vmem:[#allocation16] sm:$0xff] %v2135
    %2154 = vst [vmem:[#allocation16 + $0x8] sm:$0xff] %v2140
    %2155 = vst [vmem:[#allocation16 + $0x10] sm:$0xff] %v2145
    %2156 = vst [vmem:[#allocation16 + $0x18] sm:$0xff] %v2150
    // Predicated region
    $region58: #{tpu_custom_call.1} parent=1 // pred_check
      _
    $region59: #{tpu_custom_call.1} parent=1 // pred_check_branch
      %2158 = sbr.rel (0) target = $region61
    $region60: #{tpu_custom_call.1} parent=1 // pred_region
      %s2160 = ssub.s32 512, 512
      %2161 = vsyncadd [#allocation7], %s2160
      %s2162 = sshll.u32 [#allocation16], 4
      %s2163 = int_to_ptr.vmem [resolvable:$true] %s2162
      %2168 = dma.vmem_to_hbm [thread:$0]  %s2163, 512, %s7, [#allocation7], 128, 128, 8
    $region61: #{tpu_custom_call.1} parent=1 // pred_fallthru
      _
    // Predicated region
    $region62: #{tpu_custom_call.1} parent=1 // pred_check
      _
    $region63: #{tpu_custom_call.1} parent=1 // pred_check_branch
      %2170 = sbr.rel (0) target = $region65
    $region64: #{tpu_custom_call.1} parent=1 // pred_region
      %2171 = dma.done [#allocation7], 512
    $region65: #{tpu_custom_call.1} parent=1 // pred_fallthru
      _
    %2172 = vsyncpa [#allocation6], 1
    %2173 = vsyncpa [#allocation9], 1
    %2174 = vsyncpa [#allocation12], 1
    %2175 = vsyncpa [#allocation15], 1
    %2176 = vsyncpa [#allocation7], 1

// kernel: tpu_custom_call.1
$region0: #{tpu_custom_call.1}
  #allocation0 [shape = 'u32[]', space=smem, size = 0x4, offset = 0x4, fixed_abs, tag = 'smem constant byte address 0x4 - core index']
  #allocation1 [shape = 'u32[144,128]{1,0:T(1,128)}', space=vmem, size = 0x12000, scoped, tag = 'internal scratch']
  #allocation2 [shape = 'f32[2,8,128]{2,1,0:T(8,128)}', space=vmem, size = 0x2000, scoped, tag = 'scratch operand']
  #allocation3 [shape = 'f32[2,8,128]{2,1,0:T(8,128)}', space=vmem, size = 0x2000, scoped, tag = 'scratch operand']
  #allocation4 [shape = 'f32[32,128]{1,0:T(8,128)}', space=vmem, size = 0x4000, scoped, tag = 'scratch operand']
  %s0 = inlined_call_operand.hbm [shape: f32[2,16,128], index: 0, kind: input, shape index: {}]
  %s1 = inlined_call_operand.hbm [shape: f32[2,8,128], index: 1, kind: input, shape index: {}]
  %s2 = inlined_call_operand.hbm [shape: f32[128,128], index: 2, kind: input, shape index: {}]
  %s3 = inlined_call_operand.hbm [shape: f32[128,128], index: 3, kind: input, shape index: {}]
  %s4 = inlined_call_operand.hbm [shape: f32[128,128], index: 4, kind: input, shape index: {}]
  %s5 = inlined_call_operand.hbm [shape: f32[128,128], index: 5, kind: input, shape index: {}]
  %s6 = inlined_call_operand.vmem [shape: f32[1,128], index: 6, kind: input, shape index: {}]
  %s7 = inlined_call_operand.hbm [shape: f32[2,16,128], index: 7, kind: output, shape index: {}]
  %s8 = sld [smem:[#allocation0]]
  $region66: #{tpu_custom_call.1} parent=0
    _
  %s10 = ssub.s32 1, %s8
  %s11 = scalar_select 0, %s10, %s8
  $region1: #{tpu_custom_call.1} parent=0
    #allocation5 [shape = 'u8[16384]{0}', space=vmem, size = 0x4000, scoped, tag = 'input window, operand 0, single buffered']
    #allocation6 [shape = 's32[1]{0}', space=sflag, size = 0x4, scoped, tag = 'scoped memory for tpu_custom_call.1']
    #allocation7 [shape = 's32[1]{0}', space=sflag, size = 0x4, scoped, tag = 'scoped memory for tpu_custom_call.1']
    #allocation8 [shape = 'u8[8192]{0}', space=vmem, size = 0x2000, scoped, tag = 'input window, operand 1, single buffered']
    #allocation9 [shape = 's32[1]{0}', space=sflag, size = 0x4, scoped, tag = 'scoped memory for tpu_custom_call.1']
    #allocation10 [shape = 'u8[65536]{0}', space=vmem, size = 0x10000, scoped, tag = 'input window, operand 2, single buffered']
    #allocation11 [shape = 'u8[65536]{0}', space=vmem, size = 0x10000, scoped, tag = 'input window, operand 3, single buffered']
    #allocation12 [shape = 's32[1]{0}', space=sflag, size = 0x4, scoped, tag = 'scoped memory for tpu_custom_call.1']
    #allocation13 [shape = 'u8[65536]{0}', space=vmem, size = 0x10000, scoped, tag = 'input window, operand 4, single buffered']
    #allocation14 [shape = 'u8[65536]{0}', space=vmem, size = 0x10000, scoped, tag = 'input window, operand 5, single buffered']
    #allocation15 [shape = 's32[1]{0}', space=sflag, size = 0x4, scoped, tag = 'scoped memory for tpu_custom_call.1']
    #allocation16 [shape = 'u8[16384]{0}', space=vmem, size = 0x4000, scoped, tag = 'output window, operand 0, single buffered']
    %12 = vsyncpa [#allocation6], 0
    %13 = vsyncpa [#allocation9], 0
    %14 = vsyncpa [#allocation12], 0
    %15 = vsyncpa [#allocation15], 0
    %16 = vsyncpa [#allocation7], 0
    // Predicated region
    $region2: #{tpu_custom_call.1} parent=1 // pred_check
      _
    $region3: #{tpu_custom_call.1} parent=1 // pred_check_branch
      %18 = sbr.rel (0) target = $region5
    $region4: #{tpu_custom_call.1} parent=1 // pred_region
      %s20 = ssub.s32 512, 512
      %21 = vsyncadd [#allocation6], %s20
      %s22 = sshll.u32 [#allocation5], 4
      %s23 = int_to_ptr.vmem [resolvable:$true] %s22
      %28 = dma.hbm_to_vmem [thread:$0]  %s0, 512, %s23, [#allocation6], 128, 128, 8
    $region5: #{tpu_custom_call.1} parent=1 // pred_fallthru
      _
    // Predicated region
    $region6: #{tpu_custom_call.1} parent=1 // pred_check
      _
    $region7: #{tpu_custom_call.1} parent=1 // pred_check_branch
      %30 = sbr.rel (0) target = $region9
    $region8: #{tpu_custom_call.1} parent=1 // pred_region
      %s32 = ssub.s32 256, 256
      %33 = vsyncadd [#allocation9], %s32
      %s34 = sshll.u32 [#allocation8], 4
      %s35 = int_to_ptr.vmem [resolvable:$true] %s34
      %40 = dma.hbm_to_vmem [thread:$0]  %s1, 256, %s35, [#allocation9], 128, 128, 8
    $region9: #{tpu_custom_call.1} parent=1 // pred_fallthru
      _
    // Predicated region
    $region10: #{tpu_custom_call.1} parent=1 // pred_check
      _
    $region11: #{tpu_custom_call.1} parent=1 // pred_check_branch
      %42 = sbr.rel (0) target = $region13
    $region12: #{tpu_custom_call.1} parent=1 // pred_region
      %s44 = ssub.s32 2048, 2048
      %45 = vsyncadd [#allocation9], %s44
      %s46 = sshll.u32 [#allocation10], 4
      %s47 = int_to_ptr.vmem [resolvable:$true] %s46
      %52 = dma.hbm_to_vmem [thread:$0]  %s2, 2048, %s47, [#allocation9], 128, 128, 8
    $region13: #{tpu_custom_call.1} parent=1 // pred_fallthru
      _
    // Predicated region
    $region14: #{tpu_custom_call.1} parent=1 // pred_check
      _
    $region15: #{tpu_custom_call.1} parent=1 // pred_check_branch
      %54 = sbr.rel (0) target = $region17
    $region16: #{tpu_custom_call.1} parent=1 // pred_region
      %s56 = ssub.s32 2048, 2048
      %57 = vsyncadd [#allocation12], %s56
      %s58 = sshll.u32 [#allocation11], 4
      %s59 = int_to_ptr.vmem [resolvable:$true] %s58
      %64 = dma.hbm_to_vmem [thread:$0]  %s3, 2048, %s59, [#allocation12], 128, 128, 8
    $region17: #{tpu_custom_call.1} parent=1 // pred_fallthru
      _
    // Predicated region
    $region18: #{tpu_custom_call.1} parent=1 // pred_check
      _
    $region19: #{tpu_custom_call.1} parent=1 // pred_check_branch
      %66 = sbr.rel (0) target = $region21
    $region20: #{tpu_custom_call.1} parent=1 // pred_region
      %s68 = ssub.s32 2048, 2048
      %69 = vsyncadd [#allocation12], %s68
      %s70 = sshll.u32 [#allocation13], 4
      %s71 = int_to_ptr.vmem [resolvable:$true] %s70
      %76 = dma.hbm_to_vmem [thread:$0]  %s4, 2048, %s71, [#allocation12], 128, 128, 8
    $region21: #{tpu_custom_call.1} parent=1 // pred_fallthru
      _
    // Predicated region
    $region22: #{tpu_custom_call.1} parent=1 // pred_check
      _
    $region23: #{tpu_custom_call.1} parent=1 // pred_check_branch
      %78 = sbr.rel (0) target = $region25
    $region24: #{tpu_custom_call.1} parent=1 // pred_region
      %s80 = ssub.s32 2048, 2048
      %81 = vsyncadd [#allocation15], %s80
      %s82 = sshll.u32 [#allocation14], 4
      %s83 = int_to_ptr.vmem [resolvable:$true] %s82
      %88 = dma.hbm_to_vmem [thread:$0]  %s5, 2048, %s83, [#allocation15], 128, 128, 8
    $region25: #{tpu_custom_call.1} parent=1 // pred_fallthru
      _
    // Predicated region
    $region26: #{tpu_custom_call.1} parent=1 // pred_check
      _
    $region27: #{tpu_custom_call.1} parent=1 // pred_check_branch
      %90 = sbr.rel (0) target = $region29
    $region28: #{tpu_custom_call.1} parent=1 // pred_region
      _
    $region29: #{tpu_custom_call.1} parent=1 // pred_fallthru
      _
    // Predicated region
    $region30: #{tpu_custom_call.1} parent=1 // pred_check
      _
    $region31: #{tpu_custom_call.1} parent=1 // pred_check_branch
      %92 = sbr.rel (0) target = $region33
    $region32: #{tpu_custom_call.1} parent=1 // pred_region
      %93 = dma.done [#allocation6], 512
    $region33: #{tpu_custom_call.1} parent=1 // pred_fallthru
      _
    // Predicated region
    $region34: #{tpu_custom_call.1} parent=1 // pred_check
      _
    $region35: #{tpu_custom_call.1} parent=1 // pred_check_branch
      %95 = sbr.rel (0) target = $region37
    $region36: #{tpu_custom_call.1} parent=1 // pred_region
      %96 = dma.done [#allocation9], 256
    $region37: #{tpu_custom_call.1} parent=1 // pred_fallthru
      _
    // Predicated region
    $region38: #{tpu_custom_call.1} parent=1 // pred_check
      _
    $region39: #{tpu_custom_call.1} parent=1 // pred_check_branch
      %98 = sbr.rel (0) target = $region41
    $region40: #{tpu_custom_call.1} parent=1 // pred_region
      %99 = dma.done [#allocation9], 2048
    $region41: #{tpu_custom_call.1} parent=1 // pred_fallthru
      _
    // Predicated region
    $region42: #{tpu_custom_call.1} parent=1 // pred_check
      _
    $region43: #{tpu_custom_call.1} parent=1 // pred_check_branch
      %101 = sbr.rel (0) target = $region45
    $region44: #{tpu_custom_call.1} parent=1 // pred_region
      %102 = dma.done [#allocation12], 2048
    $region45: #{tpu_custom_call.1} parent=1 // pred_fallthru
      _
    // Predicated region
    $region46: #{tpu_custom_call.1} parent=1 // pred_check
      _
    $region47: #{tpu_custom_call.1} parent=1 // pred_check_branch
      %104 = sbr.rel (0) target = $region49
    $region48: #{tpu_custom_call.1} parent=1 // pred_region
      %105 = dma.done [#allocation12], 2048
    $region49: #{tpu_custom_call.1} parent=1 // pred_fallthru
      _
    // Predicated region
    $region50: #{tpu_custom_call.1} parent=1 // pred_check
      _
    $region51: #{tpu_custom_call.1} parent=1 // pred_check_branch
      %107 = sbr.rel (0) target = $region53
    $region52: #{tpu_custom_call.1} parent=1 // pred_region
      %108 = dma.done [#allocation15], 2048
    $region53: #{tpu_custom_call.1} parent=1 // pred_fallthru
      _
    %p109 = scmp.eq.s32.totalorder 0, 0
    // Predicated region
    $region54: #{tpu_custom_call.1} parent=1 // pred_check
      %p110 = pneg %p109
    $region55: #{tpu_custom_call.1} parent=1 // pred_check_branch
      %112 = sbr.rel (%p110) target = $region57
    $region56: #{tpu_custom_call.1} parent=1 // pred_region
      %v113 = vld [vmem:[#allocation8] sm:$0xff]
      %v114 = vld [vmem:[#allocation8 + $0x8] sm:$0xff]
      %v115 = vld [vmem:[#allocation11] sm:$0xff]
      %v116 = vld [vmem:[#allocation11 + $0x8] sm:$0xff]
      %v117 = vld [vmem:[#allocation11 + $0x10] sm:$0xff]
      %v118 = vld [vmem:[#allocation11 + $0x18] sm:$0xff]
      %v119 = vld [vmem:[#allocation11 + $0x20] sm:$0xff]
      %v120 = vld [vmem:[#allocation11 + $0x28] sm:$0xff]
      %v121 = vld [vmem:[#allocation11 + $0x30] sm:$0xff]
      %v122 = vld [vmem:[#allocation11 + $0x38] sm:$0xff]
      %v123 = vld [vmem:[#allocation11 + $0x40] sm:$0xff]
      %v124 = vld [vmem:[#allocation11 + $0x48] sm:$0xff]
      %v125 = vld [vmem:[#allocation11 + $0x50] sm:$0xff]
      %v126 = vld [vmem:[#allocation11 + $0x58] sm:$0xff]
      %v127 = vld [vmem:[#allocation11 + $0x60] sm:$0xff]
      %v128 = vld [vmem:[#allocation11 + $0x68] sm:$0xff]
      %v129 = vld [vmem:[#allocation11 + $0x70] sm:$0xff]
      %v130 = vld [vmem:[#allocation11 + $0x78] sm:$0xff]
      %131 = vmatprep.subr.mxu0 0.0
      %132 = vmatpush1.msra.mxu0 %v115
      %133 = vmatprep.subr.mxu0 0.0
      %134 = vmatpush1.msra.mxu0 %v116
      %135 = vmatprep.subr.mxu0 0.0
      %136 = vmatpush1.msra.mxu0 %v117
      %137 = vmatprep.subr.mxu0 0.0
      %138 = vmatpush1.msra.mxu0 %v118
      %139 = vmatprep.subr.mxu0 0.0
      %140 = vmatpush1.msra.mxu0 %v119
      %141 = vmatprep.subr.mxu0 0.0
      %142 = vmatpush1.msra.mxu0 %v120
      %143 = vmatprep.subr.mxu0 0.0
      %144 = vmatpush1.msra.mxu0 %v121
      %145 = vmatprep.subr.mxu0 0.0
      %146 = vmatpush1.msra.mxu0 %v122
      %147 = vmatprep.subr.mxu0 0.0
      %148 = vmatpush1.msra.mxu0 %v123
      %149 = vmatprep.subr.mxu0 0.0
      %150 = vmatpush1.msra.mxu0 %v124
      %151 = vmatprep.subr.mxu0 0.0
      %152 = vmatpush1.msra.mxu0 %v125
      %153 = vmatprep.subr.mxu0 0.0
      %154 = vmatpush1.msra.mxu0 %v126
      %155 = vmatprep.subr.mxu0 0.0
      %156 = vmatpush1.msra.mxu0 %v127
      %157 = vmatprep.subr.mxu0 0.0
      %158 = vmatpush1.msra.mxu0 %v128
      %159 = vmatprep.subr.mxu0 0.0
      %160 = vmatpush1.msra.mxu0 %v129
      %161 = vmatprep.subr.mxu0 0.0
      %162 = vmatpush1.msra.mxu0 %v130
      %163 = vmatprep.subr.mxu0 0.0
      %164 = vmatpush1.msra.mxu0 0.0
      %165 = vmatprep.subr.mxu0 0.0
      %166 = vmatpush1.msra.mxu0 0.0
      %167 = vmatprep.subr.mxu0 0.0
      %168 = vmatpush1.msra.mxu0 0.0
      %169 = vmatprep.subr.mxu0 0.0
      %170 = vmatpush1.msra.mxu0 0.0
      %171 = vmatprep.subr.mxu0 0.0
      %172 = vmatpush1.msra.mxu0 0.0
      %173 = vmatprep.subr.mxu0 0.0
      %174 = vmatpush1.msra.mxu0 0.0
      %175 = vmatprep.subr.mxu0 0.0
      %176 = vmatpush1.msra.mxu0 0.0
      %177 = vmatprep.subr.mxu0 0.0
      %178 = vmatpush1.msra.mxu0 0.0
      %179 = vmatprep.subr.mxu0 0.0
      %180 = vmatpush1.msra.mxu0 0.0
      %181 = vmatprep.subr.mxu0 0.0
      %182 = vmatpush1.msra.mxu0 0.0
      %183 = vmatprep.subr.mxu0 0.0
      %184 = vmatpush1.msra.mxu0 0.0
      %185 = vmatprep.subr.mxu0 0.0
      %186 = vmatpush1.msra.mxu0 0.0
      %187 = vmatprep.subr.mxu0 0.0
      %188 = vmatpush1.msra.mxu0 0.0
      %189 = vmatprep.subr.mxu0 0.0
      %190 = vmatpush1.msra.mxu0 0.0
      %191 = vmatprep.subr.mxu0 0.0
      %192 = vmatpush1.msra.mxu0 0.0
      %193 = vmatprep.subr.mxu0 0.0
      %194 = vmatpush1.msra.mxu0 0.0
      %195 = vmatprep.mubr.f32.mxu0 0.0
      %196 = vmatmul.mubr.f32.gmra.mrb[0].mxu0 %v113
      %v197 = vpop.f32.mrb[0].mxu0
      %v198 = vadd.f32 0.0, %v197
      %v199 = vpop.f32.mrb[0].mxu0
      %200 = vmatprep.mubr.f32.mxu0 0.0
      %201 = vmatmul.mubr.f32.gmra.mrb[0].mxu0 %v114
      %v202 = vpop.f32.mrb[0].mxu0
      %v203 = vadd.f32 0.0, %v202
      %v204 = vpop.f32.mrb[0].mxu0
      %205 = vdwg.mxu0
      %v206 = vld [vmem:[#allocation13] sm:$0xff]
      %v207 = vld [vmem:[#allocation13 + $0x8] sm:$0xff]
      %v208 = vld [vmem:[#allocation13 + $0x10] sm:$0xff]
      %v209 = vld [vmem:[#allocation13 + $0x18] sm:$0xff]
      %v210 = vld [vmem:[#allocation13 + $0x20] sm:$0xff]
      %v211 = vld [vmem:[#allocation13 + $0x28] sm:$0xff]
      %v212 = vld [vmem:[#allocation13 + $0x30] sm:$0xff]
      %v213 = vld [vmem:[#allocation13 + $0x38] sm:$0xff]
      %v214 = vld [vmem:[#allocation13 + $0x40] sm:$0xff]
      %v215 = vld [vmem:[#allocation13 + $0x48] sm:$0xff]
      %v216 = vld [vmem:[#allocation13 + $0x50] sm:$0xff]
      %v217 = vld [vmem:[#allocation13 + $0x58] sm:$0xff]
      %v218 = vld [vmem:[#allocation13 + $0x60] sm:$0xff]
      %v219 = vld [vmem:[#allocation13 + $0x68] sm:$0xff]
      %v220 = vld [vmem:[#allocation13 + $0x70] sm:$0xff]
      %v221 = vld [vmem:[#allocation13 + $0x78] sm:$0xff]
      %222 = vmatprep.subr.mxu0 0.0
      %223 = vmatpush1.msra.mxu0 %v206
      %224 = vmatprep.subr.mxu0 0.0
      %225 = vmatpush1.msra.mxu0 %v207
      %226 = vmatprep.subr.mxu0 0.0
      %227 = vmatpush1.msra.mxu0 %v208
      %228 = vmatprep.subr.mxu0 0.0
      %229 = vmatpush1.msra.mxu0 %v209
      %230 = vmatprep.subr.mxu0 0.0
      %231 = vmatpush1.msra.mxu0 %v210
      %232 = vmatprep.subr.mxu0 0.0
      %233 = vmatpush1.msra.mxu0 %v211
      %234 = vmatprep.subr.mxu0 0.0
      %235 = vmatpush1.msra.mxu0 %v212
      %236 = vmatprep.subr.mxu0 0.0
      %237 = vmatpush1.msra.mxu0 %v213
      %238 = vmatprep.subr.mxu0 0.0
      %239 = vmatpush1.msra.mxu0 %v214
      %240 = vmatprep.subr.mxu0 0.0
      %241 = vmatpush1.msra.mxu0 %v215
      %242 = vmatprep.subr.mxu0 0.0
      %243 = vmatpush1.msra.mxu0 %v216
      %244 = vmatprep.subr.mxu0 0.0
      %245 = vmatpush1.msra.mxu0 %v217
      %246 = vmatprep.subr.mxu0 0.0
      %247 = vmatpush1.msra.mxu0 %v218
      %248 = vmatprep.subr.mxu0 0.0
      %249 = vmatpush1.msra.mxu0 %v219
      %250 = vmatprep.subr.mxu0 0.0
      %251 = vmatpush1.msra.mxu0 %v220
      %252 = vmatprep.subr.mxu0 0.0
      %253 = vmatpush1.msra.mxu0 %v221
      %254 = vmatprep.subr.mxu0 0.0
      %255 = vmatpush1.msra.mxu0 0.0
      %256 = vmatprep.subr.mxu0 0.0
      %257 = vmatpush1.msra.mxu0 0.0
      %258 = vmatprep.subr.mxu0 0.0
      %259 = vmatpush1.msra.mxu0 0.0
      %260 = vmatprep.subr.mxu0 0.0
      %261 = vmatpush1.msra.mxu0 0.0
      %262 = vmatprep.subr.mxu0 0.0
      %263 = vmatpush1.msra.mxu0 0.0
      %264 = vmatprep.subr.mxu0 0.0
      %265 = vmatpush1.msra.mxu0 0.0
      %266 = vmatprep.subr.mxu0 0.0
      %267 = vmatpush1.msra.mxu0 0.0
      %268 = vmatprep.subr.mxu0 0.0
      %269 = vmatpush1.msra.mxu0 0.0
      %270 = vmatprep.subr.mxu0 0.0
      %271 = vmatpush1.msra.mxu0 0.0
      %272 = vmatprep.subr.mxu0 0.0
      %273 = vmatpush1.msra.mxu0 0.0
      %274 = vmatprep.subr.mxu0 0.0
      %275 = vmatpush1.msra.mxu0 0.0
      %276 = vmatprep.subr.mxu0 0.0
      %277 = vmatpush1.msra.mxu0 0.0
      %278 = vmatprep.subr.mxu0 0.0
      %279 = vmatpush1.msra.mxu0 0.0
      %280 = vmatprep.subr.mxu0 0.0
      %281 = vmatpush1.msra.mxu0 0.0
      %282 = vmatprep.subr.mxu0 0.0
      %283 = vmatpush1.msra.mxu0 0.0
      %284 = vmatprep.subr.mxu0 0.0
      %285 = vmatpush1.msra.mxu0 0.0
      %286 = vmatprep.mubr.f32.mxu0 0.0
      %287 = vmatmul.mubr.f32.gmra.mrb[0].mxu0 %v113
      %v288 = vpop.f32.mrb[0].mxu0
      %v289 = vadd.f32 0.0, %v288
      %v290 = vpop.f32.mrb[0].mxu0
      %291 = vmatprep.mubr.f32.mxu0 0.0
      %292 = vmatmul.mubr.f32.gmra.mrb[0].mxu0 %v114
      %v293 = vpop.f32.mrb[0].mxu0
      %v294 = vadd.f32 0.0, %v293
      %v295 = vpop.f32.mrb[0].mxu0
      %296 = vdwg.mxu0
      %297 = vst [vmem:[#allocation2] sm:$0xff] %v198
      %298 = vst [vmem:[#allocation2 + $0x8] sm:$0xff] %v203
      %299 = vst [vmem:[#allocation3] sm:$0xff] %v289
      %300 = vst [vmem:[#allocation3 + $0x8] sm:$0xff] %v294
    $region57: #{tpu_custom_call.1} parent=1 // pred_fallthru
      _
    %v301 = vld [vmem:[#allocation5] sm:$0xff]
    %v302 = vld [vmem:[#allocation5 + $0x8] sm:$0xff]
    %v303 = vld [vmem:[#allocation5 + $0x10] sm:$0xff]
    %v304 = vld [vmem:[#allocation5 + $0x18] sm:$0xff]
    %v305 = vld [vmem:[#allocation10] sm:$0xff]
    %v306 = vld [vmem:[#allocation10 + $0x8] sm:$0xff]
    %v307 = vld [vmem:[#allocation10 + $0x10] sm:$0xff]
    %v308 = vld [vmem:[#allocation10 + $0x18] sm:$0xff]
    %v309 = vld [vmem:[#allocation10 + $0x20] sm:$0xff]
    %v310 = vld [vmem:[#allocation10 + $0x28] sm:$0xff]
    %v311 = vld [vmem:[#allocation10 + $0x30] sm:$0xff]
    %v312 = vld [vmem:[#allocation10 + $0x38] sm:$0xff]
    %v313 = vld [vmem:[#allocation10 + $0x40] sm:$0xff]
    %v314 = vld [vmem:[#allocation10 + $0x48] sm:$0xff]
    %v315 = vld [vmem:[#allocation10 + $0x50] sm:$0xff]
    %v316 = vld [vmem:[#allocation10 + $0x58] sm:$0xff]
    %v317 = vld [vmem:[#allocation10 + $0x60] sm:$0xff]
    %v318 = vld [vmem:[#allocation10 + $0x68] sm:$0xff]
    %v319 = vld [vmem:[#allocation10 + $0x70] sm:$0xff]
    %v320 = vld [vmem:[#allocation10 + $0x78] sm:$0xff]
    %321 = vmatprep.subr.mxu0 0.0
    %322 = vmatpush1.msra.mxu0 %v305
    %323 = vmatprep.subr.mxu0 0.0
    %324 = vmatpush1.msra.mxu0 %v306
    %325 = vmatprep.subr.mxu0 0.0
    %326 = vmatpush1.msra.mxu0 %v307
    %327 = vmatprep.subr.mxu0 0.0
    %328 = vmatpush1.msra.mxu0 %v308
    %329 = vmatprep.subr.mxu0 0.0
    %330 = vmatpush1.msra.mxu0 %v309
    %331 = vmatprep.subr.mxu0 0.0
    %332 = vmatpush1.msra.mxu0 %v310
    %333 = vmatprep.subr.mxu0 0.0
    %334 = vmatpush1.msra.mxu0 %v311
    %335 = vmatprep.subr.mxu0 0.0
    %336 = vmatpush1.msra.mxu0 %v312
    %337 = vmatprep.subr.mxu0 0.0
    %338 = vmatpush1.msra.mxu0 %v313
    %339 = vmatprep.subr.mxu0 0.0
    %340 = vmatpush1.msra.mxu0 %v314
    %341 = vmatprep.subr.mxu0 0.0
    %342 = vmatpush1.msra.mxu0 %v315
    %343 = vmatprep.subr.mxu0 0.0
    %344 = vmatpush1.msra.mxu0 %v316
    %345 = vmatprep.subr.mxu0 0.0
    %346 = vmatpush1.msra.mxu0 %v317
    %347 = vmatprep.subr.mxu0 0.0
    %348 = vmatpush1.msra.mxu0 %v318
    %349 = vmatprep.subr.mxu0 0.0
    %350 = vmatpush1.msra.mxu0 %v319
    %351 = vmatprep.subr.mxu0 0.0
    %352 = vmatpush1.msra.mxu0 %v320
    %353 = vmatprep.subr.mxu0 0.0
    %354 = vmatpush1.msra.mxu0 0.0
    %355 = vmatprep.subr.mxu0 0.0
    %356 = vmatpush1.msra.mxu0 0.0
    %357 = vmatprep.subr.mxu0 0.0
    %358 = vmatpush1.msra.mxu0 0.0
    %359 = vmatprep.subr.mxu0 0.0
    %360 = vmatpush1.msra.mxu0 0.0
    %361 = vmatprep.subr.mxu0 0.0
    %362 = vmatpush1.msra.mxu0 0.0
    %363 = vmatprep.subr.mxu0 0.0
    %364 = vmatpush1.msra.mxu0 0.0
    %365 = vmatprep.subr.mxu0 0.0
    %366 = vmatpush1.msra.mxu0 0.0
    %367 = vmatprep.subr.mxu0 0.0
    %368 = vmatpush1.msra.mxu0 0.0
    %369 = vmatprep.subr.mxu0 0.0
    %370 = vmatpush1.msra.mxu0 0.0
    %371 = vmatprep.subr.mxu0 0.0
    %372 = vmatpush1.msra.mxu0 0.0
    %373 = vmatprep.subr.mxu0 0.0
    %374 = vmatpush1.msra.mxu0 0.0
    %375 = vmatprep.subr.mxu0 0.0
    %376 = vmatpush1.msra.mxu0 0.0
    %377 = vmatprep.subr.mxu0 0.0
    %378 = vmatpush1.msra.mxu0 0.0
    %379 = vmatprep.subr.mxu0 0.0
    %380 = vmatpush1.msra.mxu0 0.0
    %381 = vmatprep.subr.mxu0 0.0
    %382 = vmatpush1.msra.mxu0 0.0
    %383 = vmatprep.subr.mxu0 0.0
    %384 = vmatpush1.msra.mxu0 0.0
    %385 = vmatprep.mubr.f32.mxu0 0.0
    %386 = vmatmul.mubr.f32.gmra.mrb[0].mxu0 %v301
    %v387 = vpop.f32.mrb[0].mxu0
    %v388 = vadd.f32 0.0, %v387
    %v389 = vpop.f32.mrb[0].mxu0
    %390 = vmatprep.mubr.f32.mxu0 0.0
    %391 = vmatmul.mubr.f32.gmra.mrb[0].mxu0 %v302
    %v392 = vpop.f32.mrb[0].mxu0
    %v393 = vadd.f32 0.0, %v392
    %v394 = vpop.f32.mrb[0].mxu0
    %395 = vmatprep.mubr.f32.mxu0 0.0
    %396 = vmatmul.mubr.f32.gmra.mrb[0].mxu0 %v303
    %v397 = vpop.f32.mrb[0].mxu0
    %v398 = vadd.f32 0.0, %v397
    %v399 = vpop.f32.mrb[0].mxu0
    %400 = vmatprep.mubr.f32.mxu0 0.0
    %401 = vmatmul.mubr.f32.gmra.mrb[0].mxu0 %v304
    %v402 = vpop.f32.mrb[0].mxu0
    %v403 = vadd.f32 0.0, %v402
    %v404 = vpop.f32.mrb[0].mxu0
    %405 = vdwg.mxu0
    %v406 = vmul.f32 %v388, 0.17677669
    %v407 = vmul.f32 %v393, 0.17677669
    %v408 = vmul.f32 %v398, 0.17677669
    %v409 = vmul.f32 %v403, 0.17677669
    %v410 = vld [vmem:[#allocation2] sm:$0xff]
    %v411 = vld [vmem:[#allocation3] sm:$0xff]
    %vm412 = vcmask 261120
    %v414 = vsel %vm412, %v406, 0
    %v417 = vsel %vm412, %v407, 0
    %v420 = vsel %vm412, %v410, 0
    %422 = vmatprep.subr.mxu0 0.0
    %423 = vmatpush1.xpose.msra.mxu0 %v420
    %424 = vmatprep.subr.mxu0 0.0
    %425 = vmatpush1.xpose.msra.mxu0 0.0
    %426 = vmatprep.subr.mxu0 0.0
    %427 = vmatpush1.xpose.msra.mxu0 0.0
    %428 = vmatprep.subr.mxu0 0.0
    %429 = vmatpush1.xpose.msra.mxu0 0.0
    %430 = vmatprep.subr.mxu0 0.0
    %431 = vmatpush1.xpose.msra.mxu0 0.0
    %432 = vmatprep.subr.mxu0 0.0
    %433 = vmatpush1.xpose.msra.mxu0 0.0
    %434 = vmatprep.subr.mxu0 0.0
    %435 = vmatpush1.xpose.msra.mxu0 0.0
    %436 = vmatprep.subr.mxu0 0.0
    %437 = vmatpush1.xpose.msra.mxu0 0.0
    %438 = vmatprep.subr.mxu0 0.0
    %439 = vmatpush1.xpose.msra.mxu0 0.0
    %440 = vmatprep.subr.mxu0 0.0
    %441 = vmatpush1.xpose.msra.mxu0 0.0
    %442 = vmatprep.subr.mxu0 0.0
    %443 = vmatpush1.xpose.msra.mxu0 0.0
    %444 = vmatprep.subr.mxu0 0.0
    %445 = vmatpush1.xpose.msra.mxu0 0.0
    %446 = vmatprep.subr.mxu0 0.0
    %447 = vmatpush1.xpose.msra.mxu0 0.0
    %448 = vmatprep.subr.mxu0 0.0
    %449 = vmatpush1.xpose.msra.mxu0 0.0
    %450 = vmatprep.subr.mxu0 0.0
    %451 = vmatpush1.xpose.msra.mxu0 0.0
    %452 = vmatprep.subr.mxu0 0.0
    %453 = vmatpush1.xpose.msra.mxu0 0.0
    %454 = vmatprep.subr.mxu0 0.0
    %455 = vmatpush1.xpose.msra.mxu0 0.0
    %456 = vmatprep.subr.mxu0 0.0
    %457 = vmatpush1.xpose.msra.mxu0 0.0
    %458 = vmatprep.subr.mxu0 0.0
    %459 = vmatpush1.xpose.msra.mxu0 0.0
    %460 = vmatprep.subr.mxu0 0.0
    %461 = vmatpush1.xpose.msra.mxu0 0.0
    %462 = vmatprep.subr.mxu0 0.0
    %463 = vmatpush1.xpose.msra.mxu0 0.0
    %464 = vmatprep.subr.mxu0 0.0
    %465 = vmatpush1.xpose.msra.mxu0 0.0
    %466 = vmatprep.subr.mxu0 0.0
    %467 = vmatpush1.xpose.msra.mxu0 0.0
    %468 = vmatprep.subr.mxu0 0.0
    %469 = vmatpush1.xpose.msra.mxu0 0.0
    %470 = vmatprep.subr.mxu0 0.0
    %471 = vmatpush1.xpose.msra.mxu0 0.0
    %472 = vmatprep.subr.mxu0 0.0
    %473 = vmatpush1.xpose.msra.mxu0 0.0
    %474 = vmatprep.subr.mxu0 0.0
    %475 = vmatpush1.xpose.msra.mxu0 0.0
    %476 = vmatprep.subr.mxu0 0.0
    %477 = vmatpush1.xpose.msra.mxu0 0.0
    %478 = vmatprep.subr.mxu0 0.0
    %479 = vmatpush1.xpose.msra.mxu0 0.0
    %480 = vmatprep.subr.mxu0 0.0
    %481 = vmatpush1.xpose.msra.mxu0 0.0
    %482 = vmatprep.subr.mxu0 0.0
    %483 = vmatpush1.xpose.msra.mxu0 0.0
    %484 = vmatprep.subr.mxu0 0.0
    %485 = vmatpush1.xpose.msra.mxu0 0.0
    %486 = vmatprep.mubr.f32.mxu0 0.0
    %487 = vmatmul.mubr.f32.gmra.mrb[0].mxu0 %v414
    %v488 = vpop.f32.mrb[0].mxu0
    %v489 = vadd.f32 0.0, %v488
    %v490 = vpop.f32.mrb[0].mxu0
    %491 = vmatprep.mubr.f32.mxu0 0.0
    %492 = vmatmul.mubr.f32.gmra.mrb[0].mxu0 %v417
    %v493 = vpop.f32.mrb[0].mxu0
    %v494 = vadd.f32 0.0, %v493
    %v495 = vpop.f32.mrb[0].mxu0
    %496 = vdwg.mxu0
    %vm497 = vcmask 64512
    %v498 = vsel %vm497, %v489, -inf
    %499 = vmax.xlane.f32.xlu0 %v498
    %v500 = vpop.xlane.xlu0 %499
    %v501 = vsel %vm497, %v494, -inf
    %502 = vmax.xlane.f32.xlu0 %v501
    %v503 = vpop.xlane.xlu0 %502
    %v504 = vsub.f32 %v489, %v500
    %v505 = vsub.f32 %v494, %v503
    %v506 = vmul.f32 %v504, 1.442695
    %v507 = vpow.pop %v506
    %v508 = vmul.f32 %v505, 1.442695
    %v509 = vpow.pop %v508
    %v510 = vsel %vm497, %v507, 0.0
    %511 = vadd.xlane.f32.xlu0 %v510
    %v512 = vpop.xlane.xlu0 %511
    %v513 = vsel %vm497, %v509, 0.0
    %514 = vadd.xlane.f32.xlu0 %v513
    %v515 = vpop.xlane.xlu0 %514
    %v516 = vrcp.pop %v512
    %v517 = vrcp.pop %v515
    %v518 = vmul.f32 %v507, %v516
    %v519 = vmul.f32 %v509, %v517
    %v521 = vsel %vm497, %v518, 0
    %v524 = vsel %vm497, %v519, 0
    %526 = vmatprep.subr.mxu0 0.0
    %527 = vmatpush1.msra.mxu0 %v411
    %528 = vmatprep.subr.mxu0 0.0
    %529 = vmatpush1.msra.mxu0 0.0
    %530 = vmatprep.subr.mxu0 0.0
    %531 = vmatpush1.msra.mxu0 0.0
    %532 = vmatprep.subr.mxu0 0.0
    %533 = vmatpush1.msra.mxu0 0.0
    %534 = vmatprep.subr.mxu0 0.0
    %535 = vmatpush1.msra.mxu0 0.0
    %536 = vmatprep.subr.mxu0 0.0
    %537 = vmatpush1.msra.mxu0 0.0
    %538 = vmatprep.subr.mxu0 0.0
    %539 = vmatpush1.msra.mxu0 0.0
    %540 = vmatprep.subr.mxu0 0.0
    %541 = vmatpush1.msra.mxu0 0.0
    %542 = vmatprep.subr.mxu0 0.0
    %543 = vmatpush1.msra.mxu0 0.0
    %544 = vmatprep.subr.mxu0 0.0
    %545 = vmatpush1.msra.mxu0 0.0
    %546 = vmatprep.subr.mxu0 0.0
    %547 = vmatpush1.msra.mxu0 0.0
    %548 = vmatprep.subr.mxu0 0.0
    %549 = vmatpush1.msra.mxu0 0.0
    %550 = vmatprep.subr.mxu0 0.0
    %551 = vmatpush1.msra.mxu0 0.0
    %552 = vmatprep.subr.mxu0 0.0
    %553 = vmatpush1.msra.mxu0 0.0
    %554 = vmatprep.subr.mxu0 0.0
    %555 = vmatpush1.msra.mxu0 0.0
    %556 = vmatprep.subr.mxu0 0.0
    %557 = vmatpush1.msra.mxu0 0.0
    %558 = vmatprep.subr.mxu0 0.0
    %559 = vmatpush1.msra.mxu0 0.0
    %560 = vmatprep.subr.mxu0 0.0
    %561 = vmatpush1.msra.mxu0 0.0
    %562 = vmatprep.subr.mxu0 0.0
    %563 = vmatpush1.msra.mxu0 0.0
    %564 = vmatprep.subr.mxu0 0.0
    %565 = vmatpush1.msra.mxu0 0.0
    %566 = vmatprep.subr.mxu0 0.0
    %567 = vmatpush1.msra.mxu0 0.0
    %568 = vmatprep.subr.mxu0 0.0
    %569 = vmatpush1.msra.mxu0 0.0
    %570 = vmatprep.subr.mxu0 0.0
    %571 = vmatpush1.msra.mxu0 0.0
    %572 = vmatprep.subr.mxu0 0.0
    %573 = vmatpush1.msra.mxu0 0.0
    %574 = vmatprep.subr.mxu0 0.0
    %575 = vmatpush1.msra.mxu0 0.0
    %576 = vmatprep.subr.mxu0 0.0
    %577 = vmatpush1.msra.mxu0 0.0
    %578 = vmatprep.subr.mxu0 0.0
    %579 = vmatpush1.msra.mxu0 0.0
    %580 = vmatprep.subr.mxu0 0.0
    %581 = vmatpush1.msra.mxu0 0.0
    %582 = vmatprep.subr.mxu0 0.0
    %583 = vmatpush1.msra.mxu0 0.0
    %584 = vmatprep.subr.mxu0 0.0
    %585 = vmatpush1.msra.mxu0 0.0
    %586 = vmatprep.subr.mxu0 0.0
    %587 = vmatpush1.msra.mxu0 0.0
    %588 = vmatprep.subr.mxu0 0.0
    %589 = vmatpush1.msra.mxu0 0.0
    %590 = vmatprep.mubr.f32.mxu0 0.0
    %591 = vmatmul.mubr.f32.gmra.mrb[0].mxu0 %v521
    %v592 = vpop.f32.mrb[0].mxu0
    %v593 = vadd.f32 0.0, %v592
    %v594 = vpop.f32.mrb[0].mxu0
    %595 = vmatprep.mubr.f32.mxu0 0.0
    %596 = vmatmul.mubr.f32.gmra.mrb[0].mxu0 %v524
    %v597 = vpop.f32.mrb[0].mxu0
    %v598 = vadd.f32 0.0, %v597
    %v599 = vpop.f32.mrb[0].mxu0
    %600 = vdwg.mxu0
    %601 = vst.msk [vmem:[#allocation4] sm:$0xff] %vm412, %v593
    %602 = vst.msk [vmem:[#allocation4 + $0x8] sm:$0xff] %vm412, %v598
    %v603 = vld [vmem:[#allocation2] sm:$0xff]
    %v604 = vld [vmem:[#allocation3] sm:$0xff]
    %605 = vrot.lane.b32.xlu0 %v406, 96
    %v606 = vpop.permute.xlu0 %605
    %607 = vrot.lane.b32.xlu0 %v407, 96
    %v608 = vpop.permute.xlu0 %607
    %610 = vrot.lane.b32.xlu0 %v603, 96
    %v611 = vpop.permute.xlu0 %610
    %v612 = vsel %vm412, %v606, 0
    %v614 = vsel %vm412, %v608, 0
    %v616 = vsel %vm412, %v611, 0
    %618 = vmatprep.subr.mxu0 0.0
    %619 = vmatpush1.xpose.msra.mxu0 %v616
    %620 = vmatprep.subr.mxu0 0.0
    %621 = vmatpush1.xpose.msra.mxu0 0.0
    %622 = vmatprep.subr.mxu0 0.0
    %623 = vmatpush1.xpose.msra.mxu0 0.0
    %624 = vmatprep.subr.mxu0 0.0
    %625 = vmatpush1.xpose.msra.mxu0 0.0
    %626 = vmatprep.subr.mxu0 0.0
    %627 = vmatpush1.xpose.msra.mxu0 0.0
    %628 = vmatprep.subr.mxu0 0.0
    %629 = vmatpush1.xpose.msra.mxu0 0.0
    %630 = vmatprep.subr.mxu0 0.0
    %631 = vmatpush1.xpose.msra.mxu0 0.0
    %632 = vmatprep.subr.mxu0 0.0
    %633 = vmatpush1.xpose.msra.mxu0 0.0
    %634 = vmatprep.subr.mxu0 0.0
    %635 = vmatpush1.xpose.msra.mxu0 0.0
    %636 = vmatprep.subr.mxu0 0.0
    %637 = vmatpush1.xpose.msra.mxu0 0.0
    %638 = vmatprep.subr.mxu0 0.0
    %639 = vmatpush1.xpose.msra.mxu0 0.0
    %640 = vmatprep.subr.mxu0 0.0
    %641 = vmatpush1.xpose.msra.mxu0 0.0
    %642 = vmatprep.subr.mxu0 0.0
    %643 = vmatpush1.xpose.msra.mxu0 0.0
    %644 = vmatprep.subr.mxu0 0.0
    %645 = vmatpush1.xpose.msra.mxu0 0.0
    %646 = vmatprep.subr.mxu0 0.0
    %647 = vmatpush1.xpose.msra.mxu0 0.0
    %648 = vmatprep.subr.mxu0 0.0
    %649 = vmatpush1.xpose.msra.mxu0 0.0
    %650 = vmatprep.subr.mxu0 0.0
    %651 = vmatpush1.xpose.msra.mxu0 0.0
    %652 = vmatprep.subr.mxu0 0.0
    %653 = vmatpush1.xpose.msra.mxu0 0.0
    %654 = vmatprep.subr.mxu0 0.0
    %655 = vmatpush1.xpose.msra.mxu0 0.0
    %656 = vmatprep.subr.mxu0 0.0
    %657 = vmatpush1.xpose.msra.mxu0 0.0
    %658 = vmatprep.subr.mxu0 0.0
    %659 = vmatpush1.xpose.msra.mxu0 0.0
    %660 = vmatprep.subr.mxu0 0.0
    %661 = vmatpush1.xpose.msra.mxu0 0.0
    %662 = vmatprep.subr.mxu0 0.0
    %663 = vmatpush1.xpose.msra.mxu0 0.0
    %664 = vmatprep.subr.mxu0 0.0
    %665 = vmatpush1.xpose.msra.mxu0 0.0
    %666 = vmatprep.subr.mxu0 0.0
    %667 = vmatpush1.xpose.msra.mxu0 0.0
    %668 = vmatprep.subr.mxu0 0.0
    %669 = vmatpush1.xpose.msra.mxu0 0.0
    %670 = vmatprep.subr.mxu0 0.0
    %671 = vmatpush1.xpose.msra.mxu0 0.0
    %672 = vmatprep.subr.mxu0 0.0
    %673 = vmatpush1.xpose.msra.mxu0 0.0
    %674 = vmatprep.subr.mxu0 0.0
    %675 = vmatpush1.xpose.msra.mxu0 0.0
    %676 = vmatprep.subr.mxu0 0.0
    %677 = vmatpush1.xpose.msra.mxu0 0.0
    %678 = vmatprep.subr.mxu0 0.0
    %679 = vmatpush1.xpose.msra.mxu0 0.0
    %680 = vmatprep.subr.mxu0 0.0
    %681 = vmatpush1.xpose.msra.mxu0 0.0
    %682 = vmatprep.mubr.f32.mxu0 0.0
    %683 = vmatmul.mubr.f32.gmra.mrb[0].mxu0 %v612
    %v684 = vpop.f32.mrb[0].mxu0
    %v685 = vadd.f32 0.0, %v684
    %v686 = vpop.f32.mrb[0].mxu0
    %687 = vmatprep.mubr.f32.mxu0 0.0
    %688 = vmatmul.mubr.f32.gmra.mrb[0].mxu0 %v614
    %v689 = vpop.f32.mrb[0].mxu0
    %v690 = vadd.f32 0.0, %v689
    %v691 = vpop.f32.mrb[0].mxu0
    %692 = vdwg.mxu0
    %v693 = vsel %vm497, %v685, -inf
    %694 = vmax.xlane.f32.xlu0 %v693
    %v695 = vpop.xlane.xlu0 %694
    %v696 = vsel %vm497, %v690, -inf
    %697 = vmax.xlane.f32.xlu0 %v696
    %v698 = vpop.xlane.xlu0 %697
    %v699 = vsub.f32 %v685, %v695
    %v700 = vsub.f32 %v690, %v698
    %v701 = vmul.f32 %v699, 1.442695
    %v702 = vpow.pop %v701
    %v703 = vmul.f32 %v700, 1.442695
    %v704 = vpow.pop %v703
    %v705 = vsel %vm497, %v702, 0.0
    %706 = vadd.xlane.f32.xlu0 %v705
    %v707 = vpop.xlane.xlu0 %706
    %v708 = vsel %vm497, %v704, 0.0
    %709 = vadd.xlane.f32.xlu0 %v708
    %v710 = vpop.xlane.xlu0 %709
    %v711 = vrcp.pop %v707
    %v712 = vrcp.pop %v710
    %v713 = vmul.f32 %v702, %v711
    %v714 = vmul.f32 %v704, %v712
    %716 = vrot.lane.b32.xlu0 %v604, 96
    %v717 = vpop.permute.xlu0 %716
    %v720 = vsel %vm497, %v713, 0
    %v723 = vsel %vm497, %v714, 0
    %725 = vmatprep.subr.mxu0 0.0
    %726 = vmatpush1.msra.mxu0 %v717
    %727 = vmatprep.subr.mxu0 0.0
    %728 = vmatpush1.msra.mxu0 0.0
    %729 = vmatprep.subr.mxu0 0.0
    %730 = vmatpush1.msra.mxu0 0.0
    %731 = vmatprep.subr.mxu0 0.0
    %732 = vmatpush1.msra.mxu0 0.0
    %733 = vmatprep.subr.mxu0 0.0
    %734 = vmatpush1.msra.mxu0 0.0
    %735 = vmatprep.subr.mxu0 0.0
    %736 = vmatpush1.msra.mxu0 0.0
    %737 = vmatprep.subr.mxu0 0.0
    %738 = vmatpush1.msra.mxu0 0.0
    %739 = vmatprep.subr.mxu0 0.0
    %740 = vmatpush1.msra.mxu0 0.0
    %741 = vmatprep.subr.mxu0 0.0
    %742 = vmatpush1.msra.mxu0 0.0
    %743 = vmatprep.subr.mxu0 0.0
    %744 = vmatpush1.msra.mxu0 0.0
    %745 = vmatprep.subr.mxu0 0.0
    %746 = vmatpush1.msra.mxu0 0.0
    %747 = vmatprep.subr.mxu0 0.0
    %748 = vmatpush1.msra.mxu0 0.0
    %749 = vmatprep.subr.mxu0 0.0
    %750 = vmatpush1.msra.mxu0 0.0
    %751 = vmatprep.subr.mxu0 0.0
    %752 = vmatpush1.msra.mxu0 0.0
    %753 = vmatprep.subr.mxu0 0.0
    %754 = vmatpush1.msra.mxu0 0.0
    %755 = vmatprep.subr.mxu0 0.0
    %756 = vmatpush1.msra.mxu0 0.0
    %757 = vmatprep.subr.mxu0 0.0
    %758 = vmatpush1.msra.mxu0 0.0
    %759 = vmatprep.subr.mxu0 0.0
    %760 = vmatpush1.msra.mxu0 0.0
    %761 = vmatprep.subr.mxu0 0.0
    %762 = vmatpush1.msra.mxu0 0.0
    %763 = vmatprep.subr.mxu0 0.0
    %764 = vmatpush1.msra.mxu0 0.0
    %765 = vmatprep.subr.mxu0 0.0
    %766 = vmatpush1.msra.mxu0 0.0
    %767 = vmatprep.subr.mxu0 0.0
    %768 = vmatpush1.msra.mxu0 0.0
    %769 = vmatprep.subr.mxu0 0.0
    %770 = vmatpush1.msra.mxu0 0.0
    %771 = vmatprep.subr.mxu0 0.0
    %772 = vmatpush1.msra.mxu0 0.0
    %773 = vmatprep.subr.mxu0 0.0
    %774 = vmatpush1.msra.mxu0 0.0
    %775 = vmatprep.subr.mxu0 0.0
    %776 = vmatpush1.msra.mxu0 0.0
    %777 = vmatprep.subr.mxu0 0.0
    %778 = vmatpush1.msra.mxu0 0.0
    %779 = vmatprep.subr.mxu0 0.0
    %780 = vmatpush1.msra.mxu0 0.0
    %781 = vmatprep.subr.mxu0 0.0
    %782 = vmatpush1.msra.mxu0 0.0
    %783 = vmatprep.subr.mxu0 0.0
    %784 = vmatpush1.msra.mxu0 0.0
    %785 = vmatprep.subr.mxu0 0.0
    %786 = vmatpush1.msra.mxu0 0.0
    %787 = vmatprep.subr.mxu0 0.0
    %788 = vmatpush1.msra.mxu0 0.0
    %789 = vmatprep.mubr.f32.mxu0 0.0
    %790 = vmatmul.mubr.f32.gmra.mrb[0].mxu0 %v720
    %v791 = vpop.f32.mrb[0].mxu0
    %v792 = vadd.f32 0.0, %v791
    %v793 = vpop.f32.mrb[0].mxu0
    %794 = vmatprep.mubr.f32.mxu0 0.0
    %795 = vmatmul.mubr.f32.gmra.mrb[0].mxu0 %v723
    %v796 = vpop.f32.mrb[0].mxu0
    %v797 = vadd.f32 0.0, %v796
    %v798 = vpop.f32.mrb[0].mxu0
    %799 = vdwg.mxu0
    %802 = vrot.lane.b32.xlu0 %v792, 32
    %v803 = vpop.permute.xlu0 %802
    %804 = vrot.lane.b32.xlu0 %v797, 32
    %v805 = vpop.permute.xlu0 %804
    %vm808 = vcmask 523520
    %809 = vst.msk [vmem:[#allocation4] sm:$0xff] %vm808, %v803
    %810 = vst.msk [vmem:[#allocation4 + $0x8] sm:$0xff] %vm808, %v805
    %v811 = vld [vmem:[#allocation2] sm:$0xff]
    %v812 = vld [vmem:[#allocation3] sm:$0xff]
    %813 = vrot.lane.b32.xlu0 %v406, 64
    %v814 = vpop.permute.xlu0 %813
    %815 = vrot.lane.b32.xlu0 %v407, 64
    %v816 = vpop.permute.xlu0 %815
    %818 = vrot.lane.b32.xlu0 %v811, 64
    %v819 = vpop.permute.xlu0 %818
    %v820 = vsel %vm412, %v814, 0
    %v822 = vsel %vm412, %v816, 0
    %v824 = vsel %vm412, %v819, 0
    %826 = vmatprep.subr.mxu0 0.0
    %827 = vmatpush1.xpose.msra.mxu0 %v824
    %828 = vmatprep.subr.mxu0 0.0
    %829 = vmatpush1.xpose.msra.mxu0 0.0
    %830 = vmatprep.subr.mxu0 0.0
    %831 = vmatpush1.xpose.msra.mxu0 0.0
    %832 = vmatprep.subr.mxu0 0.0
    %833 = vmatpush1.xpose.msra.mxu0 0.0
    %834 = vmatprep.subr.mxu0 0.0
    %835 = vmatpush1.xpose.msra.mxu0 0.0
    %836 = vmatprep.subr.mxu0 0.0
    %837 = vmatpush1.xpose.msra.mxu0 0.0
    %838 = vmatprep.subr.mxu0 0.0
    %839 = vmatpush1.xpose.msra.mxu0 0.0
    %840 = vmatprep.subr.mxu0 0.0
    %841 = vmatpush1.xpose.msra.mxu0 0.0
    %842 = vmatprep.subr.mxu0 0.0
    %843 = vmatpush1.xpose.msra.mxu0 0.0
    %844 = vmatprep.subr.mxu0 0.0
    %845 = vmatpush1.xpose.msra.mxu0 0.0
    %846 = vmatprep.subr.mxu0 0.0
    %847 = vmatpush1.xpose.msra.mxu0 0.0
    %848 = vmatprep.subr.mxu0 0.0
    %849 = vmatpush1.xpose.msra.mxu0 0.0
    %850 = vmatprep.subr.mxu0 0.0
    %851 = vmatpush1.xpose.msra.mxu0 0.0
    %852 = vmatprep.subr.mxu0 0.0
    %853 = vmatpush1.xpose.msra.mxu0 0.0
    %854 = vmatprep.subr.mxu0 0.0
    %855 = vmatpush1.xpose.msra.mxu0 0.0
    %856 = vmatprep.subr.mxu0 0.0
    %857 = vmatpush1.xpose.msra.mxu0 0.0
    %858 = vmatprep.subr.mxu0 0.0
    %859 = vmatpush1.xpose.msra.mxu0 0.0
    %860 = vmatprep.subr.mxu0 0.0
    %861 = vmatpush1.xpose.msra.mxu0 0.0
    %862 = vmatprep.subr.mxu0 0.0
    %863 = vmatpush1.xpose.msra.mxu0 0.0
    %864 = vmatprep.subr.mxu0 0.0
    %865 = vmatpush1.xpose.msra.mxu0 0.0
    %866 = vmatprep.subr.mxu0 0.0
    %867 = vmatpush1.xpose.msra.mxu0 0.0
    %868 = vmatprep.subr.mxu0 0.0
    %869 = vmatpush1.xpose.msra.mxu0 0.0
    %870 = vmatprep.subr.mxu0 0.0
    %871 = vmatpush1.xpose.msra.mxu0 0.0
    %872 = vmatprep.subr.mxu0 0.0
    %873 = vmatpush1.xpose.msra.mxu0 0.0
    %874 = vmatprep.subr.mxu0 0.0
    %875 = vmatpush1.xpose.msra.mxu0 0.0
    %876 = vmatprep.subr.mxu0 0.0
    %877 = vmatpush1.xpose.msra.mxu0 0.0
    %878 = vmatprep.subr.mxu0 0.0
    %879 = vmatpush1.xpose.msra.mxu0 0.0
    %880 = vmatprep.subr.mxu0 0.0
    %881 = vmatpush1.xpose.msra.mxu0 0.0
    %882 = vmatprep.subr.mxu0 0.0
    %883 = vmatpush1.xpose.msra.mxu0 0.0
    %884 = vmatprep.subr.mxu0 0.0
    %885 = vmatpush1.xpose.msra.mxu0 0.0
    %886 = vmatprep.subr.mxu0 0.0
    %887 = vmatpush1.xpose.msra.mxu0 0.0
    %888 = vmatprep.subr.mxu0 0.0
    %889 = vmatpush1.xpose.msra.mxu0 0.0
    %890 = vmatprep.mubr.f32.mxu0 0.0
    %891 = vmatmul.mubr.f32.gmra.mrb[0].mxu0 %v820
    %v892 = vpop.f32.mrb[0].mxu0
    %v893 = vadd.f32 0.0, %v892
    %v894 = vpop.f32.mrb[0].mxu0
    %895 = vmatprep.mubr.f32.mxu0 0.0
    %896 = vmatmul.mubr.f32.gmra.mrb[0].mxu0 %v822
    %v897 = vpop.f32.mrb[0].mxu0
    %v898 = vadd.f32 0.0, %v897
    %v899 = vpop.f32.mrb[0].mxu0
    %900 = vdwg.mxu0
    %v901 = vsel %vm497, %v893, -inf
    %902 = vmax.xlane.f32.xlu0 %v901
    %v903 = vpop.xlane.xlu0 %902
    %v904 = vsel %vm497, %v898, -inf
    %905 = vmax.xlane.f32.xlu0 %v904
    %v906 = vpop.xlane.xlu0 %905
    %v907 = vsub.f32 %v893, %v903
    %v908 = vsub.f32 %v898, %v906
    %v909 = vmul.f32 %v907, 1.442695
    %v910 = vpow.pop %v909
    %v911 = vmul.f32 %v908, 1.442695
    %v912 = vpow.pop %v911
    %v913 = vsel %vm497, %v910, 0.0
    %914 = vadd.xlane.f32.xlu0 %v913
    %v915 = vpop.xlane.xlu0 %914
    %v916 = vsel %vm497, %v912, 0.0
    %917 = vadd.xlane.f32.xlu0 %v916
    %v918 = vpop.xlane.xlu0 %917
    %v919 = vrcp.pop %v915
    %v920 = vrcp.pop %v918
    %v921 = vmul.f32 %v910, %v919
    %v922 = vmul.f32 %v912, %v920
    %924 = vrot.lane.b32.xlu0 %v812, 64
    %v925 = vpop.permute.xlu0 %924
    %v928 = vsel %vm497, %v921, 0
    %v931 = vsel %vm497, %v922, 0
    %933 = vmatprep.subr.mxu0 0.0
    %934 = vmatpush1.msra.mxu0 %v925
    %935 = vmatprep.subr.mxu0 0.0
    %936 = vmatpush1.msra.mxu0 0.0
    %937 = vmatprep.subr.mxu0 0.0
    %938 = vmatpush1.msra.mxu0 0.0
    %939 = vmatprep.subr.mxu0 0.0
    %940 = vmatpush1.msra.mxu0 0.0
    %941 = vmatprep.subr.mxu0 0.0
    %942 = vmatpush1.msra.mxu0 0.0
    %943 = vmatprep.subr.mxu0 0.0
    %944 = vmatpush1.msra.mxu0 0.0
    %945 = vmatprep.subr.mxu0 0.0
    %946 = vmatpush1.msra.mxu0 0.0
    %947 = vmatprep.subr.mxu0 0.0
    %948 = vmatpush1.msra.mxu0 0.0
    %949 = vmatprep.subr.mxu0 0.0
    %950 = vmatpush1.msra.mxu0 0.0
    %951 = vmatprep.subr.mxu0 0.0
    %952 = vmatpush1.msra.mxu0 0.0
    %953 = vmatprep.subr.mxu0 0.0
    %954 = vmatpush1.msra.mxu0 0.0
    %955 = vmatprep.subr.mxu0 0.0
    %956 = vmatpush1.msra.mxu0 0.0
    %957 = vmatprep.subr.mxu0 0.0
    %958 = vmatpush1.msra.mxu0 0.0
    %959 = vmatprep.subr.mxu0 0.0
    %960 = vmatpush1.msra.mxu0 0.0
    %961 = vmatprep.subr.mxu0 0.0
    %962 = vmatpush1.msra.mxu0 0.0
    %963 = vmatprep.subr.mxu0 0.0
    %964 = vmatpush1.msra.mxu0 0.0
    %965 = vmatprep.subr.mxu0 0.0
    %966 = vmatpush1.msra.mxu0 0.0
    %967 = vmatprep.subr.mxu0 0.0
    %968 = vmatpush1.msra.mxu0 0.0
    %969 = vmatprep.subr.mxu0 0.0
    %970 = vmatpush1.msra.mxu0 0.0
    %971 = vmatprep.subr.mxu0 0.0
    %972 = vmatpush1.msra.mxu0 0.0
    %973 = vmatprep.subr.mxu0 0.0
    %974 = vmatpush1.msra.mxu0 0.0
    %975 = vmatprep.subr.mxu0 0.0
    %976 = vmatpush1.msra.mxu0 0.0
    %977 = vmatprep.subr.mxu0 0.0
    %978 = vmatpush1.msra.mxu0 0.0
    %979 = vmatprep.subr.mxu0 0.0
    %980 = vmatpush1.msra.mxu0 0.0
    %981 = vmatprep.subr.mxu0 0.0
    %982 = vmatpush1.msra.mxu0 0.0
    %983 = vmatprep.subr.mxu0 0.0
    %984 = vmatpush1.msra.mxu0 0.0
    %985 = vmatprep.subr.mxu0 0.0
    %986 = vmatpush1.msra.mxu0 0.0
    %987 = vmatprep.subr.mxu0 0.0
    %988 = vmatpush1.msra.mxu0 0.0
    %989 = vmatprep.subr.mxu0 0.0
    %990 = vmatpush1.msra.mxu0 0.0
    %991 = vmatprep.subr.mxu0 0.0
    %992 = vmatpush1.msra.mxu0 0.0
    %993 = vmatprep.subr.mxu0 0.0
    %994 = vmatpush1.msra.mxu0 0.0
    %995 = vmatprep.subr.mxu0 0.0
    %996 = vmatpush1.msra.mxu0 0.0
    %997 = vmatprep.mubr.f32.mxu0 0.0
    %998 = vmatmul.mubr.f32.gmra.mrb[0].mxu0 %v928
    %v999 = vpop.f32.mrb[0].mxu0
    %v1000 = vadd.f32 0.0, %v999
    %v1001 = vpop.f32.mrb[0].mxu0
    %1002 = vmatprep.mubr.f32.mxu0 0.0
    %1003 = vmatmul.mubr.f32.gmra.mrb[0].mxu0 %v931
    %v1004 = vpop.f32.mrb[0].mxu0
    %v1005 = vadd.f32 0.0, %v1004
    %v1006 = vpop.f32.mrb[0].mxu0
    %1007 = vdwg.mxu0
    %1010 = vrot.lane.b32.xlu0 %v1000, 64
    %v1011 = vpop.permute.xlu0 %1010
    %1012 = vrot.lane.b32.xlu0 %v1005, 64
    %v1013 = vpop.permute.xlu0 %1012
    %vm1016 = vcmask 785920
    %1017 = vst.msk [vmem:[#allocation4] sm:$0xff] %vm1016, %v1011
    %1018 = vst.msk [vmem:[#allocation4 + $0x8] sm:$0xff] %vm1016, %v1013
    %v1019 = vld [vmem:[#allocation2] sm:$0xff]
    %v1020 = vld [vmem:[#allocation3] sm:$0xff]
    %1021 = vrot.lane.b32.xlu0 %v406, 32
    %v1022 = vpop.permute.xlu0 %1021
    %1023 = vrot.lane.b32.xlu0 %v407, 32
    %v1024 = vpop.permute.xlu0 %1023
    %1026 = vrot.lane.b32.xlu0 %v1019, 32
    %v1027 = vpop.permute.xlu0 %1026
    %v1028 = vsel %vm412, %v1022, 0
    %v1030 = vsel %vm412, %v1024, 0
    %v1032 = vsel %vm412, %v1027, 0
    %1034 = vmatprep.subr.mxu0 0.0
    %1035 = vmatpush1.xpose.msra.mxu0 %v1032
    %1036 = vmatprep.subr.mxu0 0.0
    %1037 = vmatpush1.xpose.msra.mxu0 0.0
    %1038 = vmatprep.subr.mxu0 0.0
    %1039 = vmatpush1.xpose.msra.mxu0 0.0
    %1040 = vmatprep.subr.mxu0 0.0
    %1041 = vmatpush1.xpose.msra.mxu0 0.0
    %1042 = vmatprep.subr.mxu0 0.0
    %1043 = vmatpush1.xpose.msra.mxu0 0.0
    %1044 = vmatprep.subr.mxu0 0.0
    %1045 = vmatpush1.xpose.msra.mxu0 0.0
    %1046 = vmatprep.subr.mxu0 0.0
    %1047 = vmatpush1.xpose.msra.mxu0 0.0
    %1048 = vmatprep.subr.mxu0 0.0
    %1049 = vmatpush1.xpose.msra.mxu0 0.0
    %1050 = vmatprep.subr.mxu0 0.0
    %1051 = vmatpush1.xpose.msra.mxu0 0.0
    %1052 = vmatprep.subr.mxu0 0.0
    %1053 = vmatpush1.xpose.msra.mxu0 0.0
    %1054 = vmatprep.subr.mxu0 0.0
    %1055 = vmatpush1.xpose.msra.mxu0 0.0
    %1056 = vmatprep.subr.mxu0 0.0
    %1057 = vmatpush1.xpose.msra.mxu0 0.0
    %1058 = vmatprep.subr.mxu0 0.0
    %1059 = vmatpush1.xpose.msra.mxu0 0.0
    %1060 = vmatprep.subr.mxu0 0.0
    %1061 = vmatpush1.xpose.msra.mxu0 0.0
    %1062 = vmatprep.subr.mxu0 0.0
    %1063 = vmatpush1.xpose.msra.mxu0 0.0
    %1064 = vmatprep.subr.mxu0 0.0
    %1065 = vmatpush1.xpose.msra.mxu0 0.0
    %1066 = vmatprep.subr.mxu0 0.0
    %1067 = vmatpush1.xpose.msra.mxu0 0.0
    %1068 = vmatprep.subr.mxu0 0.0
    %1069 = vmatpush1.xpose.msra.mxu0 0.0
    %1070 = vmatprep.subr.mxu0 0.0
    %1071 = vmatpush1.xpose.msra.mxu0 0.0
    %1072 = vmatprep.subr.mxu0 0.0
    %1073 = vmatpush1.xpose.msra.mxu0 0.0
    %1074 = vmatprep.subr.mxu0 0.0
    %1075 = vmatpush1.xpose.msra.mxu0 0.0
    %1076 = vmatprep.subr.mxu0 0.0
    %1077 = vmatpush1.xpose.msra.mxu0 0.0
    %1078 = vmatprep.subr.mxu0 0.0
    %1079 = vmatpush1.xpose.msra.mxu0 0.0
    %1080 = vmatprep.subr.mxu0 0.0
    %1081 = vmatpush1.xpose.msra.mxu0 0.0
    %1082 = vmatprep.subr.mxu0 0.0
    %1083 = vmatpush1.xpose.msra.mxu0 0.0
    %1084 = vmatprep.subr.mxu0 0.0
    %1085 = vmatpush1.xpose.msra.mxu0 0.0
    %1086 = vmatprep.subr.mxu0 0.0
    %1087 = vmatpush1.xpose.msra.mxu0 0.0
    %1088 = vmatprep.subr.mxu0 0.0
    %1089 = vmatpush1.xpose.msra.mxu0 0.0
    %1090 = vmatprep.subr.mxu0 0.0
    %1091 = vmatpush1.xpose.msra.mxu0 0.0
    %1092 = vmatprep.subr.mxu0 0.0
    %1093 = vmatpush1.xpose.msra.mxu0 0.0
    %1094 = vmatprep.subr.mxu0 0.0
    %1095 = vmatpush1.xpose.msra.mxu0 0.0
    %1096 = vmatprep.subr.mxu0 0.0
    %1097 = vmatpush1.xpose.msra.mxu0 0.0
    %1098 = vmatprep.mubr.f32.mxu0 0.0
    %1099 = vmatmul.mubr.f32.gmra.mrb[0].mxu0 %v1028
    %v1100 = vpop.f32.mrb[0].mxu0
    %v1101 = vadd.f32 0.0, %v1100
    %v1102 = vpop.f32.mrb[0].mxu0
    %1103 = vmatprep.mubr.f32.mxu0 0.0
    %1104 = vmatmul.mubr.f32.gmra.mrb[0].mxu0 %v1030
    %v1105 = vpop.f32.mrb[0].mxu0
    %v1106 = vadd.f32 0.0, %v1105
    %v1107 = vpop.f32.mrb[0].mxu0
    %1108 = vdwg.mxu0
    %v1109 = vsel %vm497, %v1101, -inf
    %1110 = vmax.xlane.f32.xlu0 %v1109
    %v1111 = vpop.xlane.xlu0 %1110
    %v1112 = vsel %vm497, %v1106, -inf
    %1113 = vmax.xlane.f32.xlu0 %v1112
    %v1114 = vpop.xlane.xlu0 %1113
    %v1115 = vsub.f32 %v1101, %v1111
    %v1116 = vsub.f32 %v1106, %v1114
    %v1117 = vmul.f32 %v1115, 1.442695
    %v1118 = vpow.pop %v1117
    %v1119 = vmul.f32 %v1116, 1.442695
    %v1120 = vpow.pop %v1119
    %v1121 = vsel %vm497, %v1118, 0.0
    %1122 = vadd.xlane.f32.xlu0 %v1121
    %v1123 = vpop.xlane.xlu0 %1122
    %v1124 = vsel %vm497, %v1120, 0.0
    %1125 = vadd.xlane.f32.xlu0 %v1124
    %v1126 = vpop.xlane.xlu0 %1125
    %v1127 = vrcp.pop %v1123
    %v1128 = vrcp.pop %v1126
    %v1129 = vmul.f32 %v1118, %v1127
    %v1130 = vmul.f32 %v1120, %v1128
    %1132 = vrot.lane.b32.xlu0 %v1020, 32
    %v1133 = vpop.permute.xlu0 %1132
    %v1136 = vsel %vm497, %v1129, 0
    %v1139 = vsel %vm497, %v1130, 0
    %1141 = vmatprep.subr.mxu0 0.0
    %1142 = vmatpush1.msra.mxu0 %v1133
    %1143 = vmatprep.subr.mxu0 0.0
    %1144 = vmatpush1.msra.mxu0 0.0
    %1145 = vmatprep.subr.mxu0 0.0
    %1146 = vmatpush1.msra.mxu0 0.0
    %1147 = vmatprep.subr.mxu0 0.0
    %1148 = vmatpush1.msra.mxu0 0.0
    %1149 = vmatprep.subr.mxu0 0.0
    %1150 = vmatpush1.msra.mxu0 0.0
    %1151 = vmatprep.subr.mxu0 0.0
    %1152 = vmatpush1.msra.mxu0 0.0
    %1153 = vmatprep.subr.mxu0 0.0
    %1154 = vmatpush1.msra.mxu0 0.0
    %1155 = vmatprep.subr.mxu0 0.0
    %1156 = vmatpush1.msra.mxu0 0.0
    %1157 = vmatprep.subr.mxu0 0.0
    %1158 = vmatpush1.msra.mxu0 0.0
    %1159 = vmatprep.subr.mxu0 0.0
    %1160 = vmatpush1.msra.mxu0 0.0
    %1161 = vmatprep.subr.mxu0 0.0
    %1162 = vmatpush1.msra.mxu0 0.0
    %1163 = vmatprep.subr.mxu0 0.0
    %1164 = vmatpush1.msra.mxu0 0.0
    %1165 = vmatprep.subr.mxu0 0.0
    %1166 = vmatpush1.msra.mxu0 0.0
    %1167 = vmatprep.subr.mxu0 0.0
    %1168 = vmatpush1.msra.mxu0 0.0
    %1169 = vmatprep.subr.mxu0 0.0
    %1170 = vmatpush1.msra.mxu0 0.0
    %1171 = vmatprep.subr.mxu0 0.0
    %1172 = vmatpush1.msra.mxu0 0.0
    %1173 = vmatprep.subr.mxu0 0.0
    %1174 = vmatpush1.msra.mxu0 0.0
    %1175 = vmatprep.subr.mxu0 0.0
    %1176 = vmatpush1.msra.mxu0 0.0
    %1177 = vmatprep.subr.mxu0 0.0
    %1178 = vmatpush1.msra.mxu0 0.0
    %1179 = vmatprep.subr.mxu0 0.0
    %1180 = vmatpush1.msra.mxu0 0.0
    %1181 = vmatprep.subr.mxu0 0.0
    %1182 = vmatpush1.msra.mxu0 0.0
    %1183 = vmatprep.subr.mxu0 0.0
    %1184 = vmatpush1.msra.mxu0 0.0
    %1185 = vmatprep.subr.mxu0 0.0
    %1186 = vmatpush1.msra.mxu0 0.0
    %1187 = vmatprep.subr.mxu0 0.0
    %1188 = vmatpush1.msra.mxu0 0.0
    %1189 = vmatprep.subr.mxu0 0.0
    %1190 = vmatpush1.msra.mxu0 0.0
    %1191 = vmatprep.subr.mxu0 0.0
    %1192 = vmatpush1.msra.mxu0 0.0
    %1193 = vmatprep.subr.mxu0 0.0
    %1194 = vmatpush1.msra.mxu0 0.0
    %1195 = vmatprep.subr.mxu0 0.0
    %1196 = vmatpush1.msra.mxu0 0.0
    %1197 = vmatprep.subr.mxu0 0.0
    %1198 = vmatpush1.msra.mxu0 0.0
    %1199 = vmatprep.subr.mxu0 0.0
    %1200 = vmatpush1.msra.mxu0 0.0
    %1201 = vmatprep.subr.mxu0 0.0
    %1202 = vmatpush1.msra.mxu0 0.0
    %1203 = vmatprep.subr.mxu0 0.0
    %1204 = vmatpush1.msra.mxu0 0.0
    %1205 = vmatprep.mubr.f32.mxu0 0.0
    %1206 = vmatmul.mubr.f32.gmra.mrb[0].mxu0 %v1136
    %v1207 = vpop.f32.mrb[0].mxu0
    %v1208 = vadd.f32 0.0, %v1207
    %v1209 = vpop.f32.mrb[0].mxu0
    %1210 = vmatprep.mubr.f32.mxu0 0.0
    %1211 = vmatmul.mubr.f32.gmra.mrb[0].mxu0 %v1139
    %v1212 = vpop.f32.mrb[0].mxu0
    %v1213 = vadd.f32 0.0, %v1212
    %v1214 = vpop.f32.mrb[0].mxu0
    %1215 = vdwg.mxu0
    %1218 = vrot.lane.b32.xlu0 %v1208, 96
    %v1219 = vpop.permute.xlu0 %1218
    %1220 = vrot.lane.b32.xlu0 %v1213, 96
    %v1221 = vpop.permute.xlu0 %1220
    %vm1224 = vcmask 1048320
    %1225 = vst.msk [vmem:[#allocation4] sm:$0xff] %vm1224, %v1219
    %1226 = vst.msk [vmem:[#allocation4 + $0x8] sm:$0xff] %vm1224, %v1221
    %s1227 = scalar_lea.vmem [#allocation2], 8
    %v1228 = vld [vmem:[%s1227] sm:$0xff]
    %s1229 = scalar_lea.vmem [#allocation3], 8
    %v1230 = vld [vmem:[%s1229] sm:$0xff]
    %v1232 = vsel %vm412, %v408, 0
    %v1235 = vsel %vm412, %v409, 0
    %v1238 = vsel %vm412, %v1228, 0
    %1240 = vmatprep.subr.mxu0 0.0
    %1241 = vmatpush1.xpose.msra.mxu0 %v1238
    %1242 = vmatprep.subr.mxu0 0.0
    %1243 = vmatpush1.xpose.msra.mxu0 0.0
    %1244 = vmatprep.subr.mxu0 0.0
    %1245 = vmatpush1.xpose.msra.mxu0 0.0
    %1246 = vmatprep.subr.mxu0 0.0
    %1247 = vmatpush1.xpose.msra.mxu0 0.0
    %1248 = vmatprep.subr.mxu0 0.0
    %1249 = vmatpush1.xpose.msra.mxu0 0.0
    %1250 = vmatprep.subr.mxu0 0.0
    %1251 = vmatpush1.xpose.msra.mxu0 0.0
    %1252 = vmatprep.subr.mxu0 0.0
    %1253 = vmatpush1.xpose.msra.mxu0 0.0
    %1254 = vmatprep.subr.mxu0 0.0
    %1255 = vmatpush1.xpose.msra.mxu0 0.0
    %1256 = vmatprep.subr.mxu0 0.0
    %1257 = vmatpush1.xpose.msra.mxu0 0.0
    %1258 = vmatprep.subr.mxu0 0.0
    %1259 = vmatpush1.xpose.msra.mxu0 0.0
    %1260 = vmatprep.subr.mxu0 0.0
    %1261 = vmatpush1.xpose.msra.mxu0 0.0
    %1262 = vmatprep.subr.mxu0 0.0
    %1263 = vmatpush1.xpose.msra.mxu0 0.0
    %1264 = vmatprep.subr.mxu0 0.0
    %1265 = vmatpush1.xpose.msra.mxu0 0.0
    %1266 = vmatprep.subr.mxu0 0.0
    %1267 = vmatpush1.xpose.msra.mxu0 0.0
    %1268 = vmatprep.subr.mxu0 0.0
    %1269 = vmatpush1.xpose.msra.mxu0 0.0
    %1270 = vmatprep.subr.mxu0 0.0
    %1271 = vmatpush1.xpose.msra.mxu0 0.0
    %1272 = vmatprep.subr.mxu0 0.0
    %1273 = vmatpush1.xpose.msra.mxu0 0.0
    %1274 = vmatprep.subr.mxu0 0.0
    %1275 = vmatpush1.xpose.msra.mxu0 0.0
    %1276 = vmatprep.subr.mxu0 0.0
    %1277 = vmatpush1.xpose.msra.mxu0 0.0
    %1278 = vmatprep.subr.mxu0 0.0
    %1279 = vmatpush1.xpose.msra.mxu0 0.0
    %1280 = vmatprep.subr.mxu0 0.0
    %1281 = vmatpush1.xpose.msra.mxu0 0.0
    %1282 = vmatprep.subr.mxu0 0.0
    %1283 = vmatpush1.xpose.msra.mxu0 0.0
    %1284 = vmatprep.subr.mxu0 0.0
    %1285 = vmatpush1.xpose.msra.mxu0 0.0
    %1286 = vmatprep.subr.mxu0 0.0
    %1287 = vmatpush1.xpose.msra.mxu0 0.0
    %1288 = vmatprep.subr.mxu0 0.0
    %1289 = vmatpush1.xpose.msra.mxu0 0.0
    %1290 = vmatprep.subr.mxu0 0.0
    %1291 = vmatpush1.xpose.msra.mxu0 0.0
    %1292 = vmatprep.subr.mxu0 0.0
    %1293 = vmatpush1.xpose.msra.mxu0 0.0
    %1294 = vmatprep.subr.mxu0 0.0
    %1295 = vmatpush1.xpose.msra.mxu0 0.0
    %1296 = vmatprep.subr.mxu0 0.0
    %1297 = vmatpush1.xpose.msra.mxu0 0.0
    %1298 = vmatprep.subr.mxu0 0.0
    %1299 = vmatpush1.xpose.msra.mxu0 0.0
    %1300 = vmatprep.subr.mxu0 0.0
    %1301 = vmatpush1.xpose.msra.mxu0 0.0
    %1302 = vmatprep.subr.mxu0 0.0
    %1303 = vmatpush1.xpose.msra.mxu0 0.0
    %1304 = vmatprep.mubr.f32.mxu0 0.0
    %1305 = vmatmul.mubr.f32.gmra.mrb[0].mxu0 %v1232
    %v1306 = vpop.f32.mrb[0].mxu0
    %v1307 = vadd.f32 0.0, %v1306
    %v1308 = vpop.f32.mrb[0].mxu0
    %1309 = vmatprep.mubr.f32.mxu0 0.0
    %1310 = vmatmul.mubr.f32.gmra.mrb[0].mxu0 %v1235
    %v1311 = vpop.f32.mrb[0].mxu0
    %v1312 = vadd.f32 0.0, %v1311
    %v1313 = vpop.f32.mrb[0].mxu0
    %1314 = vdwg.mxu0
    %v1315 = vsel %vm497, %v1307, -inf
    %1316 = vmax.xlane.f32.xlu0 %v1315
    %v1317 = vpop.xlane.xlu0 %1316
    %v1318 = vsel %vm497, %v1312, -inf
    %1319 = vmax.xlane.f32.xlu0 %v1318
    %v1320 = vpop.xlane.xlu0 %1319
    %v1321 = vsub.f32 %v1307, %v1317
    %v1322 = vsub.f32 %v1312, %v1320
    %v1323 = vmul.f32 %v1321, 1.442695
    %v1324 = vpow.pop %v1323
    %v1325 = vmul.f32 %v1322, 1.442695
    %v1326 = vpow.pop %v1325
    %v1327 = vsel %vm497, %v1324, 0.0
    %1328 = vadd.xlane.f32.xlu0 %v1327
    %v1329 = vpop.xlane.xlu0 %1328
    %v1330 = vsel %vm497, %v1326, 0.0
    %1331 = vadd.xlane.f32.xlu0 %v1330
    %v1332 = vpop.xlane.xlu0 %1331
    %v1333 = vrcp.pop %v1329
    %v1334 = vrcp.pop %v1332
    %v1335 = vmul.f32 %v1324, %v1333
    %v1336 = vmul.f32 %v1326, %v1334
    %v1338 = vsel %vm497, %v1335, 0
    %v1341 = vsel %vm497, %v1336, 0
    %1343 = vmatprep.subr.mxu0 0.0
    %1344 = vmatpush1.msra.mxu0 %v1230
    %1345 = vmatprep.subr.mxu0 0.0
    %1346 = vmatpush1.msra.mxu0 0.0
    %1347 = vmatprep.subr.mxu0 0.0
    %1348 = vmatpush1.msra.mxu0 0.0
    %1349 = vmatprep.subr.mxu0 0.0
    %1350 = vmatpush1.msra.mxu0 0.0
    %1351 = vmatprep.subr.mxu0 0.0
    %1352 = vmatpush1.msra.mxu0 0.0
    %1353 = vmatprep.subr.mxu0 0.0
    %1354 = vmatpush1.msra.mxu0 0.0
    %1355 = vmatprep.subr.mxu0 0.0
    %1356 = vmatpush1.msra.mxu0 0.0
    %1357 = vmatprep.subr.mxu0 0.0
    %1358 = vmatpush1.msra.mxu0 0.0
    %1359 = vmatprep.subr.mxu0 0.0
    %1360 = vmatpush1.msra.mxu0 0.0
    %1361 = vmatprep.subr.mxu0 0.0
    %1362 = vmatpush1.msra.mxu0 0.0
    %1363 = vmatprep.subr.mxu0 0.0
    %1364 = vmatpush1.msra.mxu0 0.0
    %1365 = vmatprep.subr.mxu0 0.0
    %1366 = vmatpush1.msra.mxu0 0.0
    %1367 = vmatprep.subr.mxu0 0.0
    %1368 = vmatpush1.msra.mxu0 0.0
    %1369 = vmatprep.subr.mxu0 0.0
    %1370 = vmatpush1.msra.mxu0 0.0
    %1371 = vmatprep.subr.mxu0 0.0
    %1372 = vmatpush1.msra.mxu0 0.0
    %1373 = vmatprep.subr.mxu0 0.0
    %1374 = vmatpush1.msra.mxu0 0.0
    %1375 = vmatprep.subr.mxu0 0.0
    %1376 = vmatpush1.msra.mxu0 0.0
    %1377 = vmatprep.subr.mxu0 0.0
    %1378 = vmatpush1.msra.mxu0 0.0
    %1379 = vmatprep.subr.mxu0 0.0
    %1380 = vmatpush1.msra.mxu0 0.0
    %1381 = vmatprep.subr.mxu0 0.0
    %1382 = vmatpush1.msra.mxu0 0.0
    %1383 = vmatprep.subr.mxu0 0.0
    %1384 = vmatpush1.msra.mxu0 0.0
    %1385 = vmatprep.subr.mxu0 0.0
    %1386 = vmatpush1.msra.mxu0 0.0
    %1387 = vmatprep.subr.mxu0 0.0
    %1388 = vmatpush1.msra.mxu0 0.0
    %1389 = vmatprep.subr.mxu0 0.0
    %1390 = vmatpush1.msra.mxu0 0.0
    %1391 = vmatprep.subr.mxu0 0.0
    %1392 = vmatpush1.msra.mxu0 0.0
    %1393 = vmatprep.subr.mxu0 0.0
    %1394 = vmatpush1.msra.mxu0 0.0
    %1395 = vmatprep.subr.mxu0 0.0
    %1396 = vmatpush1.msra.mxu0 0.0
    %1397 = vmatprep.subr.mxu0 0.0
    %1398 = vmatpush1.msra.mxu0 0.0
    %1399 = vmatprep.subr.mxu0 0.0
    %1400 = vmatpush1.msra.mxu0 0.0
    %1401 = vmatprep.subr.mxu0 0.0
    %1402 = vmatpush1.msra.mxu0 0.0
    %1403 = vmatprep.subr.mxu0 0.0
    %1404 = vmatpush1.msra.mxu0 0.0
    %1405 = vmatprep.subr.mxu0 0.0
    %1406 = vmatpush1.msra.mxu0 0.0
    %1407 = vmatprep.mubr.f32.mxu0 0.0
    %1408 = vmatmul.mubr.f32.gmra.mrb[0].mxu0 %v1338
    %v1409 = vpop.f32.mrb[0].mxu0
    %v1410 = vadd.f32 0.0, %v1409
    %v1411 = vpop.f32.mrb[0].mxu0
    %1412 = vmatprep.mubr.f32.mxu0 0.0
    %1413 = vmatmul.mubr.f32.gmra.mrb[0].mxu0 %v1341
    %v1414 = vpop.f32.mrb[0].mxu0
    %v1415 = vadd.f32 0.0, %v1414
    %v1416 = vpop.f32.mrb[0].mxu0
    %1417 = vdwg.mxu0
    %1418 = vst.msk [vmem:[#allocation4 + $0x10] sm:$0xff] %vm412, %v1410
    %1419 = vst.msk [vmem:[#allocation4 + $0x18] sm:$0xff] %vm412, %v1415
    %v1420 = vld [vmem:[%s1227] sm:$0xff]
    %v1421 = vld [vmem:[%s1229] sm:$0xff]
    %1422 = vrot.lane.b32.xlu0 %v408, 96
    %v1423 = vpop.permute.xlu0 %1422
    %1424 = vrot.lane.b32.xlu0 %v409, 96
    %v1425 = vpop.permute.xlu0 %1424
    %1427 = vrot.lane.b32.xlu0 %v1420, 96
    %v1428 = vpop.permute.xlu0 %1427
    %v1429 = vsel %vm412, %v1423, 0
    %v1431 = vsel %vm412, %v1425, 0
    %v1433 = vsel %vm412, %v1428, 0
    %1435 = vmatprep.subr.mxu0 0.0
    %1436 = vmatpush1.xpose.msra.mxu0 %v1433
    %1437 = vmatprep.subr.mxu0 0.0
    %1438 = vmatpush1.xpose.msra.mxu0 0.0
    %1439 = vmatprep.subr.mxu0 0.0
    %1440 = vmatpush1.xpose.msra.mxu0 0.0
    %1441 = vmatprep.subr.mxu0 0.0
    %1442 = vmatpush1.xpose.msra.mxu0 0.0
    %1443 = vmatprep.subr.mxu0 0.0
    %1444 = vmatpush1.xpose.msra.mxu0 0.0
    %1445 = vmatprep.subr.mxu0 0.0
    %1446 = vmatpush1.xpose.msra.mxu0 0.0
    %1447 = vmatprep.subr.mxu0 0.0
    %1448 = vmatpush1.xpose.msra.mxu0 0.0
    %1449 = vmatprep.subr.mxu0 0.0
    %1450 = vmatpush1.xpose.msra.mxu0 0.0
    %1451 = vmatprep.subr.mxu0 0.0
    %1452 = vmatpush1.xpose.msra.mxu0 0.0
    %1453 = vmatprep.subr.mxu0 0.0
    %1454 = vmatpush1.xpose.msra.mxu0 0.0
    %1455 = vmatprep.subr.mxu0 0.0
    %1456 = vmatpush1.xpose.msra.mxu0 0.0
    %1457 = vmatprep.subr.mxu0 0.0
    %1458 = vmatpush1.xpose.msra.mxu0 0.0
    %1459 = vmatprep.subr.mxu0 0.0
    %1460 = vmatpush1.xpose.msra.mxu0 0.0
    %1461 = vmatprep.subr.mxu0 0.0
    %1462 = vmatpush1.xpose.msra.mxu0 0.0
    %1463 = vmatprep.subr.mxu0 0.0
    %1464 = vmatpush1.xpose.msra.mxu0 0.0
    %1465 = vmatprep.subr.mxu0 0.0
    %1466 = vmatpush1.xpose.msra.mxu0 0.0
    %1467 = vmatprep.subr.mxu0 0.0
    %1468 = vmatpush1.xpose.msra.mxu0 0.0
    %1469 = vmatprep.subr.mxu0 0.0
    %1470 = vmatpush1.xpose.msra.mxu0 0.0
    %1471 = vmatprep.subr.mxu0 0.0
    %1472 = vmatpush1.xpose.msra.mxu0 0.0
    %1473 = vmatprep.subr.mxu0 0.0
    %1474 = vmatpush1.xpose.msra.mxu0 0.0
    %1475 = vmatprep.subr.mxu0 0.0
    %1476 = vmatpush1.xpose.msra.mxu0 0.0
    %1477 = vmatprep.subr.mxu0 0.0
    %1478 = vmatpush1.xpose.msra.mxu0 0.0
    %1479 = vmatprep.subr.mxu0 0.0
    %1480 = vmatpush1.xpose.msra.mxu0 0.0
    %1481 = vmatprep.subr.mxu0 0.0
    %1482 = vmatpush1.xpose.msra.mxu0 0.0
    %1483 = vmatprep.subr.mxu0 0.0
    %1484 = vmatpush1.xpose.msra.mxu0 0.0
    %1485 = vmatprep.subr.mxu0 0.0
    %1486 = vmatpush1.xpose.msra.mxu0 0.0
    %1487 = vmatprep.subr.mxu0 0.0
    %1488 = vmatpush1.xpose.msra.mxu0 0.0
    %1489 = vmatprep.subr.mxu0 0.0
    %1490 = vmatpush1.xpose.msra.mxu0 0.0
    %1491 = vmatprep.subr.mxu0 0.0
    %1492 = vmatpush1.xpose.msra.mxu0 0.0
    %1493 = vmatprep.subr.mxu0 0.0
    %1494 = vmatpush1.xpose.msra.mxu0 0.0
    %1495 = vmatprep.subr.mxu0 0.0
    %1496 = vmatpush1.xpose.msra.mxu0 0.0
    %1497 = vmatprep.subr.mxu0 0.0
    %1498 = vmatpush1.xpose.msra.mxu0 0.0
    %1499 = vmatprep.mubr.f32.mxu0 0.0
    %1500 = vmatmul.mubr.f32.gmra.mrb[0].mxu0 %v1429
    %v1501 = vpop.f32.mrb[0].mxu0
    %v1502 = vadd.f32 0.0, %v1501
    %v1503 = vpop.f32.mrb[0].mxu0
    %1504 = vmatprep.mubr.f32.mxu0 0.0
    %1505 = vmatmul.mubr.f32.gmra.mrb[0].mxu0 %v1431
    %v1506 = vpop.f32.mrb[0].mxu0
    %v1507 = vadd.f32 0.0, %v1506
    %v1508 = vpop.f32.mrb[0].mxu0
    %1509 = vdwg.mxu0
    %v1510 = vsel %vm497, %v1502, -inf
    %1511 = vmax.xlane.f32.xlu0 %v1510
    %v1512 = vpop.xlane.xlu0 %1511
    %v1513 = vsel %vm497, %v1507, -inf
    %1514 = vmax.xlane.f32.xlu0 %v1513
    %v1515 = vpop.xlane.xlu0 %1514
    %v1516 = vsub.f32 %v1502, %v1512
    %v1517 = vsub.f32 %v1507, %v1515
    %v1518 = vmul.f32 %v1516, 1.442695
    %v1519 = vpow.pop %v1518
    %v1520 = vmul.f32 %v1517, 1.442695
    %v1521 = vpow.pop %v1520
    %v1522 = vsel %vm497, %v1519, 0.0
    %1523 = vadd.xlane.f32.xlu0 %v1522
    %v1524 = vpop.xlane.xlu0 %1523
    %v1525 = vsel %vm497, %v1521, 0.0
    %1526 = vadd.xlane.f32.xlu0 %v1525
    %v1527 = vpop.xlane.xlu0 %1526
    %v1528 = vrcp.pop %v1524
    %v1529 = vrcp.pop %v1527
    %v1530 = vmul.f32 %v1519, %v1528
    %v1531 = vmul.f32 %v1521, %v1529
    %1533 = vrot.lane.b32.xlu0 %v1421, 96
    %v1534 = vpop.permute.xlu0 %1533
    %v1537 = vsel %vm497, %v1530, 0
    %v1540 = vsel %vm497, %v1531, 0
    %1542 = vmatprep.subr.mxu0 0.0
    %1543 = vmatpush1.msra.mxu0 %v1534
    %1544 = vmatprep.subr.mxu0 0.0
    %1545 = vmatpush1.msra.mxu0 0.0
    %1546 = vmatprep.subr.mxu0 0.0
    %1547 = vmatpush1.msra.mxu0 0.0
    %1548 = vmatprep.subr.mxu0 0.0
    %1549 = vmatpush1.msra.mxu0 0.0
    %1550 = vmatprep.subr.mxu0 0.0
    %1551 = vmatpush1.msra.mxu0 0.0
    %1552 = vmatprep.subr.mxu0 0.0
    %1553 = vmatpush1.msra.mxu0 0.0
    %1554 = vmatprep.subr.mxu0 0.0
    %1555 = vmatpush1.msra.mxu0 0.0
    %1556 = vmatprep.subr.mxu0 0.0
    %1557 = vmatpush1.msra.mxu0 0.0
    %1558 = vmatprep.subr.mxu0 0.0
    %1559 = vmatpush1.msra.mxu0 0.0
    %1560 = vmatprep.subr.mxu0 0.0
    %1561 = vmatpush1.msra.mxu0 0.0
    %1562 = vmatprep.subr.mxu0 0.0
    %1563 = vmatpush1.msra.mxu0 0.0
    %1564 = vmatprep.subr.mxu0 0.0
    %1565 = vmatpush1.msra.mxu0 0.0
    %1566 = vmatprep.subr.mxu0 0.0
    %1567 = vmatpush1.msra.mxu0 0.0
    %1568 = vmatprep.subr.mxu0 0.0
    %1569 = vmatpush1.msra.mxu0 0.0
    %1570 = vmatprep.subr.mxu0 0.0
    %1571 = vmatpush1.msra.mxu0 0.0
    %1572 = vmatprep.subr.mxu0 0.0
    %1573 = vmatpush1.msra.mxu0 0.0
    %1574 = vmatprep.subr.mxu0 0.0
    %1575 = vmatpush1.msra.mxu0 0.0
    %1576 = vmatprep.subr.mxu0 0.0
    %1577 = vmatpush1.msra.mxu0 0.0
    %1578 = vmatprep.subr.mxu0 0.0
    %1579 = vmatpush1.msra.mxu0 0.0
    %1580 = vmatprep.subr.mxu0 0.0
    %1581 = vmatpush1.msra.mxu0 0.0
    %1582 = vmatprep.subr.mxu0 0.0
    %1583 = vmatpush1.msra.mxu0 0.0
    %1584 = vmatprep.subr.mxu0 0.0
    %1585 = vmatpush1.msra.mxu0 0.0
    %1586 = vmatprep.subr.mxu0 0.0
    %1587 = vmatpush1.msra.mxu0 0.0
    %1588 = vmatprep.subr.mxu0 0.0
    %1589 = vmatpush1.msra.mxu0 0.0
    %1590 = vmatprep.subr.mxu0 0.0
    %1591 = vmatpush1.msra.mxu0 0.0
    %1592 = vmatprep.subr.mxu0 0.0
    %1593 = vmatpush1.msra.mxu0 0.0
    %1594 = vmatprep.subr.mxu0 0.0
    %1595 = vmatpush1.msra.mxu0 0.0
    %1596 = vmatprep.subr.mxu0 0.0
    %1597 = vmatpush1.msra.mxu0 0.0
    %1598 = vmatprep.subr.mxu0 0.0
    %1599 = vmatpush1.msra.mxu0 0.0
    %1600 = vmatprep.subr.mxu0 0.0
    %1601 = vmatpush1.msra.mxu0 0.0
    %1602 = vmatprep.subr.mxu0 0.0
    %1603 = vmatpush1.msra.mxu0 0.0
    %1604 = vmatprep.subr.mxu0 0.0
    %1605 = vmatpush1.msra.mxu0 0.0
    %1606 = vmatprep.mubr.f32.mxu0 0.0
    %1607 = vmatmul.mubr.f32.gmra.mrb[0].mxu0 %v1537
    %v1608 = vpop.f32.mrb[0].mxu0
    %v1609 = vadd.f32 0.0, %v1608
    %v1610 = vpop.f32.mrb[0].mxu0
    %1611 = vmatprep.mubr.f32.mxu0 0.0
    %1612 = vmatmul.mubr.f32.gmra.mrb[0].mxu0 %v1540
    %v1613 = vpop.f32.mrb[0].mxu0
    %v1614 = vadd.f32 0.0, %v1613
    %v1615 = vpop.f32.mrb[0].mxu0
    %1616 = vdwg.mxu0
    %1619 = vrot.lane.b32.xlu0 %v1609, 32
    %v1620 = vpop.permute.xlu0 %1619
    %1621 = vrot.lane.b32.xlu0 %v1614, 32
    %v1622 = vpop.permute.xlu0 %1621
    %1625 = vst.msk [vmem:[#allocation4 + $0x10] sm:$0xff] %vm808, %v1620
    %1626 = vst.msk [vmem:[#allocation4 + $0x18] sm:$0xff] %vm808, %v1622
    %v1627 = vld [vmem:[%s1227] sm:$0xff]
    %v1628 = vld [vmem:[%s1229] sm:$0xff]
    %1629 = vrot.lane.b32.xlu0 %v408, 64
    %v1630 = vpop.permute.xlu0 %1629
    %1631 = vrot.lane.b32.xlu0 %v409, 64
    %v1632 = vpop.permute.xlu0 %1631
    %1634 = vrot.lane.b32.xlu0 %v1627, 64
    %v1635 = vpop.permute.xlu0 %1634
    %v1636 = vsel %vm412, %v1630, 0
    %v1638 = vsel %vm412, %v1632, 0
    %v1640 = vsel %vm412, %v1635, 0
    %1642 = vmatprep.subr.mxu0 0.0
    %1643 = vmatpush1.xpose.msra.mxu0 %v1640
    %1644 = vmatprep.subr.mxu0 0.0
    %1645 = vmatpush1.xpose.msra.mxu0 0.0
    %1646 = vmatprep.subr.mxu0 0.0
    %1647 = vmatpush1.xpose.msra.mxu0 0.0
    %1648 = vmatprep.subr.mxu0 0.0
    %1649 = vmatpush1.xpose.msra.mxu0 0.0
    %1650 = vmatprep.subr.mxu0 0.0
    %1651 = vmatpush1.xpose.msra.mxu0 0.0
    %1652 = vmatprep.subr.mxu0 0.0
    %1653 = vmatpush1.xpose.msra.mxu0 0.0
    %1654 = vmatprep.subr.mxu0 0.0
    %1655 = vmatpush1.xpose.msra.mxu0 0.0
    %1656 = vmatprep.subr.mxu0 0.0
    %1657 = vmatpush1.xpose.msra.mxu0 0.0
    %1658 = vmatprep.subr.mxu0 0.0
    %1659 = vmatpush1.xpose.msra.mxu0 0.0
    %1660 = vmatprep.subr.mxu0 0.0
    %1661 = vmatpush1.xpose.msra.mxu0 0.0
    %1662 = vmatprep.subr.mxu0 0.0
    %1663 = vmatpush1.xpose.msra.mxu0 0.0
    %1664 = vmatprep.subr.mxu0 0.0
    %1665 = vmatpush1.xpose.msra.mxu0 0.0
    %1666 = vmatprep.subr.mxu0 0.0
    %1667 = vmatpush1.xpose.msra.mxu0 0.0
    %1668 = vmatprep.subr.mxu0 0.0
    %1669 = vmatpush1.xpose.msra.mxu0 0.0
    %1670 = vmatprep.subr.mxu0 0.0
    %1671 = vmatpush1.xpose.msra.mxu0 0.0
    %1672 = vmatprep.subr.mxu0 0.0
    %1673 = vmatpush1.xpose.msra.mxu0 0.0
    %1674 = vmatprep.subr.mxu0 0.0
    %1675 = vmatpush1.xpose.msra.mxu0 0.0
    %1676 = vmatprep.subr.mxu0 0.0
    %1677 = vmatpush1.xpose.msra.mxu0 0.0
    %1678 = vmatprep.subr.mxu0 0.0
    %1679 = vmatpush1.xpose.msra.mxu0 0.0
    %1680 = vmatprep.subr.mxu0 0.0
    %1681 = vmatpush1.xpose.msra.mxu0 0.0
    %1682 = vmatprep.subr.mxu0 0.0
    %1683 = vmatpush1.xpose.msra.mxu0 0.0
    %1684 = vmatprep.subr.mxu0 0.0
    %1685 = vmatpush1.xpose.msra.mxu0 0.0
    %1686 = vmatprep.subr.mxu0 0.0
    %1687 = vmatpush1.xpose.msra.mxu0 0.0
    %1688 = vmatprep.subr.mxu0 0.0
    %1689 = vmatpush1.xpose.msra.mxu0 0.0
    %1690 = vmatprep.subr.mxu0 0.0
    %1691 = vmatpush1.xpose.msra.mxu0 0.0
    %1692 = vmatprep.subr.mxu0 0.0
    %1693 = vmatpush1.xpose.msra.mxu0 0.0
    %1694 = vmatprep.subr.mxu0 0.0
    %1695 = vmatpush1.xpose.msra.mxu0 0.0
    %1696 = vmatprep.subr.mxu0 0.0
    %1697 = vmatpush1.xpose.msra.mxu0 0.0
    %1698 = vmatprep.subr.mxu0 0.0
    %1699 = vmatpush1.xpose.msra.mxu0 0.0
    %1700 = vmatprep.subr.mxu0 0.0
    %1701 = vmatpush1.xpose.msra.mxu0 0.0
    %1702 = vmatprep.subr.mxu0 0.0
    %1703 = vmatpush1.xpose.msra.mxu0 0.0
    %1704 = vmatprep.subr.mxu0 0.0
    %1705 = vmatpush1.xpose.msra.mxu0 0.0
    %1706 = vmatprep.mubr.f32.mxu0 0.0
    %1707 = vmatmul.mubr.f32.gmra.mrb[0].mxu0 %v1636
    %v1708 = vpop.f32.mrb[0].mxu0
    %v1709 = vadd.f32 0.0, %v1708
    %v1710 = vpop.f32.mrb[0].mxu0
    %1711 = vmatprep.mubr.f32.mxu0 0.0
    %1712 = vmatmul.mubr.f32.gmra.mrb[0].mxu0 %v1638
    %v1713 = vpop.f32.mrb[0].mxu0
    %v1714 = vadd.f32 0.0, %v1713
    %v1715 = vpop.f32.mrb[0].mxu0
    %1716 = vdwg.mxu0
    %v1717 = vsel %vm497, %v1709, -inf
    %1718 = vmax.xlane.f32.xlu0 %v1717
    %v1719 = vpop.xlane.xlu0 %1718
    %v1720 = vsel %vm497, %v1714, -inf
    %1721 = vmax.xlane.f32.xlu0 %v1720
    %v1722 = vpop.xlane.xlu0 %1721
    %v1723 = vsub.f32 %v1709, %v1719
    %v1724 = vsub.f32 %v1714, %v1722
    %v1725 = vmul.f32 %v1723, 1.442695
    %v1726 = vpow.pop %v1725
    %v1727 = vmul.f32 %v1724, 1.442695
    %v1728 = vpow.pop %v1727
    %v1729 = vsel %vm497, %v1726, 0.0
    %1730 = vadd.xlane.f32.xlu0 %v1729
    %v1731 = vpop.xlane.xlu0 %1730
    %v1732 = vsel %vm497, %v1728, 0.0
    %1733 = vadd.xlane.f32.xlu0 %v1732
    %v1734 = vpop.xlane.xlu0 %1733
    %v1735 = vrcp.pop %v1731
    %v1736 = vrcp.pop %v1734
    %v1737 = vmul.f32 %v1726, %v1735
    %v1738 = vmul.f32 %v1728, %v1736
    %1740 = vrot.lane.b32.xlu0 %v1628, 64
    %v1741 = vpop.permute.xlu0 %1740
    %v1744 = vsel %vm497, %v1737, 0
    %v1747 = vsel %vm497, %v1738, 0
    %1749 = vmatprep.subr.mxu0 0.0
    %1750 = vmatpush1.msra.mxu0 %v1741
    %1751 = vmatprep.subr.mxu0 0.0
    %1752 = vmatpush1.msra.mxu0 0.0
    %1753 = vmatprep.subr.mxu0 0.0
    %1754 = vmatpush1.msra.mxu0 0.0
    %1755 = vmatprep.subr.mxu0 0.0
    %1756 = vmatpush1.msra.mxu0 0.0
    %1757 = vmatprep.subr.mxu0 0.0
    %1758 = vmatpush1.msra.mxu0 0.0
    %1759 = vmatprep.subr.mxu0 0.0
    %1760 = vmatpush1.msra.mxu0 0.0
    %1761 = vmatprep.subr.mxu0 0.0
    %1762 = vmatpush1.msra.mxu0 0.0
    %1763 = vmatprep.subr.mxu0 0.0
    %1764 = vmatpush1.msra.mxu0 0.0
    %1765 = vmatprep.subr.mxu0 0.0
    %1766 = vmatpush1.msra.mxu0 0.0
    %1767 = vmatprep.subr.mxu0 0.0
    %1768 = vmatpush1.msra.mxu0 0.0
    %1769 = vmatprep.subr.mxu0 0.0
    %1770 = vmatpush1.msra.mxu0 0.0
    %1771 = vmatprep.subr.mxu0 0.0
    %1772 = vmatpush1.msra.mxu0 0.0
    %1773 = vmatprep.subr.mxu0 0.0
    %1774 = vmatpush1.msra.mxu0 0.0
    %1775 = vmatprep.subr.mxu0 0.0
    %1776 = vmatpush1.msra.mxu0 0.0
    %1777 = vmatprep.subr.mxu0 0.0
    %1778 = vmatpush1.msra.mxu0 0.0
    %1779 = vmatprep.subr.mxu0 0.0
    %1780 = vmatpush1.msra.mxu0 0.0
    %1781 = vmatprep.subr.mxu0 0.0
    %1782 = vmatpush1.msra.mxu0 0.0
    %1783 = vmatprep.subr.mxu0 0.0
    %1784 = vmatpush1.msra.mxu0 0.0
    %1785 = vmatprep.subr.mxu0 0.0
    %1786 = vmatpush1.msra.mxu0 0.0
    %1787 = vmatprep.subr.mxu0 0.0
    %1788 = vmatpush1.msra.mxu0 0.0
    %1789 = vmatprep.subr.mxu0 0.0
    %1790 = vmatpush1.msra.mxu0 0.0
    %1791 = vmatprep.subr.mxu0 0.0
    %1792 = vmatpush1.msra.mxu0 0.0
    %1793 = vmatprep.subr.mxu0 0.0
    %1794 = vmatpush1.msra.mxu0 0.0
    %1795 = vmatprep.subr.mxu0 0.0
    %1796 = vmatpush1.msra.mxu0 0.0
    %1797 = vmatprep.subr.mxu0 0.0
    %1798 = vmatpush1.msra.mxu0 0.0
    %1799 = vmatprep.subr.mxu0 0.0
    %1800 = vmatpush1.msra.mxu0 0.0
    %1801 = vmatprep.subr.mxu0 0.0
    %1802 = vmatpush1.msra.mxu0 0.0
    %1803 = vmatprep.subr.mxu0 0.0
    %1804 = vmatpush1.msra.mxu0 0.0
    %1805 = vmatprep.subr.mxu0 0.0
    %1806 = vmatpush1.msra.mxu0 0.0
    %1807 = vmatprep.subr.mxu0 0.0
    %1808 = vmatpush1.msra.mxu0 0.0
    %1809 = vmatprep.subr.mxu0 0.0
    %1810 = vmatpush1.msra.mxu0 0.0
    %1811 = vmatprep.subr.mxu0 0.0
    %1812 = vmatpush1.msra.mxu0 0.0
    %1813 = vmatprep.mubr.f32.mxu0 0.0
    %1814 = vmatmul.mubr.f32.gmra.mrb[0].mxu0 %v1744
    %v1815 = vpop.f32.mrb[0].mxu0
    %v1816 = vadd.f32 0.0, %v1815
    %v1817 = vpop.f32.mrb[0].mxu0
    %1818 = vmatprep.mubr.f32.mxu0 0.0
    %1819 = vmatmul.mubr.f32.gmra.mrb[0].mxu0 %v1747
    %v1820 = vpop.f32.mrb[0].mxu0
    %v1821 = vadd.f32 0.0, %v1820
    %v1822 = vpop.f32.mrb[0].mxu0
    %1823 = vdwg.mxu0
    %1826 = vrot.lane.b32.xlu0 %v1816, 64
    %v1827 = vpop.permute.xlu0 %1826
    %1828 = vrot.lane.b32.xlu0 %v1821, 64
    %v1829 = vpop.permute.xlu0 %1828
    %1832 = vst.msk [vmem:[#allocation4 + $0x10] sm:$0xff] %vm1016, %v1827
    %1833 = vst.msk [vmem:[#allocation4 + $0x18] sm:$0xff] %vm1016, %v1829
    %v1834 = vld [vmem:[%s1227] sm:$0xff]
    %v1835 = vld [vmem:[%s1229] sm:$0xff]
    %1836 = vrot.lane.b32.xlu0 %v408, 32
    %v1837 = vpop.permute.xlu0 %1836
    %1838 = vrot.lane.b32.xlu0 %v409, 32
    %v1839 = vpop.permute.xlu0 %1838
    %1841 = vrot.lane.b32.xlu0 %v1834, 32
    %v1842 = vpop.permute.xlu0 %1841
    %v1843 = vsel %vm412, %v1837, 0
    %v1845 = vsel %vm412, %v1839, 0
    %v1847 = vsel %vm412, %v1842, 0
    %1849 = vmatprep.subr.mxu0 0.0
    %1850 = vmatpush1.xpose.msra.mxu0 %v1847
    %1851 = vmatprep.subr.mxu0 0.0
    %1852 = vmatpush1.xpose.msra.mxu0 0.0
    %1853 = vmatprep.subr.mxu0 0.0
    %1854 = vmatpush1.xpose.msra.mxu0 0.0
    %1855 = vmatprep.subr.mxu0 0.0
    %1856 = vmatpush1.xpose.msra.mxu0 0.0
    %1857 = vmatprep.subr.mxu0 0.0
    %1858 = vmatpush1.xpose.msra.mxu0 0.0
    %1859 = vmatprep.subr.mxu0 0.0
    %1860 = vmatpush1.xpose.msra.mxu0 0.0
    %1861 = vmatprep.subr.mxu0 0.0
    %1862 = vmatpush1.xpose.msra.mxu0 0.0
    %1863 = vmatprep.subr.mxu0 0.0
    %1864 = vmatpush1.xpose.msra.mxu0 0.0
    %1865 = vmatprep.subr.mxu0 0.0
    %1866 = vmatpush1.xpose.msra.mxu0 0.0
    %1867 = vmatprep.subr.mxu0 0.0
    %1868 = vmatpush1.xpose.msra.mxu0 0.0
    %1869 = vmatprep.subr.mxu0 0.0
    %1870 = vmatpush1.xpose.msra.mxu0 0.0
    %1871 = vmatprep.subr.mxu0 0.0
    %1872 = vmatpush1.xpose.msra.mxu0 0.0
    %1873 = vmatprep.subr.mxu0 0.0
    %1874 = vmatpush1.xpose.msra.mxu0 0.0
    %1875 = vmatprep.subr.mxu0 0.0
    %1876 = vmatpush1.xpose.msra.mxu0 0.0
    %1877 = vmatprep.subr.mxu0 0.0
    %1878 = vmatpush1.xpose.msra.mxu0 0.0
    %1879 = vmatprep.subr.mxu0 0.0
    %1880 = vmatpush1.xpose.msra.mxu0 0.0
    %1881 = vmatprep.subr.mxu0 0.0
    %1882 = vmatpush1.xpose.msra.mxu0 0.0
    %1883 = vmatprep.subr.mxu0 0.0
    %1884 = vmatpush1.xpose.msra.mxu0 0.0
    %1885 = vmatprep.subr.mxu0 0.0
    %1886 = vmatpush1.xpose.msra.mxu0 0.0
    %1887 = vmatprep.subr.mxu0 0.0
    %1888 = vmatpush1.xpose.msra.mxu0 0.0
    %1889 = vmatprep.subr.mxu0 0.0
    %1890 = vmatpush1.xpose.msra.mxu0 0.0
    %1891 = vmatprep.subr.mxu0 0.0
    %1892 = vmatpush1.xpose.msra.mxu0 0.0
    %1893 = vmatprep.subr.mxu0 0.0
    %1894 = vmatpush1.xpose.msra.mxu0 0.0
    %1895 = vmatprep.subr.mxu0 0.0
    %1896 = vmatpush1.xpose.msra.mxu0 0.0
    %1897 = vmatprep.subr.mxu0 0.0
    %1898 = vmatpush1.xpose.msra.mxu0 0.0
    %1899 = vmatprep.subr.mxu0 0.0
    %1900 = vmatpush1.xpose.msra.mxu0 0.0
    %1901 = vmatprep.subr.mxu0 0.0
    %1902 = vmatpush1.xpose.msra.mxu0 0.0
    %1903 = vmatprep.subr.mxu0 0.0
    %1904 = vmatpush1.xpose.msra.mxu0 0.0
    %1905 = vmatprep.subr.mxu0 0.0
    %1906 = vmatpush1.xpose.msra.mxu0 0.0
    %1907 = vmatprep.subr.mxu0 0.0
    %1908 = vmatpush1.xpose.msra.mxu0 0.0
    %1909 = vmatprep.subr.mxu0 0.0
    %1910 = vmatpush1.xpose.msra.mxu0 0.0
    %1911 = vmatprep.subr.mxu0 0.0
    %1912 = vmatpush1.xpose.msra.mxu0 0.0
    %1913 = vmatprep.mubr.f32.mxu0 0.0
    %1914 = vmatmul.mubr.f32.gmra.mrb[0].mxu0 %v1843
    %v1915 = vpop.f32.mrb[0].mxu0
    %v1916 = vadd.f32 0.0, %v1915
    %v1917 = vpop.f32.mrb[0].mxu0
    %1918 = vmatprep.mubr.f32.mxu0 0.0
    %1919 = vmatmul.mubr.f32.gmra.mrb[0].mxu0 %v1845
    %v1920 = vpop.f32.mrb[0].mxu0
    %v1921 = vadd.f32 0.0, %v1920
    %v1922 = vpop.f32.mrb[0].mxu0
    %1923 = vdwg.mxu0
    %v1924 = vsel %vm497, %v1916, -inf
    %1925 = vmax.xlane.f32.xlu0 %v1924
    %v1926 = vpop.xlane.xlu0 %1925
    %v1927 = vsel %vm497, %v1921, -inf
    %1928 = vmax.xlane.f32.xlu0 %v1927
    %v1929 = vpop.xlane.xlu0 %1928
    %v1930 = vsub.f32 %v1916, %v1926
    %v1931 = vsub.f32 %v1921, %v1929
    %v1932 = vmul.f32 %v1930, 1.442695
    %v1933 = vpow.pop %v1932
    %v1934 = vmul.f32 %v1931, 1.442695
    %v1935 = vpow.pop %v1934
    %v1936 = vsel %vm497, %v1933, 0.0
    %1937 = vadd.xlane.f32.xlu0 %v1936
    %v1938 = vpop.xlane.xlu0 %1937
    %v1939 = vsel %vm497, %v1935, 0.0
    %1940 = vadd.xlane.f32.xlu0 %v1939
    %v1941 = vpop.xlane.xlu0 %1940
    %v1942 = vrcp.pop %v1938
    %v1943 = vrcp.pop %v1941
    %v1944 = vmul.f32 %v1933, %v1942
    %v1945 = vmul.f32 %v1935, %v1943
    %1947 = vrot.lane.b32.xlu0 %v1835, 32
    %v1948 = vpop.permute.xlu0 %1947
    %v1951 = vsel %vm497, %v1944, 0
    %v1954 = vsel %vm497, %v1945, 0
    %1956 = vmatprep.subr.mxu0 0.0
    %1957 = vmatpush1.msra.mxu0 %v1948
    %1958 = vmatprep.subr.mxu0 0.0
    %1959 = vmatpush1.msra.mxu0 0.0
    %1960 = vmatprep.subr.mxu0 0.0
    %1961 = vmatpush1.msra.mxu0 0.0
    %1962 = vmatprep.subr.mxu0 0.0
    %1963 = vmatpush1.msra.mxu0 0.0
    %1964 = vmatprep.subr.mxu0 0.0
    %1965 = vmatpush1.msra.mxu0 0.0
    %1966 = vmatprep.subr.mxu0 0.0
    %1967 = vmatpush1.msra.mxu0 0.0
    %1968 = vmatprep.subr.mxu0 0.0
    %1969 = vmatpush1.msra.mxu0 0.0
    %1970 = vmatprep.subr.mxu0 0.0
    %1971 = vmatpush1.msra.mxu0 0.0
    %1972 = vmatprep.subr.mxu0 0.0
    %1973 = vmatpush1.msra.mxu0 0.0
    %1974 = vmatprep.subr.mxu0 0.0
    %1975 = vmatpush1.msra.mxu0 0.0
    %1976 = vmatprep.subr.mxu0 0.0
    %1977 = vmatpush1.msra.mxu0 0.0
    %1978 = vmatprep.subr.mxu0 0.0
    %1979 = vmatpush1.msra.mxu0 0.0
    %1980 = vmatprep.subr.mxu0 0.0
    %1981 = vmatpush1.msra.mxu0 0.0
    %1982 = vmatprep.subr.mxu0 0.0
    %1983 = vmatpush1.msra.mxu0 0.0
    %1984 = vmatprep.subr.mxu0 0.0
    %1985 = vmatpush1.msra.mxu0 0.0
    %1986 = vmatprep.subr.mxu0 0.0
    %1987 = vmatpush1.msra.mxu0 0.0
    %1988 = vmatprep.subr.mxu0 0.0
    %1989 = vmatpush1.msra.mxu0 0.0
    %1990 = vmatprep.subr.mxu0 0.0
    %1991 = vmatpush1.msra.mxu0 0.0
    %1992 = vmatprep.subr.mxu0 0.0
    %1993 = vmatpush1.msra.mxu0 0.0
    %1994 = vmatprep.subr.mxu0 0.0
    %1995 = vmatpush1.msra.mxu0 0.0
    %1996 = vmatprep.subr.mxu0 0.0
    %1997 = vmatpush1.msra.mxu0 0.0
    %1998 = vmatprep.subr.mxu0 0.0
    %1999 = vmatpush1.msra.mxu0 0.0
    %2000 = vmatprep.subr.mxu0 0.0
    %2001 = vmatpush1.msra.mxu0 0.0
    %2002 = vmatprep.subr.mxu0 0.0
    %2003 = vmatpush1.msra.mxu0 0.0
    %2004 = vmatprep.subr.mxu0 0.0
    %2005 = vmatpush1.msra.mxu0 0.0
    %2006 = vmatprep.subr.mxu0 0.0
    %2007 = vmatpush1.msra.mxu0 0.0
    %2008 = vmatprep.subr.mxu0 0.0
    %2009 = vmatpush1.msra.mxu0 0.0
    %2010 = vmatprep.subr.mxu0 0.0
    %2011 = vmatpush1.msra.mxu0 0.0
    %2012 = vmatprep.subr.mxu0 0.0
    %2013 = vmatpush1.msra.mxu0 0.0
    %2014 = vmatprep.subr.mxu0 0.0
    %2015 = vmatpush1.msra.mxu0 0.0
    %2016 = vmatprep.subr.mxu0 0.0
    %2017 = vmatpush1.msra.mxu0 0.0
    %2018 = vmatprep.subr.mxu0 0.0
    %2019 = vmatpush1.msra.mxu0 0.0
    %2020 = vmatprep.mubr.f32.mxu0 0.0
    %2021 = vmatmul.mubr.f32.gmra.mrb[0].mxu0 %v1951
    %v2022 = vpop.f32.mrb[0].mxu0
    %v2023 = vadd.f32 0.0, %v2022
    %v2024 = vpop.f32.mrb[0].mxu0
    %2025 = vmatprep.mubr.f32.mxu0 0.0
    %2026 = vmatmul.mubr.f32.gmra.mrb[0].mxu0 %v1954
    %v2027 = vpop.f32.mrb[0].mxu0
    %v2028 = vadd.f32 0.0, %v2027
    %v2029 = vpop.f32.mrb[0].mxu0
    %2030 = vdwg.mxu0
    %2033 = vrot.lane.b32.xlu0 %v2023, 96
    %v2034 = vpop.permute.xlu0 %2033
    %2035 = vrot.lane.b32.xlu0 %v2028, 96
    %v2036 = vpop.permute.xlu0 %2035
    %2039 = vst.msk [vmem:[#allocation4 + $0x10] sm:$0xff] %vm1224, %v2034
    %2040 = vst.msk [vmem:[#allocation4 + $0x18] sm:$0xff] %vm1224, %v2036
    %v2041 = vld [vmem:[#allocation4] sm:$0xff]
    %v2042 = vld [vmem:[#allocation4 + $0x8] sm:$0xff]
    %v2043 = vld [vmem:[#allocation4 + $0x10] sm:$0xff]
    %v2044 = vld [vmem:[#allocation4 + $0x18] sm:$0xff]
    %v2045 = vld [vmem:[#allocation14] sm:$0xff]
    %v2046 = vld [vmem:[#allocation14 + $0x8] sm:$0xff]
    %v2047 = vld [vmem:[#allocation14 + $0x10] sm:$0xff]
    %v2048 = vld [vmem:[#allocation14 + $0x18] sm:$0xff]
    %v2049 = vld [vmem:[#allocation14 + $0x20] sm:$0xff]
    %v2050 = vld [vmem:[#allocation14 + $0x28] sm:$0xff]
    %v2051 = vld [vmem:[#allocation14 + $0x30] sm:$0xff]
    %v2052 = vld [vmem:[#allocation14 + $0x38] sm:$0xff]
    %v2053 = vld [vmem:[#allocation14 + $0x40] sm:$0xff]
    %v2054 = vld [vmem:[#allocation14 + $0x48] sm:$0xff]
    %v2055 = vld [vmem:[#allocation14 + $0x50] sm:$0xff]
    %v2056 = vld [vmem:[#allocation14 + $0x58] sm:$0xff]
    %v2057 = vld [vmem:[#allocation14 + $0x60] sm:$0xff]
    %v2058 = vld [vmem:[#allocation14 + $0x68] sm:$0xff]
    %v2059 = vld [vmem:[#allocation14 + $0x70] sm:$0xff]
    %v2060 = vld [vmem:[#allocation14 + $0x78] sm:$0xff]
    %v2061 = vld [vmem:[%s6] sm:$0x1]
    %v2063 = vlaneseq
    %v2064 = vshrl.u32 %v2063, 7
    %v2065 = vsub.s32 0, %v2064
    %v2066 = vrot.slane %v2061, %v2065
    %2068 = vmatprep.subr.mxu0 0.0
    %2069 = vmatpush1.msra.mxu0 %v2045
    %2070 = vmatprep.subr.mxu0 0.0
    %2071 = vmatpush1.msra.mxu0 %v2046
    %2072 = vmatprep.subr.mxu0 0.0
    %2073 = vmatpush1.msra.mxu0 %v2047
    %2074 = vmatprep.subr.mxu0 0.0
    %2075 = vmatpush1.msra.mxu0 %v2048
    %2076 = vmatprep.subr.mxu0 0.0
    %2077 = vmatpush1.msra.mxu0 %v2049
    %2078 = vmatprep.subr.mxu0 0.0
    %2079 = vmatpush1.msra.mxu0 %v2050
    %2080 = vmatprep.subr.mxu0 0.0
    %2081 = vmatpush1.msra.mxu0 %v2051
    %2082 = vmatprep.subr.mxu0 0.0
    %2083 = vmatpush1.msra.mxu0 %v2052
    %2084 = vmatprep.subr.mxu0 0.0
    %2085 = vmatpush1.msra.mxu0 %v2053
    %2086 = vmatprep.subr.mxu0 0.0
    %2087 = vmatpush1.msra.mxu0 %v2054
    %2088 = vmatprep.subr.mxu0 0.0
    %2089 = vmatpush1.msra.mxu0 %v2055
    %2090 = vmatprep.subr.mxu0 0.0
    %2091 = vmatpush1.msra.mxu0 %v2056
    %2092 = vmatprep.subr.mxu0 0.0
    %2093 = vmatpush1.msra.mxu0 %v2057
    %2094 = vmatprep.subr.mxu0 0.0
    %2095 = vmatpush1.msra.mxu0 %v2058
    %2096 = vmatprep.subr.mxu0 0.0
    %2097 = vmatpush1.msra.mxu0 %v2059
    %2098 = vmatprep.subr.mxu0 0.0
    %2099 = vmatpush1.msra.mxu0 %v2060
    %2100 = vmatprep.subr.mxu0 0.0
    %2101 = vmatpush1.msra.mxu0 0.0
    %2102 = vmatprep.subr.mxu0 0.0
    %2103 = vmatpush1.msra.mxu0 0.0
    %2104 = vmatprep.subr.mxu0 0.0
    %2105 = vmatpush1.msra.mxu0 0.0
    %2106 = vmatprep.subr.mxu0 0.0
    %2107 = vmatpush1.msra.mxu0 0.0
    %2108 = vmatprep.subr.mxu0 0.0
    %2109 = vmatpush1.msra.mxu0 0.0
    %2110 = vmatprep.subr.mxu0 0.0
    %2111 = vmatpush1.msra.mxu0 0.0
    %2112 = vmatprep.subr.mxu0 0.0
    %2113 = vmatpush1.msra.mxu0 0.0
    %2114 = vmatprep.subr.mxu0 0.0
    %2115 = vmatpush1.msra.mxu0 0.0
    %2116 = vmatprep.subr.mxu0 0.0
    %2117 = vmatpush1.msra.mxu0 0.0
    %2118 = vmatprep.subr.mxu0 0.0
    %2119 = vmatpush1.msra.mxu0 0.0
    %2120 = vmatprep.subr.mxu0 0.0
    %2121 = vmatpush1.msra.mxu0 0.0
    %2122 = vmatprep.subr.mxu0 0.0
    %2123 = vmatpush1.msra.mxu0 0.0
    %2124 = vmatprep.subr.mxu0 0.0
    %2125 = vmatpush1.msra.mxu0 0.0
    %2126 = vmatprep.subr.mxu0 0.0
    %2127 = vmatpush1.msra.mxu0 0.0
    %2128 = vmatprep.subr.mxu0 0.0
    %2129 = vmatpush1.msra.mxu0 0.0
    %2130 = vmatprep.subr.mxu0 0.0
    %2131 = vmatpush1.msra.mxu0 0.0
    %2132 = vmatprep.mubr.f32.mxu0 0.0
    %2133 = vmatmul.mubr.f32.gmra.mrb[0].mxu0 %v2041
    %v2134 = vpop.f32.mrb[0].mxu0
    %v2135 = vadd.f32 %v2066, %v2134
    %v2136 = vpop.f32.mrb[0].mxu0
    %2137 = vmatprep.mubr.f32.mxu0 0.0
    %2138 = vmatmul.mubr.f32.gmra.mrb[0].mxu0 %v2042
    %v2139 = vpop.f32.mrb[0].mxu0
    %v2140 = vadd.f32 %v2066, %v2139
    %v2141 = vpop.f32.mrb[0].mxu0
    %2142 = vmatprep.mubr.f32.mxu0 0.0
    %2143 = vmatmul.mubr.f32.gmra.mrb[0].mxu0 %v2043
    %v2144 = vpop.f32.mrb[0].mxu0
    %v2145 = vadd.f32 %v2066, %v2144
    %v2146 = vpop.f32.mrb[0].mxu0
    %2147 = vmatprep.mubr.f32.mxu0 0.0
    %2148 = vmatmul.mubr.f32.gmra.mrb[0].mxu0 %v2044
    %v2149 = vpop.f32.mrb[0].mxu0
    %v2150 = vadd.f32 %v2066, %v2149
    %v2151 = vpop.f32.mrb[0].mxu0
    %2152 = vdwg.mxu0
    %2153 = vst [vmem:[#allocation16] sm:$0xff] %v2135
    %2154 = vst [vmem:[#allocation16 + $0x8] sm:$0xff] %v2140
    %2155 = vst [vmem:[#allocation16 + $0x10] sm:$0xff] %v2145
    %2156 = vst [vmem:[#allocation16 + $0x18] sm:$0xff] %v2150
    // Predicated region
    $region58: #{tpu_custom_call.1} parent=1 // pred_check
      _
    $region59: #{tpu_custom_call.1} parent=1 // pred_check_branch
      %2158 = sbr.rel (0) target = $region61
    $region60: #{tpu_custom_call.1} parent=1 // pred_region
      %s2160 = ssub.s32 512, 512
      %2161 = vsyncadd [#allocation7], %s2160
      %s2162 = sshll.u32 [#allocation16], 4
      %s2163 = int_to_ptr.vmem [resolvable:$true] %s2162
      %2168 = dma.vmem_to_hbm [thread:$0]  %s2163, 512, %s7, [#allocation7], 128, 128, 8
    $region61: #{tpu_custom_call.1} parent=1 // pred_fallthru
      _
    // Predicated region
    $region62: #{tpu_custom_call.1} parent=1 // pred_check
      _
    $region63: #{tpu_custom_call.1} parent=1 // pred_check_branch
      %2170 = sbr.rel (0) target = $region65
    $region64: #{tpu_custom_call.1} parent=1 // pred_region
      %2171 = dma.done [#allocation7], 512
    $region65: #{tpu_custom_call.1} parent=1 // pred_fallthru
      _
    %2172 = vsyncpa [#allocation6], 1
    %2173 = vsyncpa [#allocation9], 1
    %2174 = vsyncpa [#allocation12], 1
    %2175 = vsyncpa [#allocation15], 1
    %2176 = vsyncpa [#allocation7], 1

</llo_original>
